<compile_context>
chip_gen: v5e
topology: v5e:2x2
jax: 0.10.0
libtpu: 0.0.40
codegen_flags: <defaults>
</compile_context>

<pallas_src>
import jax
import jax.numpy as jnp
from jax.experimental import pallas as pl
from jax.experimental.pallas import tpu as pltpu

B_BLK = 8      # one f32 sublane tile of batch per grid step
OUT_PAD = 128  # lane-dense FC output width (sliced back to out_dim in wrapper)


# ----------------------------------------------------------------------------
# LSTM cell (gate order [i, f, g, o] to match torch.nn.LSTM)
# ----------------------------------------------------------------------------
def _lstm_cell(gates, c, H):
    # One sigmoid + one tanh over the whole packed (B, 4H) tile; the unused
    # quarters are free (EUP works per-vreg), and it halves EUP issue count vs
    # four sub-lane-width activations on the serial critical path.
    sig = jax.nn.sigmoid(gates)
    tnh = jnp.tanh(gates)
    i = sig[:, 0:H]
    f = sig[:, H:2 * H]
    g = tnh[:, 2 * H:3 * H]
    o = sig[:, 3 * H:4 * H]
    c_new = f * c + i * g
    h_new = o * jnp.tanh(c_new)
    return h_new, c_new


# ----------------------------------------------------------------------------
# Fully fused kernel
# ----------------------------------------------------------------------------
def fused_sentiment_kernel(x_ref, w_ih0_ref, b0_ref, w_hh0_ref,
                           w_ih1_ref, b1_ref, w_hh1_ref,
                           fc_w_ref, fc_b_ref,
                           out_ref,
                           gx0, h0, gx1):
    """One batch block of the whole forward pass.

    x_ref    : (T, Bb, E)   f32 embedded tokens (time-major, padded batch)
    w_ih0_ref: (2, E, 4H)   bf16  per-direction layer-0 input weights
    b0_ref   : (2, 1, 4H)   f32   combined b_ih + b_hh per direction
    w_hh0_ref: (2, H, 4H)   f32   per-direction layer-0 hidden weights
    w_ih1_ref: (2, 2, H,4H) bf16  [dst_dir, src_dir] layer-1 input weights
    b1_ref   : (2, 1, 4H)   f32
    w_hh1_ref: (2, H, 4H)   f32
    fc_w_ref : (2, H, 128)  f32   FC weights split by direction, lane-padded
    fc_b_ref : (1, 128)     f32
    out_ref  : (Bb, 128)    f32   lane-dense logits (padded lanes = 0)
    gx0/gx1  : VMEM (2, T*Bb, 4H) f32   precomputed input gates per direction
    h0       : VMEM (2, T*Bb, H)  f32   layer-0 hidden sequence per direction
    """
    T, Bb, E = x_ref.shape
    H = w_hh0_ref.shape[1]
    TB = T * Bb

    # ---- layer-0 input projection: one bf16 GEMM per direction (off the
    #      serial recurrence), written straight into VMEM scratch ----
    x2 = x_ref[...].reshape(TB, E).astype(jnp.bfloat16)
    for d in range(2):
        gx0[d] = jnp.dot(x2, w_ih0_ref[d],
                         preferred_element_type=jnp.float32) + b0_ref[d]

    # ---- layer-0 recurrence: fwd and bwd chains interleaved in one loop ----
    w_hh0_f = w_hh0_ref[0]
    w_hh0_b = w_hh0_ref[1]
    z = jnp.zeros((Bb, H), jnp.float32)

    def step0(s, carry):
        hf, cf, hb, cb = carry
        rf = s * Bb                # forward walks t = s
        rb = (T - 1 - s) * Bb      # backward walks t = T-1-s
        gates_f = gx0[0, pl.ds(rf, Bb)] + jnp.dot(
            hf, w_hh0_f, preferred_element_type=jnp.float32)
        gates_b = gx0[1, pl.ds(rb, Bb)] + jnp.dot(
            hb, w_hh0_b, preferred_element_type=jnp.float32)
        hf, cf = _lstm_cell(gates_f, cf, H)
        hb, cb = _lstm_cell(gates_b, cb, H)
        h0[0, pl.ds(rf, Bb)] = hf
        h0[1, pl.ds(rb, Bb)] = hb
        return hf, cf, hb, cb

    carry = (z, z, z, z)
    for s in range(T):             # T static & small -> full trace-time unroll
        carry = step0(s, carry)

    # ---- layer-1 input projection (bf16 GEMM, both directions) ----
    h0f = h0[0].astype(jnp.bfloat16)   # (T*Bb, H)
    h0b = h0[1].astype(jnp.bfloat16)
    for d in range(2):
        gx1[d] = (jnp.dot(h0f, w_ih1_ref[d, 0], preferred_element_type=jnp.float32)
                  + jnp.dot(h0b, w_ih1_ref[d, 1], preferred_element_type=jnp.float32)
                  + b1_ref[d])

    # ---- layer-1 recurrence with the max-over-time fused in ----
    w_hh1_f = w_hh1_ref[0]
    w_hh1_b = w_hh1_ref[1]
    neg = jnp.full((Bb, H), -jnp.inf, jnp.float32)

    def step1(s, carry):
        hf, cf, hb, cb, mf, mb = carry
        rf = s * Bb
        rb = (T - 1 - s) * Bb
        gates_f = gx1[0, pl.ds(rf, Bb)] + jnp.dot(
            hf, w_hh1_f, preferred_element_type=jnp.float32)
        gates_b = gx1[1, pl.ds(rb, Bb)] + jnp.dot(
            hb, w_hh1_b, preferred_element_type=jnp.float32)
        hf, cf = _lstm_cell(gates_f, cf, H)
        hb, cb = _lstm_cell(gates_b, cb, H)
        return hf, cf, hb, cb, jnp.maximum(mf, hf), jnp.maximum(mb, hb)

    carry = (z, z, z, z, neg, neg)
    for s in range(T):
        carry = step1(s, carry)
    mf, mb = carry[4], carry[5]

    # ---- FC head (lane-dense 128-wide output store) ----
    out_ref[...] = (jnp.dot(mf, fc_w_ref[0], preferred_element_type=jnp.float32)
                    + jnp.dot(mb, fc_w_ref[1], preferred_element_type=jnp.float32)
                    + fc_b_ref[...])


# ----------------------------------------------------------------------------
# pallas_call wrapper (single launch; grid only over batch blocks)
# ----------------------------------------------------------------------------
def run_fused(x, params):
    T, Bp, E = x.shape
    H = params["w_hh0"].shape[1]
    G4 = 4 * H
    nb = Bp // B_BLK
    return pl.pallas_call(
        fused_sentiment_kernel,
        out_shape=jax.ShapeDtypeStruct((Bp, OUT_PAD), jnp.float32),
        grid=(nb,),
        in_specs=[
            pl.BlockSpec((T, B_BLK, E), lambda b: (0, b, 0)),
            pl.BlockSpec((2, E, G4), lambda b: (0, 0, 0)),
            pl.BlockSpec((2, 1, G4), lambda b: (0, 0, 0)),
            pl.BlockSpec((2, H, G4), lambda b: (0, 0, 0)),
            pl.BlockSpec((2, 2, H, G4), lambda b: (0, 0, 0, 0)),
            pl.BlockSpec((2, 1, G4), lambda b: (0, 0, 0)),
            pl.BlockSpec((2, H, G4), lambda b: (0, 0, 0)),
            pl.BlockSpec((2, H, OUT_PAD), lambda b: (0, 0, 0)),
            pl.BlockSpec((1, OUT_PAD), lambda b: (0, 0)),
        ],
        out_specs=pl.BlockSpec((B_BLK, OUT_PAD), lambda b: (b, 0)),
        scratch_shapes=[
            pltpu.VMEM((2, T * B_BLK, G4), jnp.float32),  # gx0
            pltpu.VMEM((2, T * B_BLK, H), jnp.float32),   # h0 sequence
            pltpu.VMEM((2, T * B_BLK, G4), jnp.float32),  # gx1
        ],
        compiler_params=pltpu.CompilerParams(
            dimension_semantics=("parallel",),
            vmem_limit_bytes=48 * 1024 * 1024,  # > scoped default, < v7x 64 MiB
        ),
    )(x, params["w_ih0"], params["b0"], params["w_hh0"],
      params["w_ih1"], params["b1"], params["w_hh1"],
      params["fc_w"], params["fc_b"])


# ----------------------------------------------------------------------------
# Full forward pass
# ----------------------------------------------------------------------------
def sentiment_lstm_forward(token_ids, params, out_dim):
    """token_ids: (B, T) int32. Returns (B, out_dim) float32 logits."""
    B, T = token_ids.shape
    Bp = pl.cdiv(B, B_BLK) * B_BLK

    # Time-major embedding gather with sublane-padded batch (padded rows never
    # mix with real rows and are sliced off at the end).
    ids_tm = jnp.pad(token_ids.T, ((0, 0), (0, Bp - B)))            # (T, Bp)
    x = jnp.take(params["embedding"], ids_tm, axis=0)               # (T, Bp, E)
    # Dropout: identity (eval mode).

    logits_pad = run_fused(x, params)                               # (Bp, 128)
    return logits_pad[:B, :out_dim]


# ----------------------------------------------------------------------------
# Deterministic parameter construction (torch.nn.LSTM / Linear shapes, then
# re-packed into the kernel layouts described above)
# ----------------------------------------------------------------------------
def init_params(key, vocab_size, embedding_dim, lstm_dim, out_dim):
    H = lstm_dim
    keys = iter(jax.random.split(key, 32))

    def uniform(k, shape, bound):
        return jax.random.uniform(k, shape, jnp.float32, -bound, bound)

    params = {
        "embedding": jax.random.normal(
            next(keys), (vocab_size, embedding_dim), dtype=jnp.float32)
    }
    kb = 1.0 / float(H) ** 0.5

    def direction(in_dim):
        w_ih = uniform(next(keys), (4 * H, in_dim), kb)   # torch layout (4H, D)
        w_hh = uniform(next(keys), (4 * H, H), kb)        # torch layout (4H, H)
        b_ih = uniform(next(keys), (4 * H,), kb)
        b_hh = uniform(next(keys), (4 * H,), kb)
        return w_ih.T, w_hh.T, (b_ih + b_hh).reshape(1, 4 * H)

    # Layer 0 (input = embedding, E features)
    wi_f, wh_f, b_f = direction(embedding_dim)
    wi_b, wh_b, b_b = direction(embedding_dim)
    params["w_ih0"] = jnp.stack([wi_f, wi_b]).astype(jnp.bfloat16)   # (2, E, 4H)
    params["w_hh0"] = jnp.stack([wh_f, wh_b])                        # (2, H, 4H)
    params["b0"] = jnp.stack([b_f, b_b])                             # (2, 1, 4H)

    # Layer 1 (input = concat[h_fwd, h_bwd], 2H features) split by source dir
    wi_f, wh_f, b_f = direction(2 * H)
    wi_b, wh_b, b_b = direction(2 * H)
    params["w_ih1"] = jnp.stack([
        jnp.stack([wi_f[:H], wi_f[H:]]),    # dst = fwd: (src_fwd, src_bwd)
        jnp.stack([wi_b[:H], wi_b[H:]]),    # dst = bwd
    ]).astype(jnp.bfloat16)                                          # (2,2,H,4H)
    params["w_hh1"] = jnp.stack([wh_f, wh_b])                        # (2, H, 4H)
    params["b1"] = jnp.stack([b_f, b_b])                             # (2, 1, 4H)

    # FC head, zero-padded to 128 output lanes, split by direction
    fcb = 1.0 / float(2 * H) ** 0.5
    fc_w = uniform(next(keys), (out_dim, 2 * H), fcb).T              # (2H, out)
    fc_b = uniform(next(keys), (out_dim,), fcb)
    fc_w_pad = jnp.zeros((2 * H, OUT_PAD), jnp.float32).at[:, :out_dim].set(fc_w)
    params["fc_w"] = jnp.stack([fc_w_pad[:H], fc_w_pad[H:]])         # (2, H, 128)
    params["fc_b"] = jnp.zeros((1, OUT_PAD), jnp.float32).at[0, :out_dim].set(fc_b)
    return params


# ----------------------------------------------------------------------------
if __name__ == "__main__":
    VOCAB, EMB, HID, OUT = 50, 32, 32, 4
    BATCH, SEQ = 2, 8

    key = jax.random.PRNGKey(0)
    k_params, k_tokens = jax.random.split(key)
    params = init_params(k_params, VOCAB, EMB, HID, OUT)
    token_ids = jax.random.randint(k_tokens, (BATCH, SEQ), 0, VOCAB, dtype=jnp.int32)

    fwd = jax.jit(lambda ids: sentiment_lstm_forward(ids, params, OUT))
    logits = fwd(token_ids)
    jax.block_until_ready(logits)
    assert logits.shape == (BATCH, OUT), logits.shape
    print("KERNEL_OK")
</pallas_src>

<mosaic_0001>
module attributes {stable_mosaic.version = 11 : i64} {
  func.func @fused_sentiment_kernel(%arg0: i32, %arg1: memref<8x8x32xf32, #tpu.memory_space<vmem>>, %arg2: memref<2x32x128xbf16, #tpu.memory_space<vmem>>, %arg3: memref<2x1x128xf32, #tpu.memory_space<vmem>>, %arg4: memref<2x32x128xf32, #tpu.memory_space<vmem>>, %arg5: memref<2x2x32x128xbf16, #tpu.memory_space<vmem>>, %arg6: memref<2x1x128xf32, #tpu.memory_space<vmem>>, %arg7: memref<2x32x128xf32, #tpu.memory_space<vmem>>, %arg8: memref<2x32x128xf32, #tpu.memory_space<vmem>>, %arg9: memref<1x128xf32, #tpu.memory_space<vmem>>, %arg10: memref<8x128xf32, #tpu.memory_space<vmem>>, %arg11: memref<2x64x128xf32, #tpu.memory_space<vmem>>, %arg12: memref<2x64x32xf32, #tpu.memory_space<vmem>>, %arg13: memref<2x64x128xf32, #tpu.memory_space<vmem>>) attributes {dimension_semantics = [#tpu.dimension_semantics<parallel>], iteration_bounds = array<i64: 1>, scalar_prefetch = 0 : i64, scratch_operands = 3 : i64, tpu.core_type = #tpu.core_type<tc>, window_params = [{transform_indices = @transform_0, window_bounds = array<i64: 8, 8, 32>}, {pipeline_mode = #tpu.pipeline_mode<synchronous>, transform_indices = @transform_1, window_bounds = array<i64: 2, 32, 128>}, {pipeline_mode = #tpu.pipeline_mode<synchronous>, transform_indices = @transform_2, window_bounds = array<i64: 2, 1, 128>}, {pipeline_mode = #tpu.pipeline_mode<synchronous>, transform_indices = @transform_3, window_bounds = array<i64: 2, 32, 128>}, {pipeline_mode = #tpu.pipeline_mode<synchronous>, transform_indices = @transform_4, window_bounds = array<i64: 2, 2, 32, 128>}, {pipeline_mode = #tpu.pipeline_mode<synchronous>, transform_indices = @transform_5, window_bounds = array<i64: 2, 1, 128>}, {pipeline_mode = #tpu.pipeline_mode<synchronous>, transform_indices = @transform_6, window_bounds = array<i64: 2, 32, 128>}, {pipeline_mode = #tpu.pipeline_mode<synchronous>, transform_indices = @transform_7, window_bounds = array<i64: 2, 32, 128>}, {pipeline_mode = #tpu.pipeline_mode<synchronous>, transform_indices = @transform_8, window_bounds = array<i64: 1, 128>}, {transform_indices = @transform_9, window_bounds = array<i64: 8, 128>}]} {
    %c0 = arith.constant 0 : index
    %c0_0 = arith.constant 0 : index
    %c0_1 = arith.constant 0 : index
    %0 = vector.load %arg1[%c0, %c0_0, %c0_1] : memref<8x8x32xf32, #tpu.memory_space<vmem>>, vector<8x8x32xf32>
    %1 = vector.shape_cast %0 : vector<8x8x32xf32> to vector<64x32xf32>
    %2 = arith.truncf %1 : vector<64x32xf32> to vector<64x32xbf16>
    %c0_2 = arith.constant 0 : index
    %c0_3 = arith.constant 0 : index
    %c0_4 = arith.constant 0 : index
    %3 = vector.load %arg2[%c0_2, %c0_3, %c0_4] : memref<2x32x128xbf16, #tpu.memory_space<vmem>>, vector<1x32x128xbf16>
    %4 = vector.shape_cast %3 : vector<1x32x128xbf16> to vector<32x128xbf16>
    %cst = arith.constant dense<0.000000e+00> : vector<64x128xf32>
    %5 = tpu.matmul %2, %4, %cst {dimension_numbers = #tpu.dot_dimension_numbers<[1], [0], [0], [1], [0, 0, 1, 1], [], []>} : vector<64x32xbf16>, vector<32x128xbf16>, vector<64x128xf32> -> vector<64x128xf32>
    %c0_5 = arith.constant 0 : index
    %c0_6 = arith.constant 0 : index
    %c0_7 = arith.constant 0 : index
    %6 = vector.load %arg3[%c0_5, %c0_6, %c0_7] : memref<2x1x128xf32, #tpu.memory_space<vmem>>, vector<1x1x128xf32>
    %7 = vector.shape_cast %6 : vector<1x1x128xf32> to vector<1x128xf32>
    %8 = vector.broadcast %7 : vector<1x128xf32> to vector<64x128xf32>
    %9 = arith.addf %5, %8 : vector<64x128xf32>
    %c0_8 = arith.constant 0 : index
    %c0_9 = arith.constant 0 : index
    %c0_10 = arith.constant 0 : index
    %10 = vector.load %arg11[%c0_8, %c0_9, %c0_10] : memref<2x64x128xf32, #tpu.memory_space<vmem>>, vector<1x64x128xf32>
    %11 = vector.shape_cast %10 : vector<1x64x128xf32> to vector<64x128xf32>
    %12 = vector.shape_cast %9 : vector<64x128xf32> to vector<1x64x128xf32>
    tpu.vector_store %arg11[%c0_8, %c0_9, %c0_10], %12 {strides = array<i32>} : memref<2x64x128xf32, #tpu.memory_space<vmem>>, vector<1x64x128xf32>,
    %c1 = arith.constant 1 : index
    %c0_11 = arith.constant 0 : index
    %c0_12 = arith.constant 0 : index
    %13 = vector.load %arg2[%c1, %c0_11, %c0_12] : memref<2x32x128xbf16, #tpu.memory_space<vmem>>, vector<1x32x128xbf16>
    %14 = vector.shape_cast %13 : vector<1x32x128xbf16> to vector<32x128xbf16>
    %cst_13 = arith.constant dense<0.000000e+00> : vector<64x128xf32>
    %15 = tpu.matmul %2, %14, %cst_13 {dimension_numbers = #tpu.dot_dimension_numbers<[1], [0], [0], [1], [0, 0, 1, 1], [], []>} : vector<64x32xbf16>, vector<32x128xbf16>, vector<64x128xf32> -> vector<64x128xf32>
    %c1_14 = arith.constant 1 : index
    %c0_15 = arith.constant 0 : index
    %c0_16 = arith.constant 0 : index
    %16 = vector.load %arg3[%c1_14, %c0_15, %c0_16] : memref<2x1x128xf32, #tpu.memory_space<vmem>>, vector<1x1x128xf32>
    %17 = vector.shape_cast %16 : vector<1x1x128xf32> to vector<1x128xf32>
    %18 = vector.broadcast %17 : vector<1x128xf32> to vector<64x128xf32>
    %19 = arith.addf %15, %18 : vector<64x128xf32>
    %c1_17 = arith.constant 1 : index
    %c0_18 = arith.constant 0 : index
    %c0_19 = arith.constant 0 : index
    %20 = vector.load %arg11[%c1_17, %c0_18, %c0_19] : memref<2x64x128xf32, #tpu.memory_space<vmem>>, vector<1x64x128xf32>
    %21 = vector.shape_cast %20 : vector<1x64x128xf32> to vector<64x128xf32>
    %22 = vector.shape_cast %19 : vector<64x128xf32> to vector<1x64x128xf32>
    tpu.vector_store %arg11[%c1_17, %c0_18, %c0_19], %22 {strides = array<i32>} : memref<2x64x128xf32, #tpu.memory_space<vmem>>, vector<1x64x128xf32>,
    %c0_20 = arith.constant 0 : index
    %c0_21 = arith.constant 0 : index
    %c0_22 = arith.constant 0 : index
    %23 = vector.load %arg4[%c0_20, %c0_21, %c0_22] : memref<2x32x128xf32, #tpu.memory_space<vmem>>, vector<1x32x128xf32>
    %24 = vector.shape_cast %23 : vector<1x32x128xf32> to vector<32x128xf32>
    %c1_23 = arith.constant 1 : index
    %c0_24 = arith.constant 0 : index
    %c0_25 = arith.constant 0 : index
    %25 = vector.load %arg4[%c1_23, %c0_24, %c0_25] : memref<2x32x128xf32, #tpu.memory_space<vmem>>, vector<1x32x128xf32>
    %26 = vector.shape_cast %25 : vector<1x32x128xf32> to vector<32x128xf32>
    %cst_26 = arith.constant 0.000000e+00 : f32
    %27 = vector.broadcast %cst_26 : f32 to vector<8x32xf32>
    %c0_27 = arith.constant 0 : index
    %c0_28 = arith.constant 0 : index
    %c0_29 = arith.constant 0 : index
    %28 = vector.load %arg11[%c0_27, %c0_28, %c0_29] : memref<2x64x128xf32, #tpu.memory_space<vmem>>, vector<1x8x128xf32>
    %29 = vector.shape_cast %28 : vector<1x8x128xf32> to vector<8x128xf32>
    %cst_30 = arith.constant dense<0.000000e+00> : vector<8x128xf32>
    %30 = tpu.matmul %27, %24, %cst_30 {dimension_numbers = #tpu.dot_dimension_numbers<[1], [0], [0], [1], [0, 0, 1, 1], [], []>} : vector<8x32xf32>, vector<32x128xf32>, vector<8x128xf32> -> vector<8x128xf32>
    %31 = arith.addf %29, %30 : vector<8x128xf32>
    %c1_31 = arith.constant 1 : index
    %c56 = arith.constant 56 : index
    %c0_32 = arith.constant 0 : index
    %32 = vector.load %arg11[%c1_31, %c56, %c0_32] : memref<2x64x128xf32, #tpu.memory_space<vmem>>, vector<1x8x128xf32>
    %33 = vector.shape_cast %32 : vector<1x8x128xf32> to vector<8x128xf32>
    %cst_33 = arith.constant dense<0.000000e+00> : vector<8x128xf32>
    %34 = tpu.matmul %27, %26, %cst_33 {dimension_numbers = #tpu.dot_dimension_numbers<[1], [0], [0], [1], [0, 0, 1, 1], [], []>} : vector<8x32xf32>, vector<32x128xf32>, vector<8x128xf32> -> vector<8x128xf32>
    %35 = arith.addf %33, %34 : vector<8x128xf32>
    %36 = arith.negf %31 : vector<8x128xf32>
    %37 = math.exp %36 : vector<8x128xf32>
    %cst_34 = arith.constant 1.000000e+00 : f32
    %38 = vector.broadcast %cst_34 : f32 to vector<8x128xf32>
    %39 = arith.addf %38, %37 : vector<8x128xf32>
    %40 = arith.divf %38, %39 : vector<8x128xf32>
    %41 = math.tanh %31 : vector<8x128xf32>
    %42 = vector.extract_strided_slice %40 {offsets = [0, 0], sizes = [8, 32], strides = [1, 1]} : vector<8x128xf32> to vector<8x32xf32>
    %43 = vector.extract_strided_slice %40 {offsets = [0, 32], sizes = [8, 32], strides = [1, 1]} : vector<8x128xf32> to vector<8x32xf32>
    %44 = vector.extract_strided_slice %41 {offsets = [0, 64], sizes = [8, 32], strides = [1, 1]} : vector<8x128xf32> to vector<8x32xf32>
    %45 = vector.extract_strided_slice %40 {offsets = [0, 96], sizes = [8, 32], strides = [1, 1]} : vector<8x128xf32> to vector<8x32xf32>
    %46 = arith.mulf %43, %27 : vector<8x32xf32>
    %47 = arith.mulf %42, %44 : vector<8x32xf32>
    %48 = arith.addf %46, %47 : vector<8x32xf32>
    %49 = math.tanh %48 : vector<8x32xf32>
    %50 = arith.mulf %45, %49 : vector<8x32xf32>
    %51 = arith.negf %35 : vector<8x128xf32>
    %52 = math.exp %51 : vector<8x128xf32>
    %cst_35 = arith.constant 1.000000e+00 : f32
    %53 = vector.broadcast %cst_35 : f32 to vector<8x128xf32>
    %54 = arith.addf %53, %52 : vector<8x128xf32>
    %55 = arith.divf %53, %54 : vector<8x128xf32>
    %56 = math.tanh %35 : vector<8x128xf32>
    %57 = vector.extract_strided_slice %55 {offsets = [0, 0], sizes = [8, 32], strides = [1, 1]} : vector<8x128xf32> to vector<8x32xf32>
    %58 = vector.extract_strided_slice %55 {offsets = [0, 32], sizes = [8, 32], strides = [1, 1]} : vector<8x128xf32> to vector<8x32xf32>
    %59 = vector.extract_strided_slice %56 {offsets = [0, 64], sizes = [8, 32], strides = [1, 1]} : vector<8x128xf32> to vector<8x32xf32>
    %60 = vector.extract_strided_slice %55 {offsets = [0, 96], sizes = [8, 32], strides = [1, 1]} : vector<8x128xf32> to vector<8x32xf32>
    %61 = arith.mulf %58, %27 : vector<8x32xf32>
    %62 = arith.mulf %57, %59 : vector<8x32xf32>
    %63 = arith.addf %61, %62 : vector<8x32xf32>
    %64 = math.tanh %63 : vector<8x32xf32>
    %65 = arith.mulf %60, %64 : vector<8x32xf32>
    %c0_36 = arith.constant 0 : index
    %c0_37 = arith.constant 0 : index
    %c0_38 = arith.constant 0 : index
    %66 = vector.load %arg12[%c0_36, %c0_37, %c0_38] : memref<2x64x32xf32, #tpu.memory_space<vmem>>, vector<1x8x32xf32>
    %67 = vector.shape_cast %66 : vector<1x8x32xf32> to vector<8x32xf32>
    %68 = vector.shape_cast %50 : vector<8x32xf32> to vector<1x8x32xf32>
    tpu.vector_store %arg12[%c0_36, %c0_37, %c0_38], %68 {strides = array<i32>} : memref<2x64x32xf32, #tpu.memory_space<vmem>>, vector<1x8x32xf32>,
    %c1_39 = arith.constant 1 : index
    %c56_40 = arith.constant 56 : index
    %c0_41 = arith.constant 0 : index
    %69 = vector.load %arg12[%c1_39, %c56_40, %c0_41] : memref<2x64x32xf32, #tpu.memory_space<vmem>>, vector<1x8x32xf32>
    %70 = vector.shape_cast %69 : vector<1x8x32xf32> to vector<8x32xf32>
    %71 = vector.shape_cast %65 : vector<8x32xf32> to vector<1x8x32xf32>
    tpu.vector_store %arg12[%c1_39, %c56_40, %c0_41], %71 {strides = array<i32>} : memref<2x64x32xf32, #tpu.memory_space<vmem>>, vector<1x8x32xf32>,
    %c0_42 = arith.constant 0 : index
    %c8 = arith.constant 8 : index
    %c0_43 = arith.constant 0 : index
    %72 = vector.load %arg11[%c0_42, %c8, %c0_43] : memref<2x64x128xf32, #tpu.memory_space<vmem>>, vector<1x8x128xf32>
    %73 = vector.shape_cast %72 : vector<1x8x128xf32> to vector<8x128xf32>
    %cst_44 = arith.constant dense<0.000000e+00> : vector<8x128xf32>
    %74 = tpu.matmul %50, %24, %cst_44 {dimension_numbers = #tpu.dot_dimension_numbers<[1], [0], [0], [1], [0, 0, 1, 1], [], []>} : vector<8x32xf32>, vector<32x128xf32>, vector<8x128xf32> -> vector<8x128xf32>
    %75 = arith.addf %73, %74 : vector<8x128xf32>
    %c1_45 = arith.constant 1 : index
    %c48 = arith.constant 48 : index
    %c0_46 = arith.constant 0 : index
    %76 = vector.load %arg11[%c1_45, %c48, %c0_46] : memref<2x64x128xf32, #tpu.memory_space<vmem>>, vector<1x8x128xf32>
    %77 = vector.shape_cast %76 : vector<1x8x128xf32> to vector<8x128xf32>
    %cst_47 = arith.constant dense<0.000000e+00> : vector<8x128xf32>
    %78 = tpu.matmul %65, %26, %cst_47 {dimension_numbers = #tpu.dot_dimension_numbers<[1], [0], [0], [1], [0, 0, 1, 1], [], []>} : vector<8x32xf32>, vector<32x128xf32>, vector<8x128xf32> -> vector<8x128xf32>
    %79 = arith.addf %77, %78 : vector<8x128xf32>
    %80 = arith.negf %75 : vector<8x128xf32>
    %81 = math.exp %80 : vector<8x128xf32>
    %cst_48 = arith.constant 1.000000e+00 : f32
    %82 = vector.broadcast %cst_48 : f32 to vector<8x128xf32>
    %83 = arith.addf %82, %81 : vector<8x128xf32>
    %84 = arith.divf %82, %83 : vector<8x128xf32>
    %85 = math.tanh %75 : vector<8x128xf32>
    %86 = vector.extract_strided_slice %84 {offsets = [0, 0], sizes = [8, 32], strides = [1, 1]} : vector<8x128xf32> to vector<8x32xf32>
    %87 = vector.extract_strided_slice %84 {offsets = [0, 32], sizes = [8, 32], strides = [1, 1]} : vector<8x128xf32> to vector<8x32xf32>
    %88 = vector.extract_strided_slice %85 {offsets = [0, 64], sizes = [8, 32], strides = [1, 1]} : vector<8x128xf32> to vector<8x32xf32>
    %89 = vector.extract_strided_slice %84 {offsets = [0, 96], sizes = [8, 32], strides = [1, 1]} : vector<8x128xf32> to vector<8x32xf32>
    %90 = arith.mulf %87, %48 : vector<8x32xf32>
    %91 = arith.mulf %86, %88 : vector<8x32xf32>
    %92 = arith.addf %90, %91 : vector<8x32xf32>
    %93 = math.tanh %92 : vector<8x32xf32>
    %94 = arith.mulf %89, %93 : vector<8x32xf32>
    %95 = arith.negf %79 : vector<8x128xf32>
    %96 = math.exp %95 : vector<8x128xf32>
    %cst_49 = arith.constant 1.000000e+00 : f32
    %97 = vector.broadcast %cst_49 : f32 to vector<8x128xf32>
    %98 = arith.addf %97, %96 : vector<8x128xf32>
    %99 = arith.divf %97, %98 : vector<8x128xf32>
    %100 = math.tanh %79 : vector<8x128xf32>
    %101 = vector.extract_strided_slice %99 {offsets = [0, 0], sizes = [8, 32], strides = [1, 1]} : vector<8x128xf32> to vector<8x32xf32>
    %102 = vector.extract_strided_slice %99 {offsets = [0, 32], sizes = [8, 32], strides = [1, 1]} : vector<8x128xf32> to vector<8x32xf32>
    %103 = vector.extract_strided_slice %100 {offsets = [0, 64], sizes = [8, 32], strides = [1, 1]} : vector<8x128xf32> to vector<8x32xf32>
    %104 = vector.extract_strided_slice %99 {offsets = [0, 96], sizes = [8, 32], strides = [1, 1]} : vector<8x128xf32> to vector<8x32xf32>
    %105 = arith.mulf %102, %63 : vector<8x32xf32>
    %106 = arith.mulf %101, %103 : vector<8x32xf32>
    %107 = arith.addf %105, %106 : vector<8x32xf32>
    %108 = math.tanh %107 : vector<8x32xf32>
    %109 = arith.mulf %104, %108 : vector<8x32xf32>
    %c0_50 = arith.constant 0 : index
    %c8_51 = arith.constant 8 : index
    %c0_52 = arith.constant 0 : index
    %110 = vector.load %arg12[%c0_50, %c8_51, %c0_52] : memref<2x64x32xf32, #tpu.memory_space<vmem>>, vector<1x8x32xf32>
    %111 = vector.shape_cast %110 : vector<1x8x32xf32> to vector<8x32xf32>
    %112 = vector.shape_cast %94 : vector<8x32xf32> to vector<1x8x32xf32>
    tpu.vector_store %arg12[%c0_50, %c8_51, %c0_52], %112 {strides = array<i32>} : memref<2x64x32xf32, #tpu.memory_space<vmem>>, vector<1x8x32xf32>,
    %c1_53 = arith.constant 1 : index
    %c48_54 = arith.constant 48 : index
    %c0_55 = arith.constant 0 : index
    %113 = vector.load %arg12[%c1_53, %c48_54, %c0_55] : memref<2x64x32xf32, #tpu.memory_space<vmem>>, vector<1x8x32xf32>
    %114 = vector.shape_cast %113 : vector<1x8x32xf32> to vector<8x32xf32>
    %115 = vector.shape_cast %109 : vector<8x32xf32> to vector<1x8x32xf32>
    tpu.vector_store %arg12[%c1_53, %c48_54, %c0_55], %115 {strides = array<i32>} : memref<2x64x32xf32, #tpu.memory_space<vmem>>, vector<1x8x32xf32>,
    %c0_56 = arith.constant 0 : index
    %c16 = arith.constant 16 : index
    %c0_57 = arith.constant 0 : index
    %116 = vector.load %arg11[%c0_56, %c16, %c0_57] : memref<2x64x128xf32, #tpu.memory_space<vmem>>, vector<1x8x128xf32>
    %117 = vector.shape_cast %116 : vector<1x8x128xf32> to vector<8x128xf32>
    %cst_58 = arith.constant dense<0.000000e+00> : vector<8x128xf32>
    %118 = tpu.matmul %94, %24, %cst_58 {dimension_numbers = #tpu.dot_dimension_numbers<[1], [0], [0], [1], [0, 0, 1, 1], [], []>} : vector<8x32xf32>, vector<32x128xf32>, vector<8x128xf32> -> vector<8x128xf32>
    %119 = arith.addf %117, %118 : vector<8x128xf32>
    %c1_59 = arith.constant 1 : index
    %c40 = arith.constant 40 : index
    %c0_60 = arith.constant 0 : index
    %120 = vector.load %arg11[%c1_59, %c40, %c0_60] : memref<2x64x128xf32, #tpu.memory_space<vmem>>, vector<1x8x128xf32>
    %121 = vector.shape_cast %120 : vector<1x8x128xf32> to vector<8x128xf32>
    %cst_61 = arith.constant dense<0.000000e+00> : vector<8x128xf32>
    %122 = tpu.matmul %109, %26, %cst_61 {dimension_numbers = #tpu.dot_dimension_numbers<[1], [0], [0], [1], [0, 0, 1, 1], [], []>} : vector<8x32xf32>, vector<32x128xf32>, vector<8x128xf32> -> vector<8x128xf32>
    %123 = arith.addf %121, %122 : vector<8x128xf32>
    %124 = arith.negf %119 : vector<8x128xf32>
    %125 = math.exp %124 : vector<8x128xf32>
    %cst_62 = arith.constant 1.000000e+00 : f32
    %126 = vector.broadcast %cst_62 : f32 to vector<8x128xf32>
    %127 = arith.addf %126, %125 : vector<8x128xf32>
    %128 = arith.divf %126, %127 : vector<8x128xf32>
    %129 = math.tanh %119 : vector<8x128xf32>
    %130 = vector.extract_strided_slice %128 {offsets = [0, 0], sizes = [8, 32], strides = [1, 1]} : vector<8x128xf32> to vector<8x32xf32>
    %131 = vector.extract_strided_slice %128 {offsets = [0, 32], sizes = [8, 32], strides = [1, 1]} : vector<8x128xf32> to vector<8x32xf32>
    %132 = vector.extract_strided_slice %129 {offsets = [0, 64], sizes = [8, 32], strides = [1, 1]} : vector<8x128xf32> to vector<8x32xf32>
    %133 = vector.extract_strided_slice %128 {offsets = [0, 96], sizes = [8, 32], strides = [1, 1]} : vector<8x128xf32> to vector<8x32xf32>
    %134 = arith.mulf %131, %92 : vector<8x32xf32>
    %135 = arith.mulf %130, %132 : vector<8x32xf32>
    %136 = arith.addf %134, %135 : vector<8x32xf32>
    %137 = math.tanh %136 : vector<8x32xf32>
    %138 = arith.mulf %133, %137 : vector<8x32xf32>
    %139 = arith.negf %123 : vector<8x128xf32>
    %140 = math.exp %139 : vector<8x128xf32>
    %cst_63 = arith.constant 1.000000e+00 : f32
    %141 = vector.broadcast %cst_63 : f32 to vector<8x128xf32>
    %142 = arith.addf %141, %140 : vector<8x128xf32>
    %143 = arith.divf %141, %142 : vector<8x128xf32>
    %144 = math.tanh %123 : vector<8x128xf32>
    %145 = vector.extract_strided_slice %143 {offsets = [0, 0], sizes = [8, 32], strides = [1, 1]} : vector<8x128xf32> to vector<8x32xf32>
    %146 = vector.extract_strided_slice %143 {offsets = [0, 32], sizes = [8, 32], strides = [1, 1]} : vector<8x128xf32> to vector<8x32xf32>
    %147 = vector.extract_strided_slice %144 {offsets = [0, 64], sizes = [8, 32], strides = [1, 1]} : vector<8x128xf32> to vector<8x32xf32>
    %148 = vector.extract_strided_slice %143 {offsets = [0, 96], sizes = [8, 32], strides = [1, 1]} : vector<8x128xf32> to vector<8x32xf32>
    %149 = arith.mulf %146, %107 : vector<8x32xf32>
    %150 = arith.mulf %145, %147 : vector<8x32xf32>
    %151 = arith.addf %149, %150 : vector<8x32xf32>
    %152 = math.tanh %151 : vector<8x32xf32>
    %153 = arith.mulf %148, %152 : vector<8x32xf32>
    %c0_64 = arith.constant 0 : index
    %c16_65 = arith.constant 16 : index
    %c0_66 = arith.constant 0 : index
    %154 = vector.load %arg12[%c0_64, %c16_65, %c0_66] : memref<2x64x32xf32, #tpu.memory_space<vmem>>, vector<1x8x32xf32>
    %155 = vector.shape_cast %154 : vector<1x8x32xf32> to vector<8x32xf32>
    %156 = vector.shape_cast %138 : vector<8x32xf32> to vector<1x8x32xf32>
    tpu.vector_store %arg12[%c0_64, %c16_65, %c0_66], %156 {strides = array<i32>} : memref<2x64x32xf32, #tpu.memory_space<vmem>>, vector<1x8x32xf32>,
    %c1_67 = arith.constant 1 : index
    %c40_68 = arith.constant 40 : index
    %c0_69 = arith.constant 0 : index
    %157 = vector.load %arg12[%c1_67, %c40_68, %c0_69] : memref<2x64x32xf32, #tpu.memory_space<vmem>>, vector<1x8x32xf32>
    %158 = vector.shape_cast %157 : vector<1x8x32xf32> to vector<8x32xf32>
    %159 = vector.shape_cast %153 : vector<8x32xf32> to vector<1x8x32xf32>
    tpu.vector_store %arg12[%c1_67, %c40_68, %c0_69], %159 {strides = array<i32>} : memref<2x64x32xf32, #tpu.memory_space<vmem>>, vector<1x8x32xf32>,
    %c0_70 = arith.constant 0 : index
    %c24 = arith.constant 24 : index
    %c0_71 = arith.constant 0 : index
    %160 = vector.load %arg11[%c0_70, %c24, %c0_71] : memref<2x64x128xf32, #tpu.memory_space<vmem>>, vector<1x8x128xf32>
    %161 = vector.shape_cast %160 : vector<1x8x128xf32> to vector<8x128xf32>
    %cst_72 = arith.constant dense<0.000000e+00> : vector<8x128xf32>
    %162 = tpu.matmul %138, %24, %cst_72 {dimension_numbers = #tpu.dot_dimension_numbers<[1], [0], [0], [1], [0, 0, 1, 1], [], []>} : vector<8x32xf32>, vector<32x128xf32>, vector<8x128xf32> -> vector<8x128xf32>
    %163 = arith.addf %161, %162 : vector<8x128xf32>
    %c1_73 = arith.constant 1 : index
    %c32 = arith.constant 32 : index
    %c0_74 = arith.constant 0 : index
    %164 = vector.load %arg11[%c1_73, %c32, %c0_74] : memref<2x64x128xf32, #tpu.memory_space<vmem>>, vector<1x8x128xf32>
    %165 = vector.shape_cast %164 : vector<1x8x128xf32> to vector<8x128xf32>
    %cst_75 = arith.constant dense<0.000000e+00> : vector<8x128xf32>
    %166 = tpu.matmul %153, %26, %cst_75 {dimension_numbers = #tpu.dot_dimension_numbers<[1], [0], [0], [1], [0, 0, 1, 1], [], []>} : vector<8x32xf32>, vector<32x128xf32>, vector<8x128xf32> -> vector<8x128xf32>
    %167 = arith.addf %165, %166 : vector<8x128xf32>
    %168 = arith.negf %163 : vector<8x128xf32>
    %169 = math.exp %168 : vector<8x128xf32>
    %cst_76 = arith.constant 1.000000e+00 : f32
    %170 = vector.broadcast %cst_76 : f32 to vector<8x128xf32>
    %171 = arith.addf %170, %169 : vector<8x128xf32>
    %172 = arith.divf %170, %171 : vector<8x128xf32>
    %173 = math.tanh %163 : vector<8x128xf32>
    %174 = vector.extract_strided_slice %172 {offsets = [0, 0], sizes = [8, 32], strides = [1, 1]} : vector<8x128xf32> to vector<8x32xf32>
    %175 = vector.extract_strided_slice %172 {offsets = [0, 32], sizes = [8, 32], strides = [1, 1]} : vector<8x128xf32> to vector<8x32xf32>
    %176 = vector.extract_strided_slice %173 {offsets = [0, 64], sizes = [8, 32], strides = [1, 1]} : vector<8x128xf32> to vector<8x32xf32>
    %177 = vector.extract_strided_slice %172 {offsets = [0, 96], sizes = [8, 32], strides = [1, 1]} : vector<8x128xf32> to vector<8x32xf32>
    %178 = arith.mulf %175, %136 : vector<8x32xf32>
    %179 = arith.mulf %174, %176 : vector<8x32xf32>
    %180 = arith.addf %178, %179 : vector<8x32xf32>
    %181 = math.tanh %180 : vector<8x32xf32>
    %182 = arith.mulf %177, %181 : vector<8x32xf32>
    %183 = arith.negf %167 : vector<8x128xf32>
    %184 = math.exp %183 : vector<8x128xf32>
    %cst_77 = arith.constant 1.000000e+00 : f32
    %185 = vector.broadcast %cst_77 : f32 to vector<8x128xf32>
    %186 = arith.addf %185, %184 : vector<8x128xf32>
    %187 = arith.divf %185, %186 : vector<8x128xf32>
    %188 = math.tanh %167 : vector<8x128xf32>
    %189 = vector.extract_strided_slice %187 {offsets = [0, 0], sizes = [8, 32], strides = [1, 1]} : vector<8x128xf32> to vector<8x32xf32>
    %190 = vector.extract_strided_slice %187 {offsets = [0, 32], sizes = [8, 32], strides = [1, 1]} : vector<8x128xf32> to vector<8x32xf32>
    %191 = vector.extract_strided_slice %188 {offsets = [0, 64], sizes = [8, 32], strides = [1, 1]} : vector<8x128xf32> to vector<8x32xf32>
    %192 = vector.extract_strided_slice %187 {offsets = [0, 96], sizes = [8, 32], strides = [1, 1]} : vector<8x128xf32> to vector<8x32xf32>
    %193 = arith.mulf %190, %151 : vector<8x32xf32>
    %194 = arith.mulf %189, %191 : vector<8x32xf32>
    %195 = arith.addf %193, %194 : vector<8x32xf32>
    %196 = math.tanh %195 : vector<8x32xf32>
    %197 = arith.mulf %192, %196 : vector<8x32xf32>
    %c0_78 = arith.constant 0 : index
    %c24_79 = arith.constant 24 : index
    %c0_80 = arith.constant 0 : index
    %198 = vector.load %arg12[%c0_78, %c24_79, %c0_80] : memref<2x64x32xf32, #tpu.memory_space<vmem>>, vector<1x8x32xf32>
    %199 = vector.shape_cast %198 : vector<1x8x32xf32> to vector<8x32xf32>
    %200 = vector.shape_cast %182 : vector<8x32xf32> to vector<1x8x32xf32>
    tpu.vector_store %arg12[%c0_78, %c24_79, %c0_80], %200 {strides = array<i32>} : memref<2x64x32xf32, #tpu.memory_space<vmem>>, vector<1x8x32xf32>,
    %c1_81 = arith.constant 1 : index
    %c32_82 = arith.constant 32 : index
    %c0_83 = arith.constant 0 : index
    %201 = vector.load %arg12[%c1_81, %c32_82, %c0_83] : memref<2x64x32xf32, #tpu.memory_space<vmem>>, vector<1x8x32xf32>
    %202 = vector.shape_cast %201 : vector<1x8x32xf32> to vector<8x32xf32>
    %203 = vector.shape_cast %197 : vector<8x32xf32> to vector<1x8x32xf32>
    tpu.vector_store %arg12[%c1_81, %c32_82, %c0_83], %203 {strides = array<i32>} : memref<2x64x32xf32, #tpu.memory_space<vmem>>, vector<1x8x32xf32>,
    %c0_84 = arith.constant 0 : index
    %c32_85 = arith.constant 32 : index
    %c0_86 = arith.constant 0 : index
    %204 = vector.load %arg11[%c0_84, %c32_85, %c0_86] : memref<2x64x128xf32, #tpu.memory_space<vmem>>, vector<1x8x128xf32>
    %205 = vector.shape_cast %204 : vector<1x8x128xf32> to vector<8x128xf32>
    %cst_87 = arith.constant dense<0.000000e+00> : vector<8x128xf32>
    %206 = tpu.matmul %182, %24, %cst_87 {dimension_numbers = #tpu.dot_dimension_numbers<[1], [0], [0], [1], [0, 0, 1, 1], [], []>} : vector<8x32xf32>, vector<32x128xf32>, vector<8x128xf32> -> vector<8x128xf32>
    %207 = arith.addf %205, %206 : vector<8x128xf32>
    %c1_88 = arith.constant 1 : index
    %c24_89 = arith.constant 24 : index
    %c0_90 = arith.constant 0 : index
    %208 = vector.load %arg11[%c1_88, %c24_89, %c0_90] : memref<2x64x128xf32, #tpu.memory_space<vmem>>, vector<1x8x128xf32>
    %209 = vector.shape_cast %208 : vector<1x8x128xf32> to vector<8x128xf32>
    %cst_91 = arith.constant dense<0.000000e+00> : vector<8x128xf32>
    %210 = tpu.matmul %197, %26, %cst_91 {dimension_numbers = #tpu.dot_dimension_numbers<[1], [0], [0], [1], [0, 0, 1, 1], [], []>} : vector<8x32xf32>, vector<32x128xf32>, vector<8x128xf32> -> vector<8x128xf32>
    %211 = arith.addf %209, %210 : vector<8x128xf32>
    %212 = arith.negf %207 : vector<8x128xf32>
    %213 = math.exp %212 : vector<8x128xf32>
    %cst_92 = arith.constant 1.000000e+00 : f32
    %214 = vector.broadcast %cst_92 : f32 to vector<8x128xf32>
    %215 = arith.addf %214, %213 : vector<8x128xf32>
    %216 = arith.divf %214, %215 : vector<8x128xf32>
    %217 = math.tanh %207 : vector<8x128xf32>
    %218 = vector.extract_strided_slice %216 {offsets = [0, 0], sizes = [8, 32], strides = [1, 1]} : vector<8x128xf32> to vector<8x32xf32>
    %219 = vector.extract_strided_slice %216 {offsets = [0, 32], sizes = [8, 32], strides = [1, 1]} : vector<8x128xf32> to vector<8x32xf32>
    %220 = vector.extract_strided_slice %217 {offsets = [0, 64], sizes = [8, 32], strides = [1, 1]} : vector<8x128xf32> to vector<8x32xf32>
    %221 = vector.extract_strided_slice %216 {offsets = [0, 96], sizes = [8, 32], strides = [1, 1]} : vector<8x128xf32> to vector<8x32xf32>
    %222 = arith.mulf %219, %180 : vector<8x32xf32>
    %223 = arith.mulf %218, %220 : vector<8x32xf32>
    %224 = arith.addf %222, %223 : vector<8x32xf32>
    %225 = math.tanh %224 : vector<8x32xf32>
    %226 = arith.mulf %221, %225 : vector<8x32xf32>
    %227 = arith.negf %211 : vector<8x128xf32>
    %228 = math.exp %227 : vector<8x128xf32>
    %cst_93 = arith.constant 1.000000e+00 : f32
    %229 = vector.broadcast %cst_93 : f32 to vector<8x128xf32>
    %230 = arith.addf %229, %228 : vector<8x128xf32>
    %231 = arith.divf %229, %230 : vector<8x128xf32>
    %232 = math.tanh %211 : vector<8x128xf32>
    %233 = vector.extract_strided_slice %231 {offsets = [0, 0], sizes = [8, 32], strides = [1, 1]} : vector<8x128xf32> to vector<8x32xf32>
    %234 = vector.extract_strided_slice %231 {offsets = [0, 32], sizes = [8, 32], strides = [1, 1]} : vector<8x128xf32> to vector<8x32xf32>
    %235 = vector.extract_strided_slice %232 {offsets = [0, 64], sizes = [8, 32], strides = [1, 1]} : vector<8x128xf32> to vector<8x32xf32>
    %236 = vector.extract_strided_slice %231 {offsets = [0, 96], sizes = [8, 32], strides = [1, 1]} : vector<8x128xf32> to vector<8x32xf32>
    %237 = arith.mulf %234, %195 : vector<8x32xf32>
    %238 = arith.mulf %233, %235 : vector<8x32xf32>
    %239 = arith.addf %237, %238 : vector<8x32xf32>
    %240 = math.tanh %239 : vector<8x32xf32>
    %241 = arith.mulf %236, %240 : vector<8x32xf32>
    %c0_94 = arith.constant 0 : index
    %c32_95 = arith.constant 32 : index
    %c0_96 = arith.constant 0 : index
    %242 = vector.load %arg12[%c0_94, %c32_95, %c0_96] : memref<2x64x32xf32, #tpu.memory_space<vmem>>, vector<1x8x32xf32>
    %243 = vector.shape_cast %242 : vector<1x8x32xf32> to vector<8x32xf32>
    %244 = vector.shape_cast %226 : vector<8x32xf32> to vector<1x8x32xf32>
    tpu.vector_store %arg12[%c0_94, %c32_95, %c0_96], %244 {strides = array<i32>} : memref<2x64x32xf32, #tpu.memory_space<vmem>>, vector<1x8x32xf32>,
    %c1_97 = arith.constant 1 : index
    %c24_98 = arith.constant 24 : index
    %c0_99 = arith.constant 0 : index
    %245 = vector.load %arg12[%c1_97, %c24_98, %c0_99] : memref<2x64x32xf32, #tpu.memory_space<vmem>>, vector<1x8x32xf32>
    %246 = vector.shape_cast %245 : vector<1x8x32xf32> to vector<8x32xf32>
    %247 = vector.shape_cast %241 : vector<8x32xf32> to vector<1x8x32xf32>
    tpu.vector_store %arg12[%c1_97, %c24_98, %c0_99], %247 {strides = array<i32>} : memref<2x64x32xf32, #tpu.memory_space<vmem>>, vector<1x8x32xf32>,
    %c0_100 = arith.constant 0 : index
    %c40_101 = arith.constant 40 : index
    %c0_102 = arith.constant 0 : index
    %248 = vector.load %arg11[%c0_100, %c40_101, %c0_102] : memref<2x64x128xf32, #tpu.memory_space<vmem>>, vector<1x8x128xf32>
    %249 = vector.shape_cast %248 : vector<1x8x128xf32> to vector<8x128xf32>
    %cst_103 = arith.constant dense<0.000000e+00> : vector<8x128xf32>
    %250 = tpu.matmul %226, %24, %cst_103 {dimension_numbers = #tpu.dot_dimension_numbers<[1], [0], [0], [1], [0, 0, 1, 1], [], []>} : vector<8x32xf32>, vector<32x128xf32>, vector<8x128xf32> -> vector<8x128xf32>
    %251 = arith.addf %249, %250 : vector<8x128xf32>
    %c1_104 = arith.constant 1 : index
    %c16_105 = arith.constant 16 : index
    %c0_106 = arith.constant 0 : index
    %252 = vector.load %arg11[%c1_104, %c16_105, %c0_106] : memref<2x64x128xf32, #tpu.memory_space<vmem>>, vector<1x8x128xf32>
    %253 = vector.shape_cast %252 : vector<1x8x128xf32> to vector<8x128xf32>
    %cst_107 = arith.constant dense<0.000000e+00> : vector<8x128xf32>
    %254 = tpu.matmul %241, %26, %cst_107 {dimension_numbers = #tpu.dot_dimension_numbers<[1], [0], [0], [1], [0, 0, 1, 1], [], []>} : vector<8x32xf32>, vector<32x128xf32>, vector<8x128xf32> -> vector<8x128xf32>
    %255 = arith.addf %253, %254 : vector<8x128xf32>
    %256 = arith.negf %251 : vector<8x128xf32>
    %257 = math.exp %256 : vector<8x128xf32>
    %cst_108 = arith.constant 1.000000e+00 : f32
    %258 = vector.broadcast %cst_108 : f32 to vector<8x128xf32>
    %259 = arith.addf %258, %257 : vector<8x128xf32>
    %260 = arith.divf %258, %259 : vector<8x128xf32>
    %261 = math.tanh %251 : vector<8x128xf32>
    %262 = vector.extract_strided_slice %260 {offsets = [0, 0], sizes = [8, 32], strides = [1, 1]} : vector<8x128xf32> to vector<8x32xf32>
    %263 = vector.extract_strided_slice %260 {offsets = [0, 32], sizes = [8, 32], strides = [1, 1]} : vector<8x128xf32> to vector<8x32xf32>
    %264 = vector.extract_strided_slice %261 {offsets = [0, 64], sizes = [8, 32], strides = [1, 1]} : vector<8x128xf32> to vector<8x32xf32>
    %265 = vector.extract_strided_slice %260 {offsets = [0, 96], sizes = [8, 32], strides = [1, 1]} : vector<8x128xf32> to vector<8x32xf32>
    %266 = arith.mulf %263, %224 : vector<8x32xf32>
    %267 = arith.mulf %262, %264 : vector<8x32xf32>
    %268 = arith.addf %266, %267 : vector<8x32xf32>
    %269 = math.tanh %268 : vector<8x32xf32>
    %270 = arith.mulf %265, %269 : vector<8x32xf32>
    %271 = arith.negf %255 : vector<8x128xf32>
    %272 = math.exp %271 : vector<8x128xf32>
    %cst_109 = arith.constant 1.000000e+00 : f32
    %273 = vector.broadcast %cst_109 : f32 to vector<8x128xf32>
    %274 = arith.addf %273, %272 : vector<8x128xf32>
    %275 = arith.divf %273, %274 : vector<8x128xf32>
    %276 = math.tanh %255 : vector<8x128xf32>
    %277 = vector.extract_strided_slice %275 {offsets = [0, 0], sizes = [8, 32], strides = [1, 1]} : vector<8x128xf32> to vector<8x32xf32>
    %278 = vector.extract_strided_slice %275 {offsets = [0, 32], sizes = [8, 32], strides = [1, 1]} : vector<8x128xf32> to vector<8x32xf32>
    %279 = vector.extract_strided_slice %276 {offsets = [0, 64], sizes = [8, 32], strides = [1, 1]} : vector<8x128xf32> to vector<8x32xf32>
    %280 = vector.extract_strided_slice %275 {offsets = [0, 96], sizes = [8, 32], strides = [1, 1]} : vector<8x128xf32> to vector<8x32xf32>
    %281 = arith.mulf %278, %239 : vector<8x32xf32>
    %282 = arith.mulf %277, %279 : vector<8x32xf32>
    %283 = arith.addf %281, %282 : vector<8x32xf32>
    %284 = math.tanh %283 : vector<8x32xf32>
    %285 = arith.mulf %280, %284 : vector<8x32xf32>
    %c0_110 = arith.constant 0 : index
    %c40_111 = arith.constant 40 : index
    %c0_112 = arith.constant 0 : index
    %286 = vector.load %arg12[%c0_110, %c40_111, %c0_112] : memref<2x64x32xf32, #tpu.memory_space<vmem>>, vector<1x8x32xf32>
    %287 = vector.shape_cast %286 : vector<1x8x32xf32> to vector<8x32xf32>
    %288 = vector.shape_cast %270 : vector<8x32xf32> to vector<1x8x32xf32>
    tpu.vector_store %arg12[%c0_110, %c40_111, %c0_112], %288 {strides = array<i32>} : memref<2x64x32xf32, #tpu.memory_space<vmem>>, vector<1x8x32xf32>,
    %c1_113 = arith.constant 1 : index
    %c16_114 = arith.constant 16 : index
    %c0_115 = arith.constant 0 : index
    %289 = vector.load %arg12[%c1_113, %c16_114, %c0_115] : memref<2x64x32xf32, #tpu.memory_space<vmem>>, vector<1x8x32xf32>
    %290 = vector.shape_cast %289 : vector<1x8x32xf32> to vector<8x32xf32>
    %291 = vector.shape_cast %285 : vector<8x32xf32> to vector<1x8x32xf32>
    tpu.vector_store %arg12[%c1_113, %c16_114, %c0_115], %291 {strides = array<i32>} : memref<2x64x32xf32, #tpu.memory_space<vmem>>, vector<1x8x32xf32>,
    %c0_116 = arith.constant 0 : index
    %c48_117 = arith.constant 48 : index
    %c0_118 = arith.constant 0 : index
    %292 = vector.load %arg11[%c0_116, %c48_117, %c0_118] : memref<2x64x128xf32, #tpu.memory_space<vmem>>, vector<1x8x128xf32>
    %293 = vector.shape_cast %292 : vector<1x8x128xf32> to vector<8x128xf32>
    %cst_119 = arith.constant dense<0.000000e+00> : vector<8x128xf32>
    %294 = tpu.matmul %270, %24, %cst_119 {dimension_numbers = #tpu.dot_dimension_numbers<[1], [0], [0], [1], [0, 0, 1, 1], [], []>} : vector<8x32xf32>, vector<32x128xf32>, vector<8x128xf32> -> vector<8x128xf32>
    %295 = arith.addf %293, %294 : vector<8x128xf32>
    %c1_120 = arith.constant 1 : index
    %c8_121 = arith.constant 8 : index
    %c0_122 = arith.constant 0 : index
    %296 = vector.load %arg11[%c1_120, %c8_121, %c0_122] : memref<2x64x128xf32, #tpu.memory_space<vmem>>, vector<1x8x128xf32>
    %297 = vector.shape_cast %296 : vector<1x8x128xf32> to vector<8x128xf32>
    %cst_123 = arith.constant dense<0.000000e+00> : vector<8x128xf32>
    %298 = tpu.matmul %285, %26, %cst_123 {dimension_numbers = #tpu.dot_dimension_numbers<[1], [0], [0], [1], [0, 0, 1, 1], [], []>} : vector<8x32xf32>, vector<32x128xf32>, vector<8x128xf32> -> vector<8x128xf32>
    %299 = arith.addf %297, %298 : vector<8x128xf32>
    %300 = arith.negf %295 : vector<8x128xf32>
    %301 = math.exp %300 : vector<8x128xf32>
    %cst_124 = arith.constant 1.000000e+00 : f32
    %302 = vector.broadcast %cst_124 : f32 to vector<8x128xf32>
    %303 = arith.addf %302, %301 : vector<8x128xf32>
    %304 = arith.divf %302, %303 : vector<8x128xf32>
    %305 = math.tanh %295 : vector<8x128xf32>
    %306 = vector.extract_strided_slice %304 {offsets = [0, 0], sizes = [8, 32], strides = [1, 1]} : vector<8x128xf32> to vector<8x32xf32>
    %307 = vector.extract_strided_slice %304 {offsets = [0, 32], sizes = [8, 32], strides = [1, 1]} : vector<8x128xf32> to vector<8x32xf32>
    %308 = vector.extract_strided_slice %305 {offsets = [0, 64], sizes = [8, 32], strides = [1, 1]} : vector<8x128xf32> to vector<8x32xf32>
    %309 = vector.extract_strided_slice %304 {offsets = [0, 96], sizes = [8, 32], strides = [1, 1]} : vector<8x128xf32> to vector<8x32xf32>
    %310 = arith.mulf %307, %268 : vector<8x32xf32>
    %311 = arith.mulf %306, %308 : vector<8x32xf32>
    %312 = arith.addf %310, %311 : vector<8x32xf32>
    %313 = math.tanh %312 : vector<8x32xf32>
    %314 = arith.mulf %309, %313 : vector<8x32xf32>
    %315 = arith.negf %299 : vector<8x128xf32>
    %316 = math.exp %315 : vector<8x128xf32>
    %cst_125 = arith.constant 1.000000e+00 : f32
    %317 = vector.broadcast %cst_125 : f32 to vector<8x128xf32>
    %318 = arith.addf %317, %316 : vector<8x128xf32>
    %319 = arith.divf %317, %318 : vector<8x128xf32>
    %320 = math.tanh %299 : vector<8x128xf32>
    %321 = vector.extract_strided_slice %319 {offsets = [0, 0], sizes = [8, 32], strides = [1, 1]} : vector<8x128xf32> to vector<8x32xf32>
    %322 = vector.extract_strided_slice %319 {offsets = [0, 32], sizes = [8, 32], strides = [1, 1]} : vector<8x128xf32> to vector<8x32xf32>
    %323 = vector.extract_strided_slice %320 {offsets = [0, 64], sizes = [8, 32], strides = [1, 1]} : vector<8x128xf32> to vector<8x32xf32>
    %324 = vector.extract_strided_slice %319 {offsets = [0, 96], sizes = [8, 32], strides = [1, 1]} : vector<8x128xf32> to vector<8x32xf32>
    %325 = arith.mulf %322, %283 : vector<8x32xf32>
    %326 = arith.mulf %321, %323 : vector<8x32xf32>
    %327 = arith.addf %325, %326 : vector<8x32xf32>
    %328 = math.tanh %327 : vector<8x32xf32>
    %329 = arith.mulf %324, %328 : vector<8x32xf32>
    %c0_126 = arith.constant 0 : index
    %c48_127 = arith.constant 48 : index
    %c0_128 = arith.constant 0 : index
    %330 = vector.load %arg12[%c0_126, %c48_127, %c0_128] : memref<2x64x32xf32, #tpu.memory_space<vmem>>, vector<1x8x32xf32>
    %331 = vector.shape_cast %330 : vector<1x8x32xf32> to vector<8x32xf32>
    %332 = vector.shape_cast %314 : vector<8x32xf32> to vector<1x8x32xf32>
    tpu.vector_store %arg12[%c0_126, %c48_127, %c0_128], %332 {strides = array<i32>} : memref<2x64x32xf32, #tpu.memory_space<vmem>>, vector<1x8x32xf32>,
    %c1_129 = arith.constant 1 : index
    %c8_130 = arith.constant 8 : index
    %c0_131 = arith.constant 0 : index
    %333 = vector.load %arg12[%c1_129, %c8_130, %c0_131] : memref<2x64x32xf32, #tpu.memory_space<vmem>>, vector<1x8x32xf32>
    %334 = vector.shape_cast %333 : vector<1x8x32xf32> to vector<8x32xf32>
    %335 = vector.shape_cast %329 : vector<8x32xf32> to vector<1x8x32xf32>
    tpu.vector_store %arg12[%c1_129, %c8_130, %c0_131], %335 {strides = array<i32>} : memref<2x64x32xf32, #tpu.memory_space<vmem>>, vector<1x8x32xf32>,
    %c0_132 = arith.constant 0 : index
    %c56_133 = arith.constant 56 : index
    %c0_134 = arith.constant 0 : index
    %336 = vector.load %arg11[%c0_132, %c56_133, %c0_134] : memref<2x64x128xf32, #tpu.memory_space<vmem>>, vector<1x8x128xf32>
    %337 = vector.shape_cast %336 : vector<1x8x128xf32> to vector<8x128xf32>
    %cst_135 = arith.constant dense<0.000000e+00> : vector<8x128xf32>
    %338 = tpu.matmul %314, %24, %cst_135 {dimension_numbers = #tpu.dot_dimension_numbers<[1], [0], [0], [1], [0, 0, 1, 1], [], []>} : vector<8x32xf32>, vector<32x128xf32>, vector<8x128xf32> -> vector<8x128xf32>
    %339 = arith.addf %337, %338 : vector<8x128xf32>
    %c1_136 = arith.constant 1 : index
    %c0_137 = arith.constant 0 : index
    %c0_138 = arith.constant 0 : index
    %340 = vector.load %arg11[%c1_136, %c0_137, %c0_138] : memref<2x64x128xf32, #tpu.memory_space<vmem>>, vector<1x8x128xf32>
    %341 = vector.shape_cast %340 : vector<1x8x128xf32> to vector<8x128xf32>
    %cst_139 = arith.constant dense<0.000000e+00> : vector<8x128xf32>
    %342 = tpu.matmul %329, %26, %cst_139 {dimension_numbers = #tpu.dot_dimension_numbers<[1], [0], [0], [1], [0, 0, 1, 1], [], []>} : vector<8x32xf32>, vector<32x128xf32>, vector<8x128xf32> -> vector<8x128xf32>
    %343 = arith.addf %341, %342 : vector<8x128xf32>
    %344 = arith.negf %339 : vector<8x128xf32>
    %345 = math.exp %344 : vector<8x128xf32>
    %cst_140 = arith.constant 1.000000e+00 : f32
    %346 = vector.broadcast %cst_140 : f32 to vector<8x128xf32>
    %347 = arith.addf %346, %345 : vector<8x128xf32>
    %348 = arith.divf %346, %347 : vector<8x128xf32>
    %349 = math.tanh %339 : vector<8x128xf32>
    %350 = vector.extract_strided_slice %348 {offsets = [0, 0], sizes = [8, 32], strides = [1, 1]} : vector<8x128xf32> to vector<8x32xf32>
    %351 = vector.extract_strided_slice %348 {offsets = [0, 32], sizes = [8, 32], strides = [1, 1]} : vector<8x128xf32> to vector<8x32xf32>
    %352 = vector.extract_strided_slice %349 {offsets = [0, 64], sizes = [8, 32], strides = [1, 1]} : vector<8x128xf32> to vector<8x32xf32>
    %353 = vector.extract_strided_slice %348 {offsets = [0, 96], sizes = [8, 32], strides = [1, 1]} : vector<8x128xf32> to vector<8x32xf32>
    %354 = arith.mulf %351, %312 : vector<8x32xf32>
    %355 = arith.mulf %350, %352 : vector<8x32xf32>
    %356 = arith.addf %354, %355 : vector<8x32xf32>
    %357 = math.tanh %356 : vector<8x32xf32>
    %358 = arith.mulf %353, %357 : vector<8x32xf32>
    %359 = arith.negf %343 : vector<8x128xf32>
    %360 = math.exp %359 : vector<8x128xf32>
    %cst_141 = arith.constant 1.000000e+00 : f32
    %361 = vector.broadcast %cst_141 : f32 to vector<8x128xf32>
    %362 = arith.addf %361, %360 : vector<8x128xf32>
    %363 = arith.divf %361, %362 : vector<8x128xf32>
    %364 = math.tanh %343 : vector<8x128xf32>
    %365 = vector.extract_strided_slice %363 {offsets = [0, 0], sizes = [8, 32], strides = [1, 1]} : vector<8x128xf32> to vector<8x32xf32>
    %366 = vector.extract_strided_slice %363 {offsets = [0, 32], sizes = [8, 32], strides = [1, 1]} : vector<8x128xf32> to vector<8x32xf32>
    %367 = vector.extract_strided_slice %364 {offsets = [0, 64], sizes = [8, 32], strides = [1, 1]} : vector<8x128xf32> to vector<8x32xf32>
    %368 = vector.extract_strided_slice %363 {offsets = [0, 96], sizes = [8, 32], strides = [1, 1]} : vector<8x128xf32> to vector<8x32xf32>
    %369 = arith.mulf %366, %327 : vector<8x32xf32>
    %370 = arith.mulf %365, %367 : vector<8x32xf32>
    %371 = arith.addf %369, %370 : vector<8x32xf32>
    %372 = math.tanh %371 : vector<8x32xf32>
    %373 = arith.mulf %368, %372 : vector<8x32xf32>
    %c0_142 = arith.constant 0 : index
    %c56_143 = arith.constant 56 : index
    %c0_144 = arith.constant 0 : index
    %374 = vector.load %arg12[%c0_142, %c56_143, %c0_144] : memref<2x64x32xf32, #tpu.memory_space<vmem>>, vector<1x8x32xf32>
    %375 = vector.shape_cast %374 : vector<1x8x32xf32> to vector<8x32xf32>
    %376 = vector.shape_cast %358 : vector<8x32xf32> to vector<1x8x32xf32>
    tpu.vector_store %arg12[%c0_142, %c56_143, %c0_144], %376 {strides = array<i32>} : memref<2x64x32xf32, #tpu.memory_space<vmem>>, vector<1x8x32xf32>,
    %c1_145 = arith.constant 1 : index
    %c0_146 = arith.constant 0 : index
    %c0_147 = arith.constant 0 : index
    %377 = vector.load %arg12[%c1_145, %c0_146, %c0_147] : memref<2x64x32xf32, #tpu.memory_space<vmem>>, vector<1x8x32xf32>
    %378 = vector.shape_cast %377 : vector<1x8x32xf32> to vector<8x32xf32>
    %379 = vector.shape_cast %373 : vector<8x32xf32> to vector<1x8x32xf32>
    tpu.vector_store %arg12[%c1_145, %c0_146, %c0_147], %379 {strides = array<i32>} : memref<2x64x32xf32, #tpu.memory_space<vmem>>, vector<1x8x32xf32>,
    %c0_148 = arith.constant 0 : index
    %c0_149 = arith.constant 0 : index
    %c0_150 = arith.constant 0 : index
    %380 = vector.load %arg12[%c0_148, %c0_149, %c0_150] : memref<2x64x32xf32, #tpu.memory_space<vmem>>, vector<1x64x32xf32>
    %381 = vector.shape_cast %380 : vector<1x64x32xf32> to vector<64x32xf32>
    %382 = arith.truncf %381 : vector<64x32xf32> to vector<64x32xbf16>
    %c1_151 = arith.constant 1 : index
    %c0_152 = arith.constant 0 : index
    %c0_153 = arith.constant 0 : index
    %383 = vector.load %arg12[%c1_151, %c0_152, %c0_153] : memref<2x64x32xf32, #tpu.memory_space<vmem>>, vector<1x64x32xf32>
    %384 = vector.shape_cast %383 : vector<1x64x32xf32> to vector<64x32xf32>
    %385 = arith.truncf %384 : vector<64x32xf32> to vector<64x32xbf16>
    %c0_154 = arith.constant 0 : index
    %c0_155 = arith.constant 0 : index
    %c0_156 = arith.constant 0 : index
    %c0_157 = arith.constant 0 : index
    %386 = vector.load %arg5[%c0_154, %c0_155, %c0_156, %c0_157] : memref<2x2x32x128xbf16, #tpu.memory_space<vmem>>, vector<1x1x32x128xbf16>
    %387 = vector.shape_cast %386 : vector<1x1x32x128xbf16> to vector<32x128xbf16>
    %cst_158 = arith.constant dense<0.000000e+00> : vector<64x128xf32>
    %388 = tpu.matmul %382, %387, %cst_158 {dimension_numbers = #tpu.dot_dimension_numbers<[1], [0], [0], [1], [0, 0, 1, 1], [], []>} : vector<64x32xbf16>, vector<32x128xbf16>, vector<64x128xf32> -> vector<64x128xf32>
    %c0_159 = arith.constant 0 : index
    %c1_160 = arith.constant 1 : index
    %c0_161 = arith.constant 0 : index
    %c0_162 = arith.constant 0 : index
    %389 = vector.load %arg5[%c0_159, %c1_160, %c0_161, %c0_162] : memref<2x2x32x128xbf16, #tpu.memory_space<vmem>>, vector<1x1x32x128xbf16>
    %390 = vector.shape_cast %389 : vector<1x1x32x128xbf16> to vector<32x128xbf16>
    %cst_163 = arith.constant dense<0.000000e+00> : vector<64x128xf32>
    %391 = tpu.matmul %385, %390, %cst_163 {dimension_numbers = #tpu.dot_dimension_numbers<[1], [0], [0], [1], [0, 0, 1, 1], [], []>} : vector<64x32xbf16>, vector<32x128xbf16>, vector<64x128xf32> -> vector<64x128xf32>
    %392 = arith.addf %388, %391 : vector<64x128xf32>
    %c0_164 = arith.constant 0 : index
    %c0_165 = arith.constant 0 : index
    %c0_166 = arith.constant 0 : index
    %393 = vector.load %arg6[%c0_164, %c0_165, %c0_166] : memref<2x1x128xf32, #tpu.memory_space<vmem>>, vector<1x1x128xf32>
    %394 = vector.shape_cast %393 : vector<1x1x128xf32> to vector<1x128xf32>
    %395 = vector.broadcast %394 : vector<1x128xf32> to vector<64x128xf32>
    %396 = arith.addf %392, %395 : vector<64x128xf32>
    %c0_167 = arith.constant 0 : index
    %c0_168 = arith.constant 0 : index
    %c0_169 = arith.constant 0 : index
    %397 = vector.load %arg13[%c0_167, %c0_168, %c0_169] : memref<2x64x128xf32, #tpu.memory_space<vmem>>, vector<1x64x128xf32>
    %398 = vector.shape_cast %397 : vector<1x64x128xf32> to vector<64x128xf32>
    %399 = vector.shape_cast %396 : vector<64x128xf32> to vector<1x64x128xf32>
    tpu.vector_store %arg13[%c0_167, %c0_168, %c0_169], %399 {strides = array<i32>} : memref<2x64x128xf32, #tpu.memory_space<vmem>>, vector<1x64x128xf32>,
    %c1_170 = arith.constant 1 : index
    %c0_171 = arith.constant 0 : index
    %c0_172 = arith.constant 0 : index
    %c0_173 = arith.constant 0 : index
    %400 = vector.load %arg5[%c1_170, %c0_171, %c0_172, %c0_173] : memref<2x2x32x128xbf16, #tpu.memory_space<vmem>>, vector<1x1x32x128xbf16>
    %401 = vector.shape_cast %400 : vector<1x1x32x128xbf16> to vector<32x128xbf16>
    %cst_174 = arith.constant dense<0.000000e+00> : vector<64x128xf32>
    %402 = tpu.matmul %382, %401, %cst_174 {dimension_numbers = #tpu.dot_dimension_numbers<[1], [0], [0], [1], [0, 0, 1, 1], [], []>} : vector<64x32xbf16>, vector<32x128xbf16>, vector<64x128xf32> -> vector<64x128xf32>
    %c1_175 = arith.constant 1 : index
    %c1_176 = arith.constant 1 : index
    %c0_177 = arith.constant 0 : index
    %c0_178 = arith.constant 0 : index
    %403 = vector.load %arg5[%c1_175, %c1_176, %c0_177, %c0_178] : memref<2x2x32x128xbf16, #tpu.memory_space<vmem>>, vector<1x1x32x128xbf16>
    %404 = vector.shape_cast %403 : vector<1x1x32x128xbf16> to vector<32x128xbf16>
    %cst_179 = arith.constant dense<0.000000e+00> : vector<64x128xf32>
    %405 = tpu.matmul %385, %404, %cst_179 {dimension_numbers = #tpu.dot_dimension_numbers<[1], [0], [0], [1], [0, 0, 1, 1], [], []>} : vector<64x32xbf16>, vector<32x128xbf16>, vector<64x128xf32> -> vector<64x128xf32>
    %406 = arith.addf %402, %405 : vector<64x128xf32>
    %c1_180 = arith.constant 1 : index
    %c0_181 = arith.constant 0 : index
    %c0_182 = arith.constant 0 : index
    %407 = vector.load %arg6[%c1_180, %c0_181, %c0_182] : memref<2x1x128xf32, #tpu.memory_space<vmem>>, vector<1x1x128xf32>
    %408 = vector.shape_cast %407 : vector<1x1x128xf32> to vector<1x128xf32>
    %409 = vector.broadcast %408 : vector<1x128xf32> to vector<64x128xf32>
    %410 = arith.addf %406, %409 : vector<64x128xf32>
    %c1_183 = arith.constant 1 : index
    %c0_184 = arith.constant 0 : index
    %c0_185 = arith.constant 0 : index
    %411 = vector.load %arg13[%c1_183, %c0_184, %c0_185] : memref<2x64x128xf32, #tpu.memory_space<vmem>>, vector<1x64x128xf32>
    %412 = vector.shape_cast %411 : vector<1x64x128xf32> to vector<64x128xf32>
    %413 = vector.shape_cast %410 : vector<64x128xf32> to vector<1x64x128xf32>
    tpu.vector_store %arg13[%c1_183, %c0_184, %c0_185], %413 {strides = array<i32>} : memref<2x64x128xf32, #tpu.memory_space<vmem>>, vector<1x64x128xf32>,
    %c0_186 = arith.constant 0 : index
    %c0_187 = arith.constant 0 : index
    %c0_188 = arith.constant 0 : index
    %414 = vector.load %arg7[%c0_186, %c0_187, %c0_188] : memref<2x32x128xf32, #tpu.memory_space<vmem>>, vector<1x32x128xf32>
    %415 = vector.shape_cast %414 : vector<1x32x128xf32> to vector<32x128xf32>
    %c1_189 = arith.constant 1 : index
    %c0_190 = arith.constant 0 : index
    %c0_191 = arith.constant 0 : index
    %416 = vector.load %arg7[%c1_189, %c0_190, %c0_191] : memref<2x32x128xf32, #tpu.memory_space<vmem>>, vector<1x32x128xf32>
    %417 = vector.shape_cast %416 : vector<1x32x128xf32> to vector<32x128xf32>
    %cst_192 = arith.constant 0xFF800000 : f32
    %418 = vector.broadcast %cst_192 : f32 to vector<8x32xf32>
    %c0_193 = arith.constant 0 : index
    %c0_194 = arith.constant 0 : index
    %c0_195 = arith.constant 0 : index
    %419 = vector.load %arg13[%c0_193, %c0_194, %c0_195] : memref<2x64x128xf32, #tpu.memory_space<vmem>>, vector<1x8x128xf32>
    %420 = vector.shape_cast %419 : vector<1x8x128xf32> to vector<8x128xf32>
    %cst_196 = arith.constant dense<0.000000e+00> : vector<8x128xf32>
    %421 = tpu.matmul %27, %415, %cst_196 {dimension_numbers = #tpu.dot_dimension_numbers<[1], [0], [0], [1], [0, 0, 1, 1], [], []>} : vector<8x32xf32>, vector<32x128xf32>, vector<8x128xf32> -> vector<8x128xf32>
    %422 = arith.addf %420, %421 : vector<8x128xf32>
    %c1_197 = arith.constant 1 : index
    %c56_198 = arith.constant 56 : index
    %c0_199 = arith.constant 0 : index
    %423 = vector.load %arg13[%c1_197, %c56_198, %c0_199] : memref<2x64x128xf32, #tpu.memory_space<vmem>>, vector<1x8x128xf32>
    %424 = vector.shape_cast %423 : vector<1x8x128xf32> to vector<8x128xf32>
    %cst_200 = arith.constant dense<0.000000e+00> : vector<8x128xf32>
    %425 = tpu.matmul %27, %417, %cst_200 {dimension_numbers = #tpu.dot_dimension_numbers<[1], [0], [0], [1], [0, 0, 1, 1], [], []>} : vector<8x32xf32>, vector<32x128xf32>, vector<8x128xf32> -> vector<8x128xf32>
    %426 = arith.addf %424, %425 : vector<8x128xf32>
    %427 = arith.negf %422 : vector<8x128xf32>
    %428 = math.exp %427 : vector<8x128xf32>
    %cst_201 = arith.constant 1.000000e+00 : f32
    %429 = vector.broadcast %cst_201 : f32 to vector<8x128xf32>
    %430 = arith.addf %429, %428 : vector<8x128xf32>
    %431 = arith.divf %429, %430 : vector<8x128xf32>
    %432 = math.tanh %422 : vector<8x128xf32>
    %433 = vector.extract_strided_slice %431 {offsets = [0, 0], sizes = [8, 32], strides = [1, 1]} : vector<8x128xf32> to vector<8x32xf32>
    %434 = vector.extract_strided_slice %431 {offsets = [0, 32], sizes = [8, 32], strides = [1, 1]} : vector<8x128xf32> to vector<8x32xf32>
    %435 = vector.extract_strided_slice %432 {offsets = [0, 64], sizes = [8, 32], strides = [1, 1]} : vector<8x128xf32> to vector<8x32xf32>
    %436 = vector.extract_strided_slice %431 {offsets = [0, 96], sizes = [8, 32], strides = [1, 1]} : vector<8x128xf32> to vector<8x32xf32>
    %437 = arith.mulf %434, %27 : vector<8x32xf32>
    %438 = arith.mulf %433, %435 : vector<8x32xf32>
    %439 = arith.addf %437, %438 : vector<8x32xf32>
    %440 = math.tanh %439 : vector<8x32xf32>
    %441 = arith.mulf %436, %440 : vector<8x32xf32>
    %442 = arith.negf %426 : vector<8x128xf32>
    %443 = math.exp %442 : vector<8x128xf32>
    %cst_202 = arith.constant 1.000000e+00 : f32
    %444 = vector.broadcast %cst_202 : f32 to vector<8x128xf32>
    %445 = arith.addf %444, %443 : vector<8x128xf32>
    %446 = arith.divf %444, %445 : vector<8x128xf32>
    %447 = math.tanh %426 : vector<8x128xf32>
    %448 = vector.extract_strided_slice %446 {offsets = [0, 0], sizes = [8, 32], strides = [1, 1]} : vector<8x128xf32> to vector<8x32xf32>
    %449 = vector.extract_strided_slice %446 {offsets = [0, 32], sizes = [8, 32], strides = [1, 1]} : vector<8x128xf32> to vector<8x32xf32>
    %450 = vector.extract_strided_slice %447 {offsets = [0, 64], sizes = [8, 32], strides = [1, 1]} : vector<8x128xf32> to vector<8x32xf32>
    %451 = vector.extract_strided_slice %446 {offsets = [0, 96], sizes = [8, 32], strides = [1, 1]} : vector<8x128xf32> to vector<8x32xf32>
    %452 = arith.mulf %449, %27 : vector<8x32xf32>
    %453 = arith.mulf %448, %450 : vector<8x32xf32>
    %454 = arith.addf %452, %453 : vector<8x32xf32>
    %455 = math.tanh %454 : vector<8x32xf32>
    %456 = arith.mulf %451, %455 : vector<8x32xf32>
    %457 = arith.maximumf %418, %441 : vector<8x32xf32>
    %458 = arith.maximumf %418, %456 : vector<8x32xf32>
    %c0_203 = arith.constant 0 : index
    %c8_204 = arith.constant 8 : index
    %c0_205 = arith.constant 0 : index
    %459 = vector.load %arg13[%c0_203, %c8_204, %c0_205] : memref<2x64x128xf32, #tpu.memory_space<vmem>>, vector<1x8x128xf32>
    %460 = vector.shape_cast %459 : vector<1x8x128xf32> to vector<8x128xf32>
    %cst_206 = arith.constant dense<0.000000e+00> : vector<8x128xf32>
    %461 = tpu.matmul %441, %415, %cst_206 {dimension_numbers = #tpu.dot_dimension_numbers<[1], [0], [0], [1], [0, 0, 1, 1], [], []>} : vector<8x32xf32>, vector<32x128xf32>, vector<8x128xf32> -> vector<8x128xf32>
    %462 = arith.addf %460, %461 : vector<8x128xf32>
    %c1_207 = arith.constant 1 : index
    %c48_208 = arith.constant 48 : index
    %c0_209 = arith.constant 0 : index
    %463 = vector.load %arg13[%c1_207, %c48_208, %c0_209] : memref<2x64x128xf32, #tpu.memory_space<vmem>>, vector<1x8x128xf32>
    %464 = vector.shape_cast %463 : vector<1x8x128xf32> to vector<8x128xf32>
    %cst_210 = arith.constant dense<0.000000e+00> : vector<8x128xf32>
    %465 = tpu.matmul %456, %417, %cst_210 {dimension_numbers = #tpu.dot_dimension_numbers<[1], [0], [0], [1], [0, 0, 1, 1], [], []>} : vector<8x32xf32>, vector<32x128xf32>, vector<8x128xf32> -> vector<8x128xf32>
    %466 = arith.addf %464, %465 : vector<8x128xf32>
    %467 = arith.negf %462 : vector<8x128xf32>
    %468 = math.exp %467 : vector<8x128xf32>
    %cst_211 = arith.constant 1.000000e+00 : f32
    %469 = vector.broadcast %cst_211 : f32 to vector<8x128xf32>
    %470 = arith.addf %469, %468 : vector<8x128xf32>
    %471 = arith.divf %469, %470 : vector<8x128xf32>
    %472 = math.tanh %462 : vector<8x128xf32>
    %473 = vector.extract_strided_slice %471 {offsets = [0, 0], sizes = [8, 32], strides = [1, 1]} : vector<8x128xf32> to vector<8x32xf32>
    %474 = vector.extract_strided_slice %471 {offsets = [0, 32], sizes = [8, 32], strides = [1, 1]} : vector<8x128xf32> to vector<8x32xf32>
    %475 = vector.extract_strided_slice %472 {offsets = [0, 64], sizes = [8, 32], strides = [1, 1]} : vector<8x128xf32> to vector<8x32xf32>
    %476 = vector.extract_strided_slice %471 {offsets = [0, 96], sizes = [8, 32], strides = [1, 1]} : vector<8x128xf32> to vector<8x32xf32>
    %477 = arith.mulf %474, %439 : vector<8x32xf32>
    %478 = arith.mulf %473, %475 : vector<8x32xf32>
    %479 = arith.addf %477, %478 : vector<8x32xf32>
    %480 = math.tanh %479 : vector<8x32xf32>
    %481 = arith.mulf %476, %480 : vector<8x32xf32>
    %482 = arith.negf %466 : vector<8x128xf32>
    %483 = math.exp %482 : vector<8x128xf32>
    %cst_212 = arith.constant 1.000000e+00 : f32
    %484 = vector.broadcast %cst_212 : f32 to vector<8x128xf32>
    %485 = arith.addf %484, %483 : vector<8x128xf32>
    %486 = arith.divf %484, %485 : vector<8x128xf32>
    %487 = math.tanh %466 : vector<8x128xf32>
    %488 = vector.extract_strided_slice %486 {offsets = [0, 0], sizes = [8, 32], strides = [1, 1]} : vector<8x128xf32> to vector<8x32xf32>
    %489 = vector.extract_strided_slice %486 {offsets = [0, 32], sizes = [8, 32], strides = [1, 1]} : vector<8x128xf32> to vector<8x32xf32>
    %490 = vector.extract_strided_slice %487 {offsets = [0, 64], sizes = [8, 32], strides = [1, 1]} : vector<8x128xf32> to vector<8x32xf32>
    %491 = vector.extract_strided_slice %486 {offsets = [0, 96], sizes = [8, 32], strides = [1, 1]} : vector<8x128xf32> to vector<8x32xf32>
    %492 = arith.mulf %489, %454 : vector<8x32xf32>
    %493 = arith.mulf %488, %490 : vector<8x32xf32>
    %494 = arith.addf %492, %493 : vector<8x32xf32>
    %495 = math.tanh %494 : vector<8x32xf32>
    %496 = arith.mulf %491, %495 : vector<8x32xf32>
    %497 = arith.maximumf %457, %481 : vector<8x32xf32>
    %498 = arith.maximumf %458, %496 : vector<8x32xf32>
    %c0_213 = arith.constant 0 : index
    %c16_214 = arith.constant 16 : index
    %c0_215 = arith.constant 0 : index
    %499 = vector.load %arg13[%c0_213, %c16_214, %c0_215] : memref<2x64x128xf32, #tpu.memory_space<vmem>>, vector<1x8x128xf32>
    %500 = vector.shape_cast %499 : vector<1x8x128xf32> to vector<8x128xf32>
    %cst_216 = arith.constant dense<0.000000e+00> : vector<8x128xf32>
    %501 = tpu.matmul %481, %415, %cst_216 {dimension_numbers = #tpu.dot_dimension_numbers<[1], [0], [0], [1], [0, 0, 1, 1], [], []>} : vector<8x32xf32>, vector<32x128xf32>, vector<8x128xf32> -> vector<8x128xf32>
    %502 = arith.addf %500, %501 : vector<8x128xf32>
    %c1_217 = arith.constant 1 : index
    %c40_218 = arith.constant 40 : index
    %c0_219 = arith.constant 0 : index
    %503 = vector.load %arg13[%c1_217, %c40_218, %c0_219] : memref<2x64x128xf32, #tpu.memory_space<vmem>>, vector<1x8x128xf32>
    %504 = vector.shape_cast %503 : vector<1x8x128xf32> to vector<8x128xf32>
    %cst_220 = arith.constant dense<0.000000e+00> : vector<8x128xf32>
    %505 = tpu.matmul %496, %417, %cst_220 {dimension_numbers = #tpu.dot_dimension_numbers<[1], [0], [0], [1], [0, 0, 1, 1], [], []>} : vector<8x32xf32>, vector<32x128xf32>, vector<8x128xf32> -> vector<8x128xf32>
    %506 = arith.addf %504, %505 : vector<8x128xf32>
    %507 = arith.negf %502 : vector<8x128xf32>
    %508 = math.exp %507 : vector<8x128xf32>
    %cst_221 = arith.constant 1.000000e+00 : f32
    %509 = vector.broadcast %cst_221 : f32 to vector<8x128xf32>
    %510 = arith.addf %509, %508 : vector<8x128xf32>
    %511 = arith.divf %509, %510 : vector<8x128xf32>
    %512 = math.tanh %502 : vector<8x128xf32>
    %513 = vector.extract_strided_slice %511 {offsets = [0, 0], sizes = [8, 32], strides = [1, 1]} : vector<8x128xf32> to vector<8x32xf32>
    %514 = vector.extract_strided_slice %511 {offsets = [0, 32], sizes = [8, 32], strides = [1, 1]} : vector<8x128xf32> to vector<8x32xf32>
    %515 = vector.extract_strided_slice %512 {offsets = [0, 64], sizes = [8, 32], strides = [1, 1]} : vector<8x128xf32> to vector<8x32xf32>
    %516 = vector.extract_strided_slice %511 {offsets = [0, 96], sizes = [8, 32], strides = [1, 1]} : vector<8x128xf32> to vector<8x32xf32>
    %517 = arith.mulf %514, %479 : vector<8x32xf32>
    %518 = arith.mulf %513, %515 : vector<8x32xf32>
    %519 = arith.addf %517, %518 : vector<8x32xf32>
    %520 = math.tanh %519 : vector<8x32xf32>
    %521 = arith.mulf %516, %520 : vector<8x32xf32>
    %522 = arith.negf %506 : vector<8x128xf32>
    %523 = math.exp %522 : vector<8x128xf32>
    %cst_222 = arith.constant 1.000000e+00 : f32
    %524 = vector.broadcast %cst_222 : f32 to vector<8x128xf32>
    %525 = arith.addf %524, %523 : vector<8x128xf32>
    %526 = arith.divf %524, %525 : vector<8x128xf32>
    %527 = math.tanh %506 : vector<8x128xf32>
    %528 = vector.extract_strided_slice %526 {offsets = [0, 0], sizes = [8, 32], strides = [1, 1]} : vector<8x128xf32> to vector<8x32xf32>
    %529 = vector.extract_strided_slice %526 {offsets = [0, 32], sizes = [8, 32], strides = [1, 1]} : vector<8x128xf32> to vector<8x32xf32>
    %530 = vector.extract_strided_slice %527 {offsets = [0, 64], sizes = [8, 32], strides = [1, 1]} : vector<8x128xf32> to vector<8x32xf32>
    %531 = vector.extract_strided_slice %526 {offsets = [0, 96], sizes = [8, 32], strides = [1, 1]} : vector<8x128xf32> to vector<8x32xf32>
    %532 = arith.mulf %529, %494 : vector<8x32xf32>
    %533 = arith.mulf %528, %530 : vector<8x32xf32>
    %534 = arith.addf %532, %533 : vector<8x32xf32>
    %535 = math.tanh %534 : vector<8x32xf32>
    %536 = arith.mulf %531, %535 : vector<8x32xf32>
    %537 = arith.maximumf %497, %521 : vector<8x32xf32>
    %538 = arith.maximumf %498, %536 : vector<8x32xf32>
    %c0_223 = arith.constant 0 : index
    %c24_224 = arith.constant 24 : index
    %c0_225 = arith.constant 0 : index
    %539 = vector.load %arg13[%c0_223, %c24_224, %c0_225] : memref<2x64x128xf32, #tpu.memory_space<vmem>>, vector<1x8x128xf32>
    %540 = vector.shape_cast %539 : vector<1x8x128xf32> to vector<8x128xf32>
    %cst_226 = arith.constant dense<0.000000e+00> : vector<8x128xf32>
    %541 = tpu.matmul %521, %415, %cst_226 {dimension_numbers = #tpu.dot_dimension_numbers<[1], [0], [0], [1], [0, 0, 1, 1], [], []>} : vector<8x32xf32>, vector<32x128xf32>, vector<8x128xf32> -> vector<8x128xf32>
    %542 = arith.addf %540, %541 : vector<8x128xf32>
    %c1_227 = arith.constant 1 : index
    %c32_228 = arith.constant 32 : index
    %c0_229 = arith.constant 0 : index
    %543 = vector.load %arg13[%c1_227, %c32_228, %c0_229] : memref<2x64x128xf32, #tpu.memory_space<vmem>>, vector<1x8x128xf32>
    %544 = vector.shape_cast %543 : vector<1x8x128xf32> to vector<8x128xf32>
    %cst_230 = arith.constant dense<0.000000e+00> : vector<8x128xf32>
    %545 = tpu.matmul %536, %417, %cst_230 {dimension_numbers = #tpu.dot_dimension_numbers<[1], [0], [0], [1], [0, 0, 1, 1], [], []>} : vector<8x32xf32>, vector<32x128xf32>, vector<8x128xf32> -> vector<8x128xf32>
    %546 = arith.addf %544, %545 : vector<8x128xf32>
    %547 = arith.negf %542 : vector<8x128xf32>
    %548 = math.exp %547 : vector<8x128xf32>
    %cst_231 = arith.constant 1.000000e+00 : f32
    %549 = vector.broadcast %cst_231 : f32 to vector<8x128xf32>
    %550 = arith.addf %549, %548 : vector<8x128xf32>
    %551 = arith.divf %549, %550 : vector<8x128xf32>
    %552 = math.tanh %542 : vector<8x128xf32>
    %553 = vector.extract_strided_slice %551 {offsets = [0, 0], sizes = [8, 32], strides = [1, 1]} : vector<8x128xf32> to vector<8x32xf32>
    %554 = vector.extract_strided_slice %551 {offsets = [0, 32], sizes = [8, 32], strides = [1, 1]} : vector<8x128xf32> to vector<8x32xf32>
    %555 = vector.extract_strided_slice %552 {offsets = [0, 64], sizes = [8, 32], strides = [1, 1]} : vector<8x128xf32> to vector<8x32xf32>
    %556 = vector.extract_strided_slice %551 {offsets = [0, 96], sizes = [8, 32], strides = [1, 1]} : vector<8x128xf32> to vector<8x32xf32>
    %557 = arith.mulf %554, %519 : vector<8x32xf32>
    %558 = arith.mulf %553, %555 : vector<8x32xf32>
    %559 = arith.addf %557, %558 : vector<8x32xf32>
    %560 = math.tanh %559 : vector<8x32xf32>
    %561 = arith.mulf %556, %560 : vector<8x32xf32>
    %562 = arith.negf %546 : vector<8x128xf32>
    %563 = math.exp %562 : vector<8x128xf32>
    %cst_232 = arith.constant 1.000000e+00 : f32
    %564 = vector.broadcast %cst_232 : f32 to vector<8x128xf32>
    %565 = arith.addf %564, %563 : vector<8x128xf32>
    %566 = arith.divf %564, %565 : vector<8x128xf32>
    %567 = math.tanh %546 : vector<8x128xf32>
    %568 = vector.extract_strided_slice %566 {offsets = [0, 0], sizes = [8, 32], strides = [1, 1]} : vector<8x128xf32> to vector<8x32xf32>
    %569 = vector.extract_strided_slice %566 {offsets = [0, 32], sizes = [8, 32], strides = [1, 1]} : vector<8x128xf32> to vector<8x32xf32>
    %570 = vector.extract_strided_slice %567 {offsets = [0, 64], sizes = [8, 32], strides = [1, 1]} : vector<8x128xf32> to vector<8x32xf32>
    %571 = vector.extract_strided_slice %566 {offsets = [0, 96], sizes = [8, 32], strides = [1, 1]} : vector<8x128xf32> to vector<8x32xf32>
    %572 = arith.mulf %569, %534 : vector<8x32xf32>
    %573 = arith.mulf %568, %570 : vector<8x32xf32>
    %574 = arith.addf %572, %573 : vector<8x32xf32>
    %575 = math.tanh %574 : vector<8x32xf32>
    %576 = arith.mulf %571, %575 : vector<8x32xf32>
    %577 = arith.maximumf %537, %561 : vector<8x32xf32>
    %578 = arith.maximumf %538, %576 : vector<8x32xf32>
    %c0_233 = arith.constant 0 : index
    %c32_234 = arith.constant 32 : index
    %c0_235 = arith.constant 0 : index
    %579 = vector.load %arg13[%c0_233, %c32_234, %c0_235] : memref<2x64x128xf32, #tpu.memory_space<vmem>>, vector<1x8x128xf32>
    %580 = vector.shape_cast %579 : vector<1x8x128xf32> to vector<8x128xf32>
    %cst_236 = arith.constant dense<0.000000e+00> : vector<8x128xf32>
    %581 = tpu.matmul %561, %415, %cst_236 {dimension_numbers = #tpu.dot_dimension_numbers<[1], [0], [0], [1], [0, 0, 1, 1], [], []>} : vector<8x32xf32>, vector<32x128xf32>, vector<8x128xf32> -> vector<8x128xf32>
    %582 = arith.addf %580, %581 : vector<8x128xf32>
    %c1_237 = arith.constant 1 : index
    %c24_238 = arith.constant 24 : index
    %c0_239 = arith.constant 0 : index
    %583 = vector.load %arg13[%c1_237, %c24_238, %c0_239] : memref<2x64x128xf32, #tpu.memory_space<vmem>>, vector<1x8x128xf32>
    %584 = vector.shape_cast %583 : vector<1x8x128xf32> to vector<8x128xf32>
    %cst_240 = arith.constant dense<0.000000e+00> : vector<8x128xf32>
    %585 = tpu.matmul %576, %417, %cst_240 {dimension_numbers = #tpu.dot_dimension_numbers<[1], [0], [0], [1], [0, 0, 1, 1], [], []>} : vector<8x32xf32>, vector<32x128xf32>, vector<8x128xf32> -> vector<8x128xf32>
    %586 = arith.addf %584, %585 : vector<8x128xf32>
    %587 = arith.negf %582 : vector<8x128xf32>
    %588 = math.exp %587 : vector<8x128xf32>
    %cst_241 = arith.constant 1.000000e+00 : f32
    %589 = vector.broadcast %cst_241 : f32 to vector<8x128xf32>
    %590 = arith.addf %589, %588 : vector<8x128xf32>
    %591 = arith.divf %589, %590 : vector<8x128xf32>
    %592 = math.tanh %582 : vector<8x128xf32>
    %593 = vector.extract_strided_slice %591 {offsets = [0, 0], sizes = [8, 32], strides = [1, 1]} : vector<8x128xf32> to vector<8x32xf32>
    %594 = vector.extract_strided_slice %591 {offsets = [0, 32], sizes = [8, 32], strides = [1, 1]} : vector<8x128xf32> to vector<8x32xf32>
    %595 = vector.extract_strided_slice %592 {offsets = [0, 64], sizes = [8, 32], strides = [1, 1]} : vector<8x128xf32> to vector<8x32xf32>
    %596 = vector.extract_strided_slice %591 {offsets = [0, 96], sizes = [8, 32], strides = [1, 1]} : vector<8x128xf32> to vector<8x32xf32>
    %597 = arith.mulf %594, %559 : vector<8x32xf32>
    %598 = arith.mulf %593, %595 : vector<8x32xf32>
    %599 = arith.addf %597, %598 : vector<8x32xf32>
    %600 = math.tanh %599 : vector<8x32xf32>
    %601 = arith.mulf %596, %600 : vector<8x32xf32>
    %602 = arith.negf %586 : vector<8x128xf32>
    %603 = math.exp %602 : vector<8x128xf32>
    %cst_242 = arith.constant 1.000000e+00 : f32
    %604 = vector.broadcast %cst_242 : f32 to vector<8x128xf32>
    %605 = arith.addf %604, %603 : vector<8x128xf32>
    %606 = arith.divf %604, %605 : vector<8x128xf32>
    %607 = math.tanh %586 : vector<8x128xf32>
    %608 = vector.extract_strided_slice %606 {offsets = [0, 0], sizes = [8, 32], strides = [1, 1]} : vector<8x128xf32> to vector<8x32xf32>
    %609 = vector.extract_strided_slice %606 {offsets = [0, 32], sizes = [8, 32], strides = [1, 1]} : vector<8x128xf32> to vector<8x32xf32>
    %610 = vector.extract_strided_slice %607 {offsets = [0, 64], sizes = [8, 32], strides = [1, 1]} : vector<8x128xf32> to vector<8x32xf32>
    %611 = vector.extract_strided_slice %606 {offsets = [0, 96], sizes = [8, 32], strides = [1, 1]} : vector<8x128xf32> to vector<8x32xf32>
    %612 = arith.mulf %609, %574 : vector<8x32xf32>
    %613 = arith.mulf %608, %610 : vector<8x32xf32>
    %614 = arith.addf %612, %613 : vector<8x32xf32>
    %615 = math.tanh %614 : vector<8x32xf32>
    %616 = arith.mulf %611, %615 : vector<8x32xf32>
    %617 = arith.maximumf %577, %601 : vector<8x32xf32>
    %618 = arith.maximumf %578, %616 : vector<8x32xf32>
    %c0_243 = arith.constant 0 : index
    %c40_244 = arith.constant 40 : index
    %c0_245 = arith.constant 0 : index
    %619 = vector.load %arg13[%c0_243, %c40_244, %c0_245] : memref<2x64x128xf32, #tpu.memory_space<vmem>>, vector<1x8x128xf32>
    %620 = vector.shape_cast %619 : vector<1x8x128xf32> to vector<8x128xf32>
    %cst_246 = arith.constant dense<0.000000e+00> : vector<8x128xf32>
    %621 = tpu.matmul %601, %415, %cst_246 {dimension_numbers = #tpu.dot_dimension_numbers<[1], [0], [0], [1], [0, 0, 1, 1], [], []>} : vector<8x32xf32>, vector<32x128xf32>, vector<8x128xf32> -> vector<8x128xf32>
    %622 = arith.addf %620, %621 : vector<8x128xf32>
    %c1_247 = arith.constant 1 : index
    %c16_248 = arith.constant 16 : index
    %c0_249 = arith.constant 0 : index
    %623 = vector.load %arg13[%c1_247, %c16_248, %c0_249] : memref<2x64x128xf32, #tpu.memory_space<vmem>>, vector<1x8x128xf32>
    %624 = vector.shape_cast %623 : vector<1x8x128xf32> to vector<8x128xf32>
    %cst_250 = arith.constant dense<0.000000e+00> : vector<8x128xf32>
    %625 = tpu.matmul %616, %417, %cst_250 {dimension_numbers = #tpu.dot_dimension_numbers<[1], [0], [0], [1], [0, 0, 1, 1], [], []>} : vector<8x32xf32>, vector<32x128xf32>, vector<8x128xf32> -> vector<8x128xf32>
    %626 = arith.addf %624, %625 : vector<8x128xf32>
    %627 = arith.negf %622 : vector<8x128xf32>
    %628 = math.exp %627 : vector<8x128xf32>
    %cst_251 = arith.constant 1.000000e+00 : f32
    %629 = vector.broadcast %cst_251 : f32 to vector<8x128xf32>
    %630 = arith.addf %629, %628 : vector<8x128xf32>
    %631 = arith.divf %629, %630 : vector<8x128xf32>
    %632 = math.tanh %622 : vector<8x128xf32>
    %633 = vector.extract_strided_slice %631 {offsets = [0, 0], sizes = [8, 32], strides = [1, 1]} : vector<8x128xf32> to vector<8x32xf32>
    %634 = vector.extract_strided_slice %631 {offsets = [0, 32], sizes = [8, 32], strides = [1, 1]} : vector<8x128xf32> to vector<8x32xf32>
    %635 = vector.extract_strided_slice %632 {offsets = [0, 64], sizes = [8, 32], strides = [1, 1]} : vector<8x128xf32> to vector<8x32xf32>
    %636 = vector.extract_strided_slice %631 {offsets = [0, 96], sizes = [8, 32], strides = [1, 1]} : vector<8x128xf32> to vector<8x32xf32>
    %637 = arith.mulf %634, %599 : vector<8x32xf32>
    %638 = arith.mulf %633, %635 : vector<8x32xf32>
    %639 = arith.addf %637, %638 : vector<8x32xf32>
    %640 = math.tanh %639 : vector<8x32xf32>
    %641 = arith.mulf %636, %640 : vector<8x32xf32>
    %642 = arith.negf %626 : vector<8x128xf32>
    %643 = math.exp %642 : vector<8x128xf32>
    %cst_252 = arith.constant 1.000000e+00 : f32
    %644 = vector.broadcast %cst_252 : f32 to vector<8x128xf32>
    %645 = arith.addf %644, %643 : vector<8x128xf32>
    %646 = arith.divf %644, %645 : vector<8x128xf32>
    %647 = math.tanh %626 : vector<8x128xf32>
    %648 = vector.extract_strided_slice %646 {offsets = [0, 0], sizes = [8, 32], strides = [1, 1]} : vector<8x128xf32> to vector<8x32xf32>
    %649 = vector.extract_strided_slice %646 {offsets = [0, 32], sizes = [8, 32], strides = [1, 1]} : vector<8x128xf32> to vector<8x32xf32>
    %650 = vector.extract_strided_slice %647 {offsets = [0, 64], sizes = [8, 32], strides = [1, 1]} : vector<8x128xf32> to vector<8x32xf32>
    %651 = vector.extract_strided_slice %646 {offsets = [0, 96], sizes = [8, 32], strides = [1, 1]} : vector<8x128xf32> to vector<8x32xf32>
    %652 = arith.mulf %649, %614 : vector<8x32xf32>
    %653 = arith.mulf %648, %650 : vector<8x32xf32>
    %654 = arith.addf %652, %653 : vector<8x32xf32>
    %655 = math.tanh %654 : vector<8x32xf32>
    %656 = arith.mulf %651, %655 : vector<8x32xf32>
    %657 = arith.maximumf %617, %641 : vector<8x32xf32>
    %658 = arith.maximumf %618, %656 : vector<8x32xf32>
    %c0_253 = arith.constant 0 : index
    %c48_254 = arith.constant 48 : index
    %c0_255 = arith.constant 0 : index
    %659 = vector.load %arg13[%c0_253, %c48_254, %c0_255] : memref<2x64x128xf32, #tpu.memory_space<vmem>>, vector<1x8x128xf32>
    %660 = vector.shape_cast %659 : vector<1x8x128xf32> to vector<8x128xf32>
    %cst_256 = arith.constant dense<0.000000e+00> : vector<8x128xf32>
    %661 = tpu.matmul %641, %415, %cst_256 {dimension_numbers = #tpu.dot_dimension_numbers<[1], [0], [0], [1], [0, 0, 1, 1], [], []>} : vector<8x32xf32>, vector<32x128xf32>, vector<8x128xf32> -> vector<8x128xf32>
    %662 = arith.addf %660, %661 : vector<8x128xf32>
    %c1_257 = arith.constant 1 : index
    %c8_258 = arith.constant 8 : index
    %c0_259 = arith.constant 0 : index
    %663 = vector.load %arg13[%c1_257, %c8_258, %c0_259] : memref<2x64x128xf32, #tpu.memory_space<vmem>>, vector<1x8x128xf32>
    %664 = vector.shape_cast %663 : vector<1x8x128xf32> to vector<8x128xf32>
    %cst_260 = arith.constant dense<0.000000e+00> : vector<8x128xf32>
    %665 = tpu.matmul %656, %417, %cst_260 {dimension_numbers = #tpu.dot_dimension_numbers<[1], [0], [0], [1], [0, 0, 1, 1], [], []>} : vector<8x32xf32>, vector<32x128xf32>, vector<8x128xf32> -> vector<8x128xf32>
    %666 = arith.addf %664, %665 : vector<8x128xf32>
    %667 = arith.negf %662 : vector<8x128xf32>
    %668 = math.exp %667 : vector<8x128xf32>
    %cst_261 = arith.constant 1.000000e+00 : f32
    %669 = vector.broadcast %cst_261 : f32 to vector<8x128xf32>
    %670 = arith.addf %669, %668 : vector<8x128xf32>
    %671 = arith.divf %669, %670 : vector<8x128xf32>
    %672 = math.tanh %662 : vector<8x128xf32>
    %673 = vector.extract_strided_slice %671 {offsets = [0, 0], sizes = [8, 32], strides = [1, 1]} : vector<8x128xf32> to vector<8x32xf32>
    %674 = vector.extract_strided_slice %671 {offsets = [0, 32], sizes = [8, 32], strides = [1, 1]} : vector<8x128xf32> to vector<8x32xf32>
    %675 = vector.extract_strided_slice %672 {offsets = [0, 64], sizes = [8, 32], strides = [1, 1]} : vector<8x128xf32> to vector<8x32xf32>
    %676 = vector.extract_strided_slice %671 {offsets = [0, 96], sizes = [8, 32], strides = [1, 1]} : vector<8x128xf32> to vector<8x32xf32>
    %677 = arith.mulf %674, %639 : vector<8x32xf32>
    %678 = arith.mulf %673, %675 : vector<8x32xf32>
    %679 = arith.addf %677, %678 : vector<8x32xf32>
    %680 = math.tanh %679 : vector<8x32xf32>
    %681 = arith.mulf %676, %680 : vector<8x32xf32>
    %682 = arith.negf %666 : vector<8x128xf32>
    %683 = math.exp %682 : vector<8x128xf32>
    %cst_262 = arith.constant 1.000000e+00 : f32
    %684 = vector.broadcast %cst_262 : f32 to vector<8x128xf32>
    %685 = arith.addf %684, %683 : vector<8x128xf32>
    %686 = arith.divf %684, %685 : vector<8x128xf32>
    %687 = math.tanh %666 : vector<8x128xf32>
    %688 = vector.extract_strided_slice %686 {offsets = [0, 0], sizes = [8, 32], strides = [1, 1]} : vector<8x128xf32> to vector<8x32xf32>
    %689 = vector.extract_strided_slice %686 {offsets = [0, 32], sizes = [8, 32], strides = [1, 1]} : vector<8x128xf32> to vector<8x32xf32>
    %690 = vector.extract_strided_slice %687 {offsets = [0, 64], sizes = [8, 32], strides = [1, 1]} : vector<8x128xf32> to vector<8x32xf32>
    %691 = vector.extract_strided_slice %686 {offsets = [0, 96], sizes = [8, 32], strides = [1, 1]} : vector<8x128xf32> to vector<8x32xf32>
    %692 = arith.mulf %689, %654 : vector<8x32xf32>
    %693 = arith.mulf %688, %690 : vector<8x32xf32>
    %694 = arith.addf %692, %693 : vector<8x32xf32>
    %695 = math.tanh %694 : vector<8x32xf32>
    %696 = arith.mulf %691, %695 : vector<8x32xf32>
    %697 = arith.maximumf %657, %681 : vector<8x32xf32>
    %698 = arith.maximumf %658, %696 : vector<8x32xf32>
    %c0_263 = arith.constant 0 : index
    %c56_264 = arith.constant 56 : index
    %c0_265 = arith.constant 0 : index
    %699 = vector.load %arg13[%c0_263, %c56_264, %c0_265] : memref<2x64x128xf32, #tpu.memory_space<vmem>>, vector<1x8x128xf32>
    %700 = vector.shape_cast %699 : vector<1x8x128xf32> to vector<8x128xf32>
    %cst_266 = arith.constant dense<0.000000e+00> : vector<8x128xf32>
    %701 = tpu.matmul %681, %415, %cst_266 {dimension_numbers = #tpu.dot_dimension_numbers<[1], [0], [0], [1], [0, 0, 1, 1], [], []>} : vector<8x32xf32>, vector<32x128xf32>, vector<8x128xf32> -> vector<8x128xf32>
    %702 = arith.addf %700, %701 : vector<8x128xf32>
    %c1_267 = arith.constant 1 : index
    %c0_268 = arith.constant 0 : index
    %c0_269 = arith.constant 0 : index
    %703 = vector.load %arg13[%c1_267, %c0_268, %c0_269] : memref<2x64x128xf32, #tpu.memory_space<vmem>>, vector<1x8x128xf32>
    %704 = vector.shape_cast %703 : vector<1x8x128xf32> to vector<8x128xf32>
    %cst_270 = arith.constant dense<0.000000e+00> : vector<8x128xf32>
    %705 = tpu.matmul %696, %417, %cst_270 {dimension_numbers = #tpu.dot_dimension_numbers<[1], [0], [0], [1], [0, 0, 1, 1], [], []>} : vector<8x32xf32>, vector<32x128xf32>, vector<8x128xf32> -> vector<8x128xf32>
    %706 = arith.addf %704, %705 : vector<8x128xf32>
    %707 = arith.negf %702 : vector<8x128xf32>
    %708 = math.exp %707 : vector<8x128xf32>
    %cst_271 = arith.constant 1.000000e+00 : f32
    %709 = vector.broadcast %cst_271 : f32 to vector<8x128xf32>
    %710 = arith.addf %709, %708 : vector<8x128xf32>
    %711 = arith.divf %709, %710 : vector<8x128xf32>
    %712 = math.tanh %702 : vector<8x128xf32>
    %713 = vector.extract_strided_slice %711 {offsets = [0, 0], sizes = [8, 32], strides = [1, 1]} : vector<8x128xf32> to vector<8x32xf32>
    %714 = vector.extract_strided_slice %711 {offsets = [0, 32], sizes = [8, 32], strides = [1, 1]} : vector<8x128xf32> to vector<8x32xf32>
    %715 = vector.extract_strided_slice %712 {offsets = [0, 64], sizes = [8, 32], strides = [1, 1]} : vector<8x128xf32> to vector<8x32xf32>
    %716 = vector.extract_strided_slice %711 {offsets = [0, 96], sizes = [8, 32], strides = [1, 1]} : vector<8x128xf32> to vector<8x32xf32>
    %717 = arith.mulf %714, %679 : vector<8x32xf32>
    %718 = arith.mulf %713, %715 : vector<8x32xf32>
    %719 = arith.addf %717, %718 : vector<8x32xf32>
    %720 = math.tanh %719 : vector<8x32xf32>
    %721 = arith.mulf %716, %720 : vector<8x32xf32>
    %722 = arith.negf %706 : vector<8x128xf32>
    %723 = math.exp %722 : vector<8x128xf32>
    %cst_272 = arith.constant 1.000000e+00 : f32
    %724 = vector.broadcast %cst_272 : f32 to vector<8x128xf32>
    %725 = arith.addf %724, %723 : vector<8x128xf32>
    %726 = arith.divf %724, %725 : vector<8x128xf32>
    %727 = math.tanh %706 : vector<8x128xf32>
    %728 = vector.extract_strided_slice %726 {offsets = [0, 0], sizes = [8, 32], strides = [1, 1]} : vector<8x128xf32> to vector<8x32xf32>
    %729 = vector.extract_strided_slice %726 {offsets = [0, 32], sizes = [8, 32], strides = [1, 1]} : vector<8x128xf32> to vector<8x32xf32>
    %730 = vector.extract_strided_slice %727 {offsets = [0, 64], sizes = [8, 32], strides = [1, 1]} : vector<8x128xf32> to vector<8x32xf32>
    %731 = vector.extract_strided_slice %726 {offsets = [0, 96], sizes = [8, 32], strides = [1, 1]} : vector<8x128xf32> to vector<8x32xf32>
    %732 = arith.mulf %729, %694 : vector<8x32xf32>
    %733 = arith.mulf %728, %730 : vector<8x32xf32>
    %734 = arith.addf %732, %733 : vector<8x32xf32>
    %735 = math.tanh %734 : vector<8x32xf32>
    %736 = arith.mulf %731, %735 : vector<8x32xf32>
    %737 = arith.maximumf %697, %721 : vector<8x32xf32>
    %738 = arith.maximumf %698, %736 : vector<8x32xf32>
    %c0_273 = arith.constant 0 : index
    %c0_274 = arith.constant 0 : index
    %c0_275 = arith.constant 0 : index
    %739 = vector.load %arg8[%c0_273, %c0_274, %c0_275] : memref<2x32x128xf32, #tpu.memory_space<vmem>>, vector<1x32x128xf32>
    %740 = vector.shape_cast %739 : vector<1x32x128xf32> to vector<32x128xf32>
    %cst_276 = arith.constant dense<0.000000e+00> : vector<8x128xf32>
    %741 = tpu.matmul %737, %740, %cst_276 {dimension_numbers = #tpu.dot_dimension_numbers<[1], [0], [0], [1], [0, 0, 1, 1], [], []>} : vector<8x32xf32>, vector<32x128xf32>, vector<8x128xf32> -> vector<8x128xf32>
    %c1_277 = arith.constant 1 : index
    %c0_278 = arith.constant 0 : index
    %c0_279 = arith.constant 0 : index
    %742 = vector.load %arg8[%c1_277, %c0_278, %c0_279] : memref<2x32x128xf32, #tpu.memory_space<vmem>>, vector<1x32x128xf32>
    %743 = vector.shape_cast %742 : vector<1x32x128xf32> to vector<32x128xf32>
    %cst_280 = arith.constant dense<0.000000e+00> : vector<8x128xf32>
    %744 = tpu.matmul %738, %743, %cst_280 {dimension_numbers = #tpu.dot_dimension_numbers<[1], [0], [0], [1], [0, 0, 1, 1], [], []>} : vector<8x32xf32>, vector<32x128xf32>, vector<8x128xf32> -> vector<8x128xf32>
    %745 = arith.addf %741, %744 : vector<8x128xf32>
    %c0_281 = arith.constant 0 : index
    %c0_282 = arith.constant 0 : index
    %746 = vector.load %arg9[%c0_281, %c0_282] : memref<1x128xf32, #tpu.memory_space<vmem>>, vector<1x128xf32>
    %747 = vector.broadcast %746 : vector<1x128xf32> to vector<8x128xf32>
    %748 = arith.addf %745, %747 : vector<8x128xf32>
    %c0_283 = arith.constant 0 : index
    %c0_284 = arith.constant 0 : index
    %749 = vector.load %arg10[%c0_283, %c0_284] : memref<8x128xf32, #tpu.memory_space<vmem>>, vector<8x128xf32>
    tpu.vector_store %arg10[%c0_283, %c0_284], %748 {strides = array<i32>} : memref<8x128xf32, #tpu.memory_space<vmem>>, vector<8x128xf32>,
    return
  }
  func.func @transform_0(%arg0: i32) -> (i32, i32, i32) {
    %c0_i32 = arith.constant 0 : i32
    %c0_i32_0 = arith.constant 0 : i32
    %c0_i32_1 = arith.constant 0 : i32
    return %c0_i32, %arg0, %c0_i32_0 : i32, i32, i32
  }
  func.func @transform_1(%arg0: i32) -> (i32, i32, i32) {
    %c0_i32 = arith.constant 0 : i32
    %c0_i32_0 = arith.constant 0 : i32
    %c0_i32_1 = arith.constant 0 : i32
    %c0_i32_2 = arith.constant 0 : i32
    return %c0_i32, %c0_i32_0, %c0_i32_1 : i32, i32, i32
  }
  func.func @transform_2(%arg0: i32) -> (i32, i32, i32) {
    %c0_i32 = arith.constant 0 : i32
    %c0_i32_0 = arith.constant 0 : i32
    %c0_i32_1 = arith.constant 0 : i32
    %c0_i32_2 = arith.constant 0 : i32
    return %c0_i32, %c0_i32_0, %c0_i32_1 : i32, i32, i32
  }
  func.func @transform_3(%arg0: i32) -> (i32, i32, i32) {
    %c0_i32 = arith.constant 0 : i32
    %c0_i32_0 = arith.constant 0 : i32
    %c0_i32_1 = arith.constant 0 : i32
    %c0_i32_2 = arith.constant 0 : i32
    return %c0_i32, %c0_i32_0, %c0_i32_1 : i32, i32, i32
  }
  func.func @transform_4(%arg0: i32) -> (i32, i32, i32, i32) {
    %c0_i32 = arith.constant 0 : i32
    %c0_i32_0 = arith.constant 0 : i32
    %c0_i32_1 = arith.constant 0 : i32
    %c0_i32_2 = arith.constant 0 : i32
    %c0_i32_3 = arith.constant 0 : i32
    return %c0_i32, %c0_i32_0, %c0_i32_1, %c0_i32_2 : i32, i32, i32, i32
  }
  func.func @transform_5(%arg0: i32) -> (i32, i32, i32) {
    %c0_i32 = arith.constant 0 : i32
    %c0_i32_0 = arith.constant 0 : i32
    %c0_i32_1 = arith.constant 0 : i32
    %c0_i32_2 = arith.constant 0 : i32
    return %c0_i32, %c0_i32_0, %c0_i32_1 : i32, i32, i32
  }
  func.func @transform_6(%arg0: i32) -> (i32, i32, i32) {
    %c0_i32 = arith.constant 0 : i32
    %c0_i32_0 = arith.constant 0 : i32
    %c0_i32_1 = arith.constant 0 : i32
    %c0_i32_2 = arith.constant 0 : i32
    return %c0_i32, %c0_i32_0, %c0_i32_1 : i32, i32, i32
  }
  func.func @transform_7(%arg0: i32) -> (i32, i32, i32) {
    %c0_i32 = arith.constant 0 : i32
    %c0_i32_0 = arith.constant 0 : i32
    %c0_i32_1 = arith.constant 0 : i32
    %c0_i32_2 = arith.constant 0 : i32
    return %c0_i32, %c0_i32_0, %c0_i32_1 : i32, i32, i32
  }
  func.func @transform_8(%arg0: i32) -> (i32, i32) {
    %c0_i32 = arith.constant 0 : i32
    %c0_i32_0 = arith.constant 0 : i32
    %c0_i32_1 = arith.constant 0 : i32
    return %c0_i32, %c0_i32_0 : i32, i32
  }
  func.func @transform_9(%arg0: i32) -> (i32, i32) {
    %c0_i32 = arith.constant 0 : i32
    %c0_i32_0 = arith.constant 0 : i32
    return %arg0, %c0_i32 : i32, i32
  }
}

</mosaic_0001>

<llo_original>
// kernel: _lambda_.1
$region0: #{_lambda_.1}
  #allocation0 [shape = 'u32[]', space=smem, size = 0x4, offset = 0x4, fixed_abs, tag = 'smem constant byte address 0x4 - core index']
  #allocation1 [shape = 'u32[72,128]{1,0:T(1,128)}', space=vmem, size = 0x9000, scoped, tag = 'internal scratch']
  #allocation2 [shape = 'f32[2,64,128]{2,1,0:T(8,128)}', space=vmem, size = 0x10000, scoped, tag = 'scratch operand']
  #allocation3 [shape = 'f32[2,64,32]{2,1,0:T(8,128)}', space=vmem, size = 0x10000, scoped, tag = 'scratch operand']
  #allocation4 [shape = 'f32[2,64,128]{2,1,0:T(8,128)}', space=vmem, size = 0x10000, scoped, tag = 'scratch operand']
  %s0 = inlined_call_operand.vmem [shape: f32[8,8,32], index: 0, kind: input, shape index: {}]
  %s1 = inlined_call_operand.vmem [shape: bf16[2,32,128], index: 1, kind: input, shape index: {}]
  %s2 = inlined_call_operand.vmem [shape: f32[2,1,128], index: 2, kind: input, shape index: {}]
  %s3 = inlined_call_operand.vmem [shape: f32[2,32,128], index: 3, kind: input, shape index: {}]
  %s4 = inlined_call_operand.vmem [shape: bf16[2,2,32,128], index: 4, kind: input, shape index: {}]
  %s5 = inlined_call_operand.vmem [shape: f32[2,1,128], index: 5, kind: input, shape index: {}]
  %s6 = inlined_call_operand.vmem [shape: f32[2,32,128], index: 6, kind: input, shape index: {}]
  %s7 = inlined_call_operand.vmem [shape: f32[2,32,128], index: 7, kind: input, shape index: {}]
  %s8 = inlined_call_operand.vmem [shape: f32[1,128], index: 8, kind: input, shape index: {}]
  %s9 = inlined_call_operand.vmem [shape: f32[8,128], index: 9, kind: output, shape index: {}]
  %s10 = sld [smem:[#allocation0]]
  $region46: #{_lambda_.1} parent=0
    _
  %s12 = ssub.s32 1, %s10
  %s13 = scalar_select 0, %s12, %s10
  // Predicated region
  $region2: #{_lambda_.1} parent=0 // pred_check
    _
  $region3: #{_lambda_.1} parent=0 // pred_check_branch
    %15 = sbr.rel (0) target = $region5
  $region4: #{_lambda_.1} parent=0 // pred_region
    _
  $region5: #{_lambda_.1} parent=0 // pred_fallthru
    _
  // Predicated region
  $region6: #{_lambda_.1} parent=0 // pred_check
    _
  $region7: #{_lambda_.1} parent=0 // pred_check_branch
    %17 = sbr.rel (0) target = $region9
  $region8: #{_lambda_.1} parent=0 // pred_region
    _
  $region9: #{_lambda_.1} parent=0 // pred_fallthru
    _
  // Predicated region
  $region10: #{_lambda_.1} parent=0 // pred_check
    _
  $region11: #{_lambda_.1} parent=0 // pred_check_branch
    %19 = sbr.rel (0) target = $region13
  $region12: #{_lambda_.1} parent=0 // pred_region
    _
  $region13: #{_lambda_.1} parent=0 // pred_fallthru
    _
  // Predicated region
  $region14: #{_lambda_.1} parent=0 // pred_check
    _
  $region15: #{_lambda_.1} parent=0 // pred_check_branch
    %21 = sbr.rel (0) target = $region17
  $region16: #{_lambda_.1} parent=0 // pred_region
    _
  $region17: #{_lambda_.1} parent=0 // pred_fallthru
    _
  // Predicated region
  $region18: #{_lambda_.1} parent=0 // pred_check
    _
  $region19: #{_lambda_.1} parent=0 // pred_check_branch
    %23 = sbr.rel (0) target = $region21
  $region20: #{_lambda_.1} parent=0 // pred_region
    _
  $region21: #{_lambda_.1} parent=0 // pred_fallthru
    _
  // Predicated region
  $region22: #{_lambda_.1} parent=0 // pred_check
    _
  $region23: #{_lambda_.1} parent=0 // pred_check_branch
    %25 = sbr.rel (0) target = $region25
  $region24: #{_lambda_.1} parent=0 // pred_region
    _
  $region25: #{_lambda_.1} parent=0 // pred_fallthru
    _
  // Predicated region
  $region26: #{_lambda_.1} parent=0 // pred_check
    _
  $region27: #{_lambda_.1} parent=0 // pred_check_branch
    %27 = sbr.rel (0) target = $region29
  $region28: #{_lambda_.1} parent=0 // pred_region
    _
  $region29: #{_lambda_.1} parent=0 // pred_fallthru
    _
  // Predicated region
  $region30: #{_lambda_.1} parent=0 // pred_check
    _
  $region31: #{_lambda_.1} parent=0 // pred_check_branch
    %29 = sbr.rel (0) target = $region33
  $region32: #{_lambda_.1} parent=0 // pred_region
    _
  $region33: #{_lambda_.1} parent=0 // pred_fallthru
    _
  // Predicated region
  $region34: #{_lambda_.1} parent=0 // pred_check
    _
  $region35: #{_lambda_.1} parent=0 // pred_check_branch
    %31 = sbr.rel (0) target = $region37
  $region36: #{_lambda_.1} parent=0 // pred_region
    _
  $region37: #{_lambda_.1} parent=0 // pred_fallthru
    _
  %v33 = vld [vmem:[%s0] sm:$0xff]
  %v34 = vld [vmem:[%s0 + $0x8] sm:$0xff]
  %v35 = vld [vmem:[%s0 + $0x10] sm:$0xff]
  %v36 = vld [vmem:[%s0 + $0x18] sm:$0xff]
  %v37 = vld [vmem:[%s0 + $0x20] sm:$0xff]
  %v38 = vld [vmem:[%s0 + $0x28] sm:$0xff]
  %v39 = vld [vmem:[%s0 + $0x30] sm:$0xff]
  %v40 = vld [vmem:[%s0 + $0x38] sm:$0xff]
  %v41 = vpack.c.bf16 %v34, %v33
  %v42 = vpack.c.bf16 %v36, %v35
  %v43 = vpack.c.bf16 %v38, %v37
  %v44 = vpack.c.bf16 %v40, %v39
  %v45 = vld [vmem:[%s1] sm:$0xf]
  %v46 = vld [vmem:[%s1 + $0x4] sm:$0xf]
  %v47 = vld [vmem:[%s1 + $0x8] sm:$0xf]
  %v48 = vld [vmem:[%s1 + $0xc] sm:$0xf]
  %v49 = vld [vmem:[%s2] sm:$0x1]
  %v51 = vperm.slane %v49, 0
  %v57 = vunpack.c.l.b16 %v45
  %v58 = vunpack.c.l.b16 %v46
  %v59 = vunpack.c.l.b16 %v47
  %v60 = vunpack.c.l.b16 %v48
  %v61 = vpack.c.b16 %v58, %v57
  %v62 = vpack.c.b16 %v60, %v59
  %vm65 = vcmask 261120
  %v67 = vsel %vm65, %v41, 0
  %v70 = vsel %vm65, %v42, 0
  %v73 = vsel %vm65, %v43, 0
  %v76 = vsel %vm65, %v44, 0
  %78 = vmatpush.bf16.msra.mxu0 0
  %79 = vmatpush.bf16.msra.mxu0 0
  %80 = vmatpush.bf16.msra.mxu0 0
  %81 = vmatpush.bf16.msra.mxu0 0
  %82 = vmatpush.bf16.msra.mxu0 0
  %83 = vmatpush.bf16.msra.mxu0 0
  %84 = vmatpush.bf16.msra.mxu0 %v62
  %85 = vmatpush.bf16.msra.mxu0 %v61
  %86 = vmatmul.bf16.gmra.mxu0 %v67
  %v87 = vpop.f32.mrf.mxu0
  %v88 = vadd.f32 %v51, %v87
  %v89 = vpop.f32.mrf.mxu0
  %v90 = vadd.f32 %v51, %v89
  %91 = vmatmul.bf16.gmra.mxu0 %v70
  %v92 = vpop.f32.mrf.mxu0
  %v93 = vadd.f32 %v51, %v92
  %v94 = vpop.f32.mrf.mxu0
  %v95 = vadd.f32 %v51, %v94
  %96 = vmatmul.bf16.gmra.mxu0 %v73
  %v97 = vpop.f32.mrf.mxu0
  %v98 = vadd.f32 %v51, %v97
  %v99 = vpop.f32.mrf.mxu0
  %v100 = vadd.f32 %v51, %v99
  %101 = vmatmul.bf16.gmra.mxu0 %v76
  %v102 = vpop.f32.mrf.mxu0
  %v103 = vadd.f32 %v51, %v102
  %v104 = vpop.f32.mrf.mxu0
  %v105 = vadd.f32 %v51, %v104
  %106 = vdwg.mxu0
  %107 = vst [vmem:[#allocation2] sm:$0xff] %v88
  %108 = vst [vmem:[#allocation2 + $0x8] sm:$0xff] %v90
  %109 = vst [vmem:[#allocation2 + $0x10] sm:$0xff] %v93
  %110 = vst [vmem:[#allocation2 + $0x18] sm:$0xff] %v95
  %111 = vst [vmem:[#allocation2 + $0x20] sm:$0xff] %v98
  %112 = vst [vmem:[#allocation2 + $0x28] sm:$0xff] %v100
  %113 = vst [vmem:[#allocation2 + $0x30] sm:$0xff] %v103
  %114 = vst [vmem:[#allocation2 + $0x38] sm:$0xff] %v105
  %s115 = scalar_lea.vmem %s1, 16
  %v116 = vld [vmem:[%s115] sm:$0xf]
  %v117 = vld [vmem:[%s115 + $0x4] sm:$0xf]
  %v118 = vld [vmem:[%s115 + $0x8] sm:$0xf]
  %v119 = vld [vmem:[%s115 + $0xc] sm:$0xf]
  %s120 = scalar_lea.vmem %s2, 1
  %v121 = vld [vmem:[%s120] sm:$0x1]
  %v123 = vperm.slane %v121, 0
  %v129 = vunpack.c.l.b16 %v116
  %v130 = vunpack.c.l.b16 %v117
  %v131 = vunpack.c.l.b16 %v118
  %v132 = vunpack.c.l.b16 %v119
  %v133 = vpack.c.b16 %v130, %v129
  %v134 = vpack.c.b16 %v132, %v131
  %137 = vmatpush.bf16.msra.mxu0 0
  %138 = vmatpush.bf16.msra.mxu0 0
  %139 = vmatpush.bf16.msra.mxu0 0
  %140 = vmatpush.bf16.msra.mxu0 0
  %141 = vmatpush.bf16.msra.mxu0 0
  %142 = vmatpush.bf16.msra.mxu0 0
  %143 = vmatpush.bf16.msra.mxu0 %v134
  %144 = vmatpush.bf16.msra.mxu0 %v133
  %145 = vmatmul.bf16.gmra.mxu0 %v67
  %v146 = vpop.f32.mrf.mxu0
  %v147 = vadd.f32 %v123, %v146
  %v148 = vpop.f32.mrf.mxu0
  %v149 = vadd.f32 %v123, %v148
  %150 = vmatmul.bf16.gmra.mxu0 %v70
  %v151 = vpop.f32.mrf.mxu0
  %v152 = vadd.f32 %v123, %v151
  %v153 = vpop.f32.mrf.mxu0
  %v154 = vadd.f32 %v123, %v153
  %155 = vmatmul.bf16.gmra.mxu0 %v73
  %v156 = vpop.f32.mrf.mxu0
  %v157 = vadd.f32 %v123, %v156
  %v158 = vpop.f32.mrf.mxu0
  %v159 = vadd.f32 %v123, %v158
  %160 = vmatmul.bf16.gmra.mxu0 %v76
  %v161 = vpop.f32.mrf.mxu0
  %v162 = vadd.f32 %v123, %v161
  %v163 = vpop.f32.mrf.mxu0
  %v164 = vadd.f32 %v123, %v163
  %165 = vdwg.mxu0
  %s166 = scalar_lea.vmem [#allocation2], 64
  %167 = vst [vmem:[%s166] sm:$0xff] %v147
  %168 = vst [vmem:[%s166 + $0x8] sm:$0xff] %v149
  %169 = vst [vmem:[%s166 + $0x10] sm:$0xff] %v152
  %170 = vst [vmem:[%s166 + $0x18] sm:$0xff] %v154
  %171 = vst [vmem:[%s166 + $0x20] sm:$0xff] %v157
  %172 = vst [vmem:[%s166 + $0x28] sm:$0xff] %v159
  %173 = vst [vmem:[%s166 + $0x30] sm:$0xff] %v162
  %174 = vst [vmem:[%s166 + $0x38] sm:$0xff] %v164
  %v175 = vld [vmem:[%s3] sm:$0xff]
  %v176 = vld [vmem:[%s3 + $0x8] sm:$0xff]
  %v177 = vld [vmem:[%s3 + $0x10] sm:$0xff]
  %v178 = vld [vmem:[%s3 + $0x18] sm:$0xff]
  %s179 = scalar_lea.vmem %s3, 32
  %v180 = vld [vmem:[%s179] sm:$0xff]
  %v181 = vld [vmem:[%s179 + $0x8] sm:$0xff]
  %v182 = vld [vmem:[%s179 + $0x10] sm:$0xff]
  %v183 = vld [vmem:[%s179 + $0x18] sm:$0xff]
  %v184 = vld [vmem:[#allocation2] sm:$0xff]
  %v186 = vsel %vm65, 0.0, 0
  %188 = vmatpush.msra.mxu0 0.0
  %189 = vmatpush.msra.mxu0 0.0
  %190 = vmatpush.msra.mxu0 0.0
  %191 = vmatpush.msra.mxu0 0.0
  %192 = vmatpush.msra.mxu0 0.0
  %193 = vmatpush.msra.mxu0 0.0
  %194 = vmatpush.msra.mxu0 0.0
  %195 = vmatpush.msra.mxu0 0.0
  %196 = vmatpush.msra.mxu0 0.0
  %197 = vmatpush.msra.mxu0 0.0
  %198 = vmatpush.msra.mxu0 0.0
  %199 = vmatpush.msra.mxu0 0.0
  %200 = vmatpush.msra.mxu0 %v178
  %201 = vmatpush.msra.mxu0 %v177
  %202 = vmatpush.msra.mxu0 %v176
  %203 = vmatpush.msra.mxu0 %v175
  %204 = vmatmul.f32.gmra.mxu0 %v186
  %v205 = vpop.f32.mrf.mxu0
  %v206 = vadd.f32 0.0, %v205
  %207 = vdwg.mxu0
  %v208 = vadd.f32 %v184, %v206
  %v209 = vld [vmem:[%s166 + $0x38] sm:$0xff]
  %210 = vmatpush.msra.mxu0 0.0
  %211 = vmatpush.msra.mxu0 0.0
  %212 = vmatpush.msra.mxu0 0.0
  %213 = vmatpush.msra.mxu0 0.0
  %214 = vmatpush.msra.mxu0 0.0
  %215 = vmatpush.msra.mxu0 0.0
  %216 = vmatpush.msra.mxu0 0.0
  %217 = vmatpush.msra.mxu0 0.0
  %218 = vmatpush.msra.mxu0 0.0
  %219 = vmatpush.msra.mxu0 0.0
  %220 = vmatpush.msra.mxu0 0.0
  %221 = vmatpush.msra.mxu0 0.0
  %222 = vmatpush.msra.mxu0 %v183
  %223 = vmatpush.msra.mxu0 %v182
  %224 = vmatpush.msra.mxu0 %v181
  %225 = vmatpush.msra.mxu0 %v180
  %226 = vmatmul.f32.gmra.mxu0 %v186
  %v227 = vpop.f32.mrf.mxu0
  %v228 = vadd.f32 0.0, %v227
  %229 = vdwg.mxu0
  %v230 = vadd.f32 %v209, %v228
  %v231 = vxor.u32 %v208, 2147483648
  %v232 = vmul.f32 %v231, 1.442695
  %v233 = vpow.pop %v232
  %v234 = vadd.f32 %v233, 1.0
  %v235 = vrcp.pop %v234
  %v236 = vmul.f32 %v234, %v235
  %v237 = vsub.f32 1.0, %v236
  %v238 = vmul.f32 %v235, %v237
  %v239 = vadd.f32 %v235, %v238
  %vm240 = vweird.f32 %v234
  %vm241 = vweird.f32 %v235
  %vm242 = vmor %vm240, %vm241
  %v243 = vsel %vm242, %v235, %v239
  %v244 = vand.u32 2147483647, %v234
  %vm245 = vcmp.eq.f32.partialorder %v244, 8.507059e+37
  %v246 = vand.u32 %v234, 2147483648
  %v247 = vor.u32 1.1754944e-38, %v246
  %v248 = vsel %vm245, %v247, %v243
  %v249 = vmul.f32 1.0, %v248
  %v250 = vtanh.pop %v208
  %v251 = vmul.f32 %v249, 0.0
  %253 = vrot.lane.b32.xlu0 %v250, 64
  %v254 = vpop.permute.xlu0 %253
  %v256 = vmul.f32 %v249, %v254
  %258 = vrot.lane.b32.xlu0 %v256, 32
  %v259 = vpop.permute.xlu0 %258
  %v261 = vadd.f32 %v251, %v259
  %v262 = vtanh.pop %v261
  %264 = vrot.lane.b32.xlu0 %v262, 64
  %v265 = vpop.permute.xlu0 %264
  %v267 = vmul.f32 %v249, %v265
  %v268 = vxor.u32 %v230, 2147483648
  %v269 = vmul.f32 %v268, 1.442695
  %v270 = vpow.pop %v269
  %v271 = vadd.f32 %v270, 1.0
  %v272 = vrcp.pop %v271
  %v273 = vmul.f32 %v271, %v272
  %v274 = vsub.f32 1.0, %v273
  %v275 = vmul.f32 %v272, %v274
  %v276 = vadd.f32 %v272, %v275
  %vm277 = vweird.f32 %v271
  %vm278 = vweird.f32 %v272
  %vm279 = vmor %vm277, %vm278
  %v280 = vsel %vm279, %v272, %v276
  %v281 = vand.u32 2147483647, %v271
  %vm282 = vcmp.eq.f32.partialorder %v281, 8.507059e+37
  %v283 = vand.u32 %v271, 2147483648
  %v284 = vor.u32 1.1754944e-38, %v283
  %v285 = vsel %vm282, %v284, %v280
  %v286 = vmul.f32 1.0, %v285
  %v287 = vtanh.pop %v230
  %v288 = vmul.f32 %v286, 0.0
  %290 = vrot.lane.b32.xlu0 %v287, 64
  %v291 = vpop.permute.xlu0 %290
  %v293 = vmul.f32 %v286, %v291
  %295 = vrot.lane.b32.xlu0 %v293, 32
  %v296 = vpop.permute.xlu0 %295
  %v298 = vadd.f32 %v288, %v296
  %v299 = vtanh.pop %v298
  %301 = vrot.lane.b32.xlu0 %v299, 64
  %v302 = vpop.permute.xlu0 %301
  %v304 = vmul.f32 %v286, %v302
  %306 = vrot.lane.b32.xlu0 %v267, 32
  %v307 = vpop.permute.xlu0 %306
  %309 = vst.msk [vmem:[#allocation3] sm:$0xff] %vm65, %v307
  %311 = vrot.lane.b32.xlu0 %v304, 32
  %v312 = vpop.permute.xlu0 %311
  %s314 = scalar_lea.vmem [#allocation3], 64
  %315 = vst.msk [vmem:[%s314 + $0x38] sm:$0xff] %vm65, %v312
  %v316 = vld [vmem:[#allocation2 + $0x8] sm:$0xff]
  %v317 = vsel %vm65, %v307, 0
  %319 = vmatpush.msra.mxu0 0.0
  %320 = vmatpush.msra.mxu0 0.0
  %321 = vmatpush.msra.mxu0 0.0
  %322 = vmatpush.msra.mxu0 0.0
  %323 = vmatpush.msra.mxu0 0.0
  %324 = vmatpush.msra.mxu0 0.0
  %325 = vmatpush.msra.mxu0 0.0
  %326 = vmatpush.msra.mxu0 0.0
  %327 = vmatpush.msra.mxu0 0.0
  %328 = vmatpush.msra.mxu0 0.0
  %329 = vmatpush.msra.mxu0 0.0
  %330 = vmatpush.msra.mxu0 0.0
  %331 = vmatpush.msra.mxu0 %v178
  %332 = vmatpush.msra.mxu0 %v177
  %333 = vmatpush.msra.mxu0 %v176
  %334 = vmatpush.msra.mxu0 %v175
  %335 = vmatmul.f32.gmra.mxu0 %v317
  %v336 = vpop.f32.mrf.mxu0
  %v337 = vadd.f32 0.0, %v336
  %338 = vdwg.mxu0
  %v339 = vadd.f32 %v316, %v337
  %v340 = vld [vmem:[%s166 + $0x30] sm:$0xff]
  %v341 = vsel %vm65, %v312, 0
  %343 = vmatpush.msra.mxu0 0.0
  %344 = vmatpush.msra.mxu0 0.0
  %345 = vmatpush.msra.mxu0 0.0
  %346 = vmatpush.msra.mxu0 0.0
  %347 = vmatpush.msra.mxu0 0.0
  %348 = vmatpush.msra.mxu0 0.0
  %349 = vmatpush.msra.mxu0 0.0
  %350 = vmatpush.msra.mxu0 0.0
  %351 = vmatpush.msra.mxu0 0.0
  %352 = vmatpush.msra.mxu0 0.0
  %353 = vmatpush.msra.mxu0 0.0
  %354 = vmatpush.msra.mxu0 0.0
  %355 = vmatpush.msra.mxu0 %v183
  %356 = vmatpush.msra.mxu0 %v182
  %357 = vmatpush.msra.mxu0 %v181
  %358 = vmatpush.msra.mxu0 %v180
  %359 = vmatmul.f32.gmra.mxu0 %v341
  %v360 = vpop.f32.mrf.mxu0
  %v361 = vadd.f32 0.0, %v360
  %362 = vdwg.mxu0
  %v363 = vadd.f32 %v340, %v361
  %v364 = vxor.u32 %v339, 2147483648
  %v365 = vmul.f32 %v364, 1.442695
  %v366 = vpow.pop %v365
  %v367 = vadd.f32 %v366, 1.0
  %v368 = vrcp.pop %v367
  %v369 = vmul.f32 %v367, %v368
  %v370 = vsub.f32 1.0, %v369
  %v371 = vmul.f32 %v368, %v370
  %v372 = vadd.f32 %v368, %v371
  %vm373 = vweird.f32 %v367
  %vm374 = vweird.f32 %v368
  %vm375 = vmor %vm373, %vm374
  %v376 = vsel %vm375, %v368, %v372
  %v377 = vand.u32 2147483647, %v367
  %vm378 = vcmp.eq.f32.partialorder %v377, 8.507059e+37
  %v379 = vand.u32 %v367, 2147483648
  %v380 = vor.u32 1.1754944e-38, %v379
  %v381 = vsel %vm378, %v380, %v376
  %v382 = vmul.f32 1.0, %v381
  %v383 = vtanh.pop %v339
  %v384 = vmul.f32 %v382, %v261
  %386 = vrot.lane.b32.xlu0 %v383, 64
  %v387 = vpop.permute.xlu0 %386
  %v389 = vmul.f32 %v382, %v387
  %391 = vrot.lane.b32.xlu0 %v389, 32
  %v392 = vpop.permute.xlu0 %391
  %v394 = vadd.f32 %v384, %v392
  %v395 = vtanh.pop %v394
  %397 = vrot.lane.b32.xlu0 %v395, 64
  %v398 = vpop.permute.xlu0 %397
  %v400 = vmul.f32 %v382, %v398
  %v401 = vxor.u32 %v363, 2147483648
  %v402 = vmul.f32 %v401, 1.442695
  %v403 = vpow.pop %v402
  %v404 = vadd.f32 %v403, 1.0
  %v405 = vrcp.pop %v404
  %v406 = vmul.f32 %v404, %v405
  %v407 = vsub.f32 1.0, %v406
  %v408 = vmul.f32 %v405, %v407
  %v409 = vadd.f32 %v405, %v408
  %vm410 = vweird.f32 %v404
  %vm411 = vweird.f32 %v405
  %vm412 = vmor %vm410, %vm411
  %v413 = vsel %vm412, %v405, %v409
  %v414 = vand.u32 2147483647, %v404
  %vm415 = vcmp.eq.f32.partialorder %v414, 8.507059e+37
  %v416 = vand.u32 %v404, 2147483648
  %v417 = vor.u32 1.1754944e-38, %v416
  %v418 = vsel %vm415, %v417, %v413
  %v419 = vmul.f32 1.0, %v418
  %v420 = vtanh.pop %v363
  %v421 = vmul.f32 %v419, %v298
  %423 = vrot.lane.b32.xlu0 %v420, 64
  %v424 = vpop.permute.xlu0 %423
  %v426 = vmul.f32 %v419, %v424
  %428 = vrot.lane.b32.xlu0 %v426, 32
  %v429 = vpop.permute.xlu0 %428
  %v431 = vadd.f32 %v421, %v429
  %v432 = vtanh.pop %v431
  %434 = vrot.lane.b32.xlu0 %v432, 64
  %v435 = vpop.permute.xlu0 %434
  %v437 = vmul.f32 %v419, %v435
  %439 = vrot.lane.b32.xlu0 %v400, 32
  %v440 = vpop.permute.xlu0 %439
  %442 = vst.msk [vmem:[#allocation3 + $0x8] sm:$0xff] %vm65, %v440
  %444 = vrot.lane.b32.xlu0 %v437, 32
  %v445 = vpop.permute.xlu0 %444
  %447 = vst.msk [vmem:[%s314 + $0x30] sm:$0xff] %vm65, %v445
  %v448 = vld [vmem:[#allocation2 + $0x10] sm:$0xff]
  %v449 = vsel %vm65, %v440, 0
  %451 = vmatpush.msra.mxu0 0.0
  %452 = vmatpush.msra.mxu0 0.0
  %453 = vmatpush.msra.mxu0 0.0
  %454 = vmatpush.msra.mxu0 0.0
  %455 = vmatpush.msra.mxu0 0.0
  %456 = vmatpush.msra.mxu0 0.0
  %457 = vmatpush.msra.mxu0 0.0
  %458 = vmatpush.msra.mxu0 0.0
  %459 = vmatpush.msra.mxu0 0.0
  %460 = vmatpush.msra.mxu0 0.0
  %461 = vmatpush.msra.mxu0 0.0
  %462 = vmatpush.msra.mxu0 0.0
  %463 = vmatpush.msra.mxu0 %v178
  %464 = vmatpush.msra.mxu0 %v177
  %465 = vmatpush.msra.mxu0 %v176
  %466 = vmatpush.msra.mxu0 %v175
  %467 = vmatmul.f32.gmra.mxu0 %v449
  %v468 = vpop.f32.mrf.mxu0
  %v469 = vadd.f32 0.0, %v468
  %470 = vdwg.mxu0
  %v471 = vadd.f32 %v448, %v469
  %v472 = vld [vmem:[%s166 + $0x28] sm:$0xff]
  %v473 = vsel %vm65, %v445, 0
  %475 = vmatpush.msra.mxu0 0.0
  %476 = vmatpush.msra.mxu0 0.0
  %477 = vmatpush.msra.mxu0 0.0
  %478 = vmatpush.msra.mxu0 0.0
  %479 = vmatpush.msra.mxu0 0.0
  %480 = vmatpush.msra.mxu0 0.0
  %481 = vmatpush.msra.mxu0 0.0
  %482 = vmatpush.msra.mxu0 0.0
  %483 = vmatpush.msra.mxu0 0.0
  %484 = vmatpush.msra.mxu0 0.0
  %485 = vmatpush.msra.mxu0 0.0
  %486 = vmatpush.msra.mxu0 0.0
  %487 = vmatpush.msra.mxu0 %v183
  %488 = vmatpush.msra.mxu0 %v182
  %489 = vmatpush.msra.mxu0 %v181
  %490 = vmatpush.msra.mxu0 %v180
  %491 = vmatmul.f32.gmra.mxu0 %v473
  %v492 = vpop.f32.mrf.mxu0
  %v493 = vadd.f32 0.0, %v492
  %494 = vdwg.mxu0
  %v495 = vadd.f32 %v472, %v493
  %v496 = vxor.u32 %v471, 2147483648
  %v497 = vmul.f32 %v496, 1.442695
  %v498 = vpow.pop %v497
  %v499 = vadd.f32 %v498, 1.0
  %v500 = vrcp.pop %v499
  %v501 = vmul.f32 %v499, %v500
  %v502 = vsub.f32 1.0, %v501
  %v503 = vmul.f32 %v500, %v502
  %v504 = vadd.f32 %v500, %v503
  %vm505 = vweird.f32 %v499
  %vm506 = vweird.f32 %v500
  %vm507 = vmor %vm505, %vm506
  %v508 = vsel %vm507, %v500, %v504
  %v509 = vand.u32 2147483647, %v499
  %vm510 = vcmp.eq.f32.partialorder %v509, 8.507059e+37
  %v511 = vand.u32 %v499, 2147483648
  %v512 = vor.u32 1.1754944e-38, %v511
  %v513 = vsel %vm510, %v512, %v508
  %v514 = vmul.f32 1.0, %v513
  %v515 = vtanh.pop %v471
  %v516 = vmul.f32 %v514, %v394
  %518 = vrot.lane.b32.xlu0 %v515, 64
  %v519 = vpop.permute.xlu0 %518
  %v521 = vmul.f32 %v514, %v519
  %523 = vrot.lane.b32.xlu0 %v521, 32
  %v524 = vpop.permute.xlu0 %523
  %v526 = vadd.f32 %v516, %v524
  %v527 = vtanh.pop %v526
  %529 = vrot.lane.b32.xlu0 %v527, 64
  %v530 = vpop.permute.xlu0 %529
  %v532 = vmul.f32 %v514, %v530
  %v533 = vxor.u32 %v495, 2147483648
  %v534 = vmul.f32 %v533, 1.442695
  %v535 = vpow.pop %v534
  %v536 = vadd.f32 %v535, 1.0
  %v537 = vrcp.pop %v536
  %v538 = vmul.f32 %v536, %v537
  %v539 = vsub.f32 1.0, %v538
  %v540 = vmul.f32 %v537, %v539
  %v541 = vadd.f32 %v537, %v540
  %vm542 = vweird.f32 %v536
  %vm543 = vweird.f32 %v537
  %vm544 = vmor %vm542, %vm543
  %v545 = vsel %vm544, %v537, %v541
  %v546 = vand.u32 2147483647, %v536
  %vm547 = vcmp.eq.f32.partialorder %v546, 8.507059e+37
  %v548 = vand.u32 %v536, 2147483648
  %v549 = vor.u32 1.1754944e-38, %v548
  %v550 = vsel %vm547, %v549, %v545
  %v551 = vmul.f32 1.0, %v550
  %v552 = vtanh.pop %v495
  %v553 = vmul.f32 %v551, %v431
  %555 = vrot.lane.b32.xlu0 %v552, 64
  %v556 = vpop.permute.xlu0 %555
  %v558 = vmul.f32 %v551, %v556
  %560 = vrot.lane.b32.xlu0 %v558, 32
  %v561 = vpop.permute.xlu0 %560
  %v563 = vadd.f32 %v553, %v561
  %v564 = vtanh.pop %v563
  %566 = vrot.lane.b32.xlu0 %v564, 64
  %v567 = vpop.permute.xlu0 %566
  %v569 = vmul.f32 %v551, %v567
  %571 = vrot.lane.b32.xlu0 %v532, 32
  %v572 = vpop.permute.xlu0 %571
  %574 = vst.msk [vmem:[#allocation3 + $0x10] sm:$0xff] %vm65, %v572
  %576 = vrot.lane.b32.xlu0 %v569, 32
  %v577 = vpop.permute.xlu0 %576
  %579 = vst.msk [vmem:[%s314 + $0x28] sm:$0xff] %vm65, %v577
  %v580 = vld [vmem:[#allocation2 + $0x18] sm:$0xff]
  %v581 = vsel %vm65, %v572, 0
  %583 = vmatpush.msra.mxu0 0.0
  %584 = vmatpush.msra.mxu0 0.0
  %585 = vmatpush.msra.mxu0 0.0
  %586 = vmatpush.msra.mxu0 0.0
  %587 = vmatpush.msra.mxu0 0.0
  %588 = vmatpush.msra.mxu0 0.0
  %589 = vmatpush.msra.mxu0 0.0
  %590 = vmatpush.msra.mxu0 0.0
  %591 = vmatpush.msra.mxu0 0.0
  %592 = vmatpush.msra.mxu0 0.0
  %593 = vmatpush.msra.mxu0 0.0
  %594 = vmatpush.msra.mxu0 0.0
  %595 = vmatpush.msra.mxu0 %v178
  %596 = vmatpush.msra.mxu0 %v177
  %597 = vmatpush.msra.mxu0 %v176
  %598 = vmatpush.msra.mxu0 %v175
  %599 = vmatmul.f32.gmra.mxu0 %v581
  %v600 = vpop.f32.mrf.mxu0
  %v601 = vadd.f32 0.0, %v600
  %602 = vdwg.mxu0
  %v603 = vadd.f32 %v580, %v601
  %v604 = vld [vmem:[%s166 + $0x20] sm:$0xff]
  %v605 = vsel %vm65, %v577, 0
  %607 = vmatpush.msra.mxu0 0.0
  %608 = vmatpush.msra.mxu0 0.0
  %609 = vmatpush.msra.mxu0 0.0
  %610 = vmatpush.msra.mxu0 0.0
  %611 = vmatpush.msra.mxu0 0.0
  %612 = vmatpush.msra.mxu0 0.0
  %613 = vmatpush.msra.mxu0 0.0
  %614 = vmatpush.msra.mxu0 0.0
  %615 = vmatpush.msra.mxu0 0.0
  %616 = vmatpush.msra.mxu0 0.0
  %617 = vmatpush.msra.mxu0 0.0
  %618 = vmatpush.msra.mxu0 0.0
  %619 = vmatpush.msra.mxu0 %v183
  %620 = vmatpush.msra.mxu0 %v182
  %621 = vmatpush.msra.mxu0 %v181
  %622 = vmatpush.msra.mxu0 %v180
  %623 = vmatmul.f32.gmra.mxu0 %v605
  %v624 = vpop.f32.mrf.mxu0
  %v625 = vadd.f32 0.0, %v624
  %626 = vdwg.mxu0
  %v627 = vadd.f32 %v604, %v625
  %v628 = vxor.u32 %v603, 2147483648
  %v629 = vmul.f32 %v628, 1.442695
  %v630 = vpow.pop %v629
  %v631 = vadd.f32 %v630, 1.0
  %v632 = vrcp.pop %v631
  %v633 = vmul.f32 %v631, %v632
  %v634 = vsub.f32 1.0, %v633
  %v635 = vmul.f32 %v632, %v634
  %v636 = vadd.f32 %v632, %v635
  %vm637 = vweird.f32 %v631
  %vm638 = vweird.f32 %v632
  %vm639 = vmor %vm637, %vm638
  %v640 = vsel %vm639, %v632, %v636
  %v641 = vand.u32 2147483647, %v631
  %vm642 = vcmp.eq.f32.partialorder %v641, 8.507059e+37
  %v643 = vand.u32 %v631, 2147483648
  %v644 = vor.u32 1.1754944e-38, %v643
  %v645 = vsel %vm642, %v644, %v640
  %v646 = vmul.f32 1.0, %v645
  %v647 = vtanh.pop %v603
  %v648 = vmul.f32 %v646, %v526
  %650 = vrot.lane.b32.xlu0 %v647, 64
  %v651 = vpop.permute.xlu0 %650
  %v653 = vmul.f32 %v646, %v651
  %655 = vrot.lane.b32.xlu0 %v653, 32
  %v656 = vpop.permute.xlu0 %655
  %v658 = vadd.f32 %v648, %v656
  %v659 = vtanh.pop %v658
  %661 = vrot.lane.b32.xlu0 %v659, 64
  %v662 = vpop.permute.xlu0 %661
  %v664 = vmul.f32 %v646, %v662
  %v665 = vxor.u32 %v627, 2147483648
  %v666 = vmul.f32 %v665, 1.442695
  %v667 = vpow.pop %v666
  %v668 = vadd.f32 %v667, 1.0
  %v669 = vrcp.pop %v668
  %v670 = vmul.f32 %v668, %v669
  %v671 = vsub.f32 1.0, %v670
  %v672 = vmul.f32 %v669, %v671
  %v673 = vadd.f32 %v669, %v672
  %vm674 = vweird.f32 %v668
  %vm675 = vweird.f32 %v669
  %vm676 = vmor %vm674, %vm675
  %v677 = vsel %vm676, %v669, %v673
  %v678 = vand.u32 2147483647, %v668
  %vm679 = vcmp.eq.f32.partialorder %v678, 8.507059e+37
  %v680 = vand.u32 %v668, 2147483648
  %v681 = vor.u32 1.1754944e-38, %v680
  %v682 = vsel %vm679, %v681, %v677
  %v683 = vmul.f32 1.0, %v682
  %v684 = vtanh.pop %v627
  %v685 = vmul.f32 %v683, %v563
  %687 = vrot.lane.b32.xlu0 %v684, 64
  %v688 = vpop.permute.xlu0 %687
  %v690 = vmul.f32 %v683, %v688
  %692 = vrot.lane.b32.xlu0 %v690, 32
  %v693 = vpop.permute.xlu0 %692
  %v695 = vadd.f32 %v685, %v693
  %v696 = vtanh.pop %v695
  %698 = vrot.lane.b32.xlu0 %v696, 64
  %v699 = vpop.permute.xlu0 %698
  %v701 = vmul.f32 %v683, %v699
  %703 = vrot.lane.b32.xlu0 %v664, 32
  %v704 = vpop.permute.xlu0 %703
  %706 = vst.msk [vmem:[#allocation3 + $0x18] sm:$0xff] %vm65, %v704
  %708 = vrot.lane.b32.xlu0 %v701, 32
  %v709 = vpop.permute.xlu0 %708
  %711 = vst.msk [vmem:[%s314 + $0x20] sm:$0xff] %vm65, %v709
  %v712 = vld [vmem:[#allocation2 + $0x20] sm:$0xff]
  %v713 = vsel %vm65, %v704, 0
  %715 = vmatpush.msra.mxu0 0.0
  %716 = vmatpush.msra.mxu0 0.0
  %717 = vmatpush.msra.mxu0 0.0
  %718 = vmatpush.msra.mxu0 0.0
  %719 = vmatpush.msra.mxu0 0.0
  %720 = vmatpush.msra.mxu0 0.0
  %721 = vmatpush.msra.mxu0 0.0
  %722 = vmatpush.msra.mxu0 0.0
  %723 = vmatpush.msra.mxu0 0.0
  %724 = vmatpush.msra.mxu0 0.0
  %725 = vmatpush.msra.mxu0 0.0
  %726 = vmatpush.msra.mxu0 0.0
  %727 = vmatpush.msra.mxu0 %v178
  %728 = vmatpush.msra.mxu0 %v177
  %729 = vmatpush.msra.mxu0 %v176
  %730 = vmatpush.msra.mxu0 %v175
  %731 = vmatmul.f32.gmra.mxu0 %v713
  %v732 = vpop.f32.mrf.mxu0
  %v733 = vadd.f32 0.0, %v732
  %734 = vdwg.mxu0
  %v735 = vadd.f32 %v712, %v733
  %v736 = vld [vmem:[%s166 + $0x18] sm:$0xff]
  %v737 = vsel %vm65, %v709, 0
  %739 = vmatpush.msra.mxu0 0.0
  %740 = vmatpush.msra.mxu0 0.0
  %741 = vmatpush.msra.mxu0 0.0
  %742 = vmatpush.msra.mxu0 0.0
  %743 = vmatpush.msra.mxu0 0.0
  %744 = vmatpush.msra.mxu0 0.0
  %745 = vmatpush.msra.mxu0 0.0
  %746 = vmatpush.msra.mxu0 0.0
  %747 = vmatpush.msra.mxu0 0.0
  %748 = vmatpush.msra.mxu0 0.0
  %749 = vmatpush.msra.mxu0 0.0
  %750 = vmatpush.msra.mxu0 0.0
  %751 = vmatpush.msra.mxu0 %v183
  %752 = vmatpush.msra.mxu0 %v182
  %753 = vmatpush.msra.mxu0 %v181
  %754 = vmatpush.msra.mxu0 %v180
  %755 = vmatmul.f32.gmra.mxu0 %v737
  %v756 = vpop.f32.mrf.mxu0
  %v757 = vadd.f32 0.0, %v756
  %758 = vdwg.mxu0
  %v759 = vadd.f32 %v736, %v757
  %v760 = vxor.u32 %v735, 2147483648
  %v761 = vmul.f32 %v760, 1.442695
  %v762 = vpow.pop %v761
  %v763 = vadd.f32 %v762, 1.0
  %v764 = vrcp.pop %v763
  %v765 = vmul.f32 %v763, %v764
  %v766 = vsub.f32 1.0, %v765
  %v767 = vmul.f32 %v764, %v766
  %v768 = vadd.f32 %v764, %v767
  %vm769 = vweird.f32 %v763
  %vm770 = vweird.f32 %v764
  %vm771 = vmor %vm769, %vm770
  %v772 = vsel %vm771, %v764, %v768
  %v773 = vand.u32 2147483647, %v763
  %vm774 = vcmp.eq.f32.partialorder %v773, 8.507059e+37
  %v775 = vand.u32 %v763, 2147483648
  %v776 = vor.u32 1.1754944e-38, %v775
  %v777 = vsel %vm774, %v776, %v772
  %v778 = vmul.f32 1.0, %v777
  %v779 = vtanh.pop %v735
  %v780 = vmul.f32 %v778, %v658
  %782 = vrot.lane.b32.xlu0 %v779, 64
  %v783 = vpop.permute.xlu0 %782
  %v785 = vmul.f32 %v778, %v783
  %787 = vrot.lane.b32.xlu0 %v785, 32
  %v788 = vpop.permute.xlu0 %787
  %v790 = vadd.f32 %v780, %v788
  %v791 = vtanh.pop %v790
  %793 = vrot.lane.b32.xlu0 %v791, 64
  %v794 = vpop.permute.xlu0 %793
  %v796 = vmul.f32 %v778, %v794
  %v797 = vxor.u32 %v759, 2147483648
  %v798 = vmul.f32 %v797, 1.442695
  %v799 = vpow.pop %v798
  %v800 = vadd.f32 %v799, 1.0
  %v801 = vrcp.pop %v800
  %v802 = vmul.f32 %v800, %v801
  %v803 = vsub.f32 1.0, %v802
  %v804 = vmul.f32 %v801, %v803
  %v805 = vadd.f32 %v801, %v804
  %vm806 = vweird.f32 %v800
  %vm807 = vweird.f32 %v801
  %vm808 = vmor %vm806, %vm807
  %v809 = vsel %vm808, %v801, %v805
  %v810 = vand.u32 2147483647, %v800
  %vm811 = vcmp.eq.f32.partialorder %v810, 8.507059e+37
  %v812 = vand.u32 %v800, 2147483648
  %v813 = vor.u32 1.1754944e-38, %v812
  %v814 = vsel %vm811, %v813, %v809
  %v815 = vmul.f32 1.0, %v814
  %v816 = vtanh.pop %v759
  %v817 = vmul.f32 %v815, %v695
  %819 = vrot.lane.b32.xlu0 %v816, 64
  %v820 = vpop.permute.xlu0 %819
  %v822 = vmul.f32 %v815, %v820
  %824 = vrot.lane.b32.xlu0 %v822, 32
  %v825 = vpop.permute.xlu0 %824
  %v827 = vadd.f32 %v817, %v825
  %v828 = vtanh.pop %v827
  %830 = vrot.lane.b32.xlu0 %v828, 64
  %v831 = vpop.permute.xlu0 %830
  %v833 = vmul.f32 %v815, %v831
  %835 = vrot.lane.b32.xlu0 %v796, 32
  %v836 = vpop.permute.xlu0 %835
  %838 = vst.msk [vmem:[#allocation3 + $0x20] sm:$0xff] %vm65, %v836
  %840 = vrot.lane.b32.xlu0 %v833, 32
  %v841 = vpop.permute.xlu0 %840
  %843 = vst.msk [vmem:[%s314 + $0x18] sm:$0xff] %vm65, %v841
  %v844 = vld [vmem:[#allocation2 + $0x28] sm:$0xff]
  %v845 = vsel %vm65, %v836, 0
  %847 = vmatpush.msra.mxu0 0.0
  %848 = vmatpush.msra.mxu0 0.0
  %849 = vmatpush.msra.mxu0 0.0
  %850 = vmatpush.msra.mxu0 0.0
  %851 = vmatpush.msra.mxu0 0.0
  %852 = vmatpush.msra.mxu0 0.0
  %853 = vmatpush.msra.mxu0 0.0
  %854 = vmatpush.msra.mxu0 0.0
  %855 = vmatpush.msra.mxu0 0.0
  %856 = vmatpush.msra.mxu0 0.0
  %857 = vmatpush.msra.mxu0 0.0
  %858 = vmatpush.msra.mxu0 0.0
  %859 = vmatpush.msra.mxu0 %v178
  %860 = vmatpush.msra.mxu0 %v177
  %861 = vmatpush.msra.mxu0 %v176
  %862 = vmatpush.msra.mxu0 %v175
  %863 = vmatmul.f32.gmra.mxu0 %v845
  %v864 = vpop.f32.mrf.mxu0
  %v865 = vadd.f32 0.0, %v864
  %866 = vdwg.mxu0
  %v867 = vadd.f32 %v844, %v865
  %v868 = vld [vmem:[%s166 + $0x10] sm:$0xff]
  %v869 = vsel %vm65, %v841, 0
  %871 = vmatpush.msra.mxu0 0.0
  %872 = vmatpush.msra.mxu0 0.0
  %873 = vmatpush.msra.mxu0 0.0
  %874 = vmatpush.msra.mxu0 0.0
  %875 = vmatpush.msra.mxu0 0.0
  %876 = vmatpush.msra.mxu0 0.0
  %877 = vmatpush.msra.mxu0 0.0
  %878 = vmatpush.msra.mxu0 0.0
  %879 = vmatpush.msra.mxu0 0.0
  %880 = vmatpush.msra.mxu0 0.0
  %881 = vmatpush.msra.mxu0 0.0
  %882 = vmatpush.msra.mxu0 0.0
  %883 = vmatpush.msra.mxu0 %v183
  %884 = vmatpush.msra.mxu0 %v182
  %885 = vmatpush.msra.mxu0 %v181
  %886 = vmatpush.msra.mxu0 %v180
  %887 = vmatmul.f32.gmra.mxu0 %v869
  %v888 = vpop.f32.mrf.mxu0
  %v889 = vadd.f32 0.0, %v888
  %890 = vdwg.mxu0
  %v891 = vadd.f32 %v868, %v889
  %v892 = vxor.u32 %v867, 2147483648
  %v893 = vmul.f32 %v892, 1.442695
  %v894 = vpow.pop %v893
  %v895 = vadd.f32 %v894, 1.0
  %v896 = vrcp.pop %v895
  %v897 = vmul.f32 %v895, %v896
  %v898 = vsub.f32 1.0, %v897
  %v899 = vmul.f32 %v896, %v898
  %v900 = vadd.f32 %v896, %v899
  %vm901 = vweird.f32 %v895
  %vm902 = vweird.f32 %v896
  %vm903 = vmor %vm901, %vm902
  %v904 = vsel %vm903, %v896, %v900
  %v905 = vand.u32 2147483647, %v895
  %vm906 = vcmp.eq.f32.partialorder %v905, 8.507059e+37
  %v907 = vand.u32 %v895, 2147483648
  %v908 = vor.u32 1.1754944e-38, %v907
  %v909 = vsel %vm906, %v908, %v904
  %v910 = vmul.f32 1.0, %v909
  %v911 = vtanh.pop %v867
  %v912 = vmul.f32 %v910, %v790
  %914 = vrot.lane.b32.xlu0 %v911, 64
  %v915 = vpop.permute.xlu0 %914
  %v917 = vmul.f32 %v910, %v915
  %919 = vrot.lane.b32.xlu0 %v917, 32
  %v920 = vpop.permute.xlu0 %919
  %v922 = vadd.f32 %v912, %v920
  %v923 = vtanh.pop %v922
  %925 = vrot.lane.b32.xlu0 %v923, 64
  %v926 = vpop.permute.xlu0 %925
  %v928 = vmul.f32 %v910, %v926
  %v929 = vxor.u32 %v891, 2147483648
  %v930 = vmul.f32 %v929, 1.442695
  %v931 = vpow.pop %v930
  %v932 = vadd.f32 %v931, 1.0
  %v933 = vrcp.pop %v932
  %v934 = vmul.f32 %v932, %v933
  %v935 = vsub.f32 1.0, %v934
  %v936 = vmul.f32 %v933, %v935
  %v937 = vadd.f32 %v933, %v936
  %vm938 = vweird.f32 %v932
  %vm939 = vweird.f32 %v933
  %vm940 = vmor %vm938, %vm939
  %v941 = vsel %vm940, %v933, %v937
  %v942 = vand.u32 2147483647, %v932
  %vm943 = vcmp.eq.f32.partialorder %v942, 8.507059e+37
  %v944 = vand.u32 %v932, 2147483648
  %v945 = vor.u32 1.1754944e-38, %v944
  %v946 = vsel %vm943, %v945, %v941
  %v947 = vmul.f32 1.0, %v946
  %v948 = vtanh.pop %v891
  %v949 = vmul.f32 %v947, %v827
  %951 = vrot.lane.b32.xlu0 %v948, 64
  %v952 = vpop.permute.xlu0 %951
  %v954 = vmul.f32 %v947, %v952
  %956 = vrot.lane.b32.xlu0 %v954, 32
  %v957 = vpop.permute.xlu0 %956
  %v959 = vadd.f32 %v949, %v957
  %v960 = vtanh.pop %v959
  %962 = vrot.lane.b32.xlu0 %v960, 64
  %v963 = vpop.permute.xlu0 %962
  %v965 = vmul.f32 %v947, %v963
  %967 = vrot.lane.b32.xlu0 %v928, 32
  %v968 = vpop.permute.xlu0 %967
  %970 = vst.msk [vmem:[#allocation3 + $0x28] sm:$0xff] %vm65, %v968
  %972 = vrot.lane.b32.xlu0 %v965, 32
  %v973 = vpop.permute.xlu0 %972
  %975 = vst.msk [vmem:[%s314 + $0x10] sm:$0xff] %vm65, %v973
  %v976 = vld [vmem:[#allocation2 + $0x30] sm:$0xff]
  %v977 = vsel %vm65, %v968, 0
  %979 = vmatpush.msra.mxu0 0.0
  %980 = vmatpush.msra.mxu0 0.0
  %981 = vmatpush.msra.mxu0 0.0
  %982 = vmatpush.msra.mxu0 0.0
  %983 = vmatpush.msra.mxu0 0.0
  %984 = vmatpush.msra.mxu0 0.0
  %985 = vmatpush.msra.mxu0 0.0
  %986 = vmatpush.msra.mxu0 0.0
  %987 = vmatpush.msra.mxu0 0.0
  %988 = vmatpush.msra.mxu0 0.0
  %989 = vmatpush.msra.mxu0 0.0
  %990 = vmatpush.msra.mxu0 0.0
  %991 = vmatpush.msra.mxu0 %v178
  %992 = vmatpush.msra.mxu0 %v177
  %993 = vmatpush.msra.mxu0 %v176
  %994 = vmatpush.msra.mxu0 %v175
  %995 = vmatmul.f32.gmra.mxu0 %v977
  %v996 = vpop.f32.mrf.mxu0
  %v997 = vadd.f32 0.0, %v996
  %998 = vdwg.mxu0
  %v999 = vadd.f32 %v976, %v997
  %v1000 = vld [vmem:[%s166 + $0x8] sm:$0xff]
  %v1001 = vsel %vm65, %v973, 0
  %1003 = vmatpush.msra.mxu0 0.0
  %1004 = vmatpush.msra.mxu0 0.0
  %1005 = vmatpush.msra.mxu0 0.0
  %1006 = vmatpush.msra.mxu0 0.0
  %1007 = vmatpush.msra.mxu0 0.0
  %1008 = vmatpush.msra.mxu0 0.0
  %1009 = vmatpush.msra.mxu0 0.0
  %1010 = vmatpush.msra.mxu0 0.0
  %1011 = vmatpush.msra.mxu0 0.0
  %1012 = vmatpush.msra.mxu0 0.0
  %1013 = vmatpush.msra.mxu0 0.0
  %1014 = vmatpush.msra.mxu0 0.0
  %1015 = vmatpush.msra.mxu0 %v183
  %1016 = vmatpush.msra.mxu0 %v182
  %1017 = vmatpush.msra.mxu0 %v181
  %1018 = vmatpush.msra.mxu0 %v180
  %1019 = vmatmul.f32.gmra.mxu0 %v1001
  %v1020 = vpop.f32.mrf.mxu0
  %v1021 = vadd.f32 0.0, %v1020
  %1022 = vdwg.mxu0
  %v1023 = vadd.f32 %v1000, %v1021
  %v1024 = vxor.u32 %v999, 2147483648
  %v1025 = vmul.f32 %v1024, 1.442695
  %v1026 = vpow.pop %v1025
  %v1027 = vadd.f32 %v1026, 1.0
  %v1028 = vrcp.pop %v1027
  %v1029 = vmul.f32 %v1027, %v1028
  %v1030 = vsub.f32 1.0, %v1029
  %v1031 = vmul.f32 %v1028, %v1030
  %v1032 = vadd.f32 %v1028, %v1031
  %vm1033 = vweird.f32 %v1027
  %vm1034 = vweird.f32 %v1028
  %vm1035 = vmor %vm1033, %vm1034
  %v1036 = vsel %vm1035, %v1028, %v1032
  %v1037 = vand.u32 2147483647, %v1027
  %vm1038 = vcmp.eq.f32.partialorder %v1037, 8.507059e+37
  %v1039 = vand.u32 %v1027, 2147483648
  %v1040 = vor.u32 1.1754944e-38, %v1039
  %v1041 = vsel %vm1038, %v1040, %v1036
  %v1042 = vmul.f32 1.0, %v1041
  %v1043 = vtanh.pop %v999
  %v1044 = vmul.f32 %v1042, %v922
  %1046 = vrot.lane.b32.xlu0 %v1043, 64
  %v1047 = vpop.permute.xlu0 %1046
  %v1049 = vmul.f32 %v1042, %v1047
  %1051 = vrot.lane.b32.xlu0 %v1049, 32
  %v1052 = vpop.permute.xlu0 %1051
  %v1054 = vadd.f32 %v1044, %v1052
  %v1055 = vtanh.pop %v1054
  %1057 = vrot.lane.b32.xlu0 %v1055, 64
  %v1058 = vpop.permute.xlu0 %1057
  %v1060 = vmul.f32 %v1042, %v1058
  %v1061 = vxor.u32 %v1023, 2147483648
  %v1062 = vmul.f32 %v1061, 1.442695
  %v1063 = vpow.pop %v1062
  %v1064 = vadd.f32 %v1063, 1.0
  %v1065 = vrcp.pop %v1064
  %v1066 = vmul.f32 %v1064, %v1065
  %v1067 = vsub.f32 1.0, %v1066
  %v1068 = vmul.f32 %v1065, %v1067
  %v1069 = vadd.f32 %v1065, %v1068
  %vm1070 = vweird.f32 %v1064
  %vm1071 = vweird.f32 %v1065
  %vm1072 = vmor %vm1070, %vm1071
  %v1073 = vsel %vm1072, %v1065, %v1069
  %v1074 = vand.u32 2147483647, %v1064
  %vm1075 = vcmp.eq.f32.partialorder %v1074, 8.507059e+37
  %v1076 = vand.u32 %v1064, 2147483648
  %v1077 = vor.u32 1.1754944e-38, %v1076
  %v1078 = vsel %vm1075, %v1077, %v1073
  %v1079 = vmul.f32 1.0, %v1078
  %v1080 = vtanh.pop %v1023
  %v1081 = vmul.f32 %v1079, %v959
  %1083 = vrot.lane.b32.xlu0 %v1080, 64
  %v1084 = vpop.permute.xlu0 %1083
  %v1086 = vmul.f32 %v1079, %v1084
  %1088 = vrot.lane.b32.xlu0 %v1086, 32
  %v1089 = vpop.permute.xlu0 %1088
  %v1091 = vadd.f32 %v1081, %v1089
  %v1092 = vtanh.pop %v1091
  %1094 = vrot.lane.b32.xlu0 %v1092, 64
  %v1095 = vpop.permute.xlu0 %1094
  %v1097 = vmul.f32 %v1079, %v1095
  %1099 = vrot.lane.b32.xlu0 %v1060, 32
  %v1100 = vpop.permute.xlu0 %1099
  %1102 = vst.msk [vmem:[#allocation3 + $0x30] sm:$0xff] %vm65, %v1100
  %1104 = vrot.lane.b32.xlu0 %v1097, 32
  %v1105 = vpop.permute.xlu0 %1104
  %1107 = vst.msk [vmem:[%s314 + $0x8] sm:$0xff] %vm65, %v1105
  %v1108 = vld [vmem:[#allocation2 + $0x38] sm:$0xff]
  %v1109 = vsel %vm65, %v1100, 0
  %1111 = vmatpush.msra.mxu0 0.0
  %1112 = vmatpush.msra.mxu0 0.0
  %1113 = vmatpush.msra.mxu0 0.0
  %1114 = vmatpush.msra.mxu0 0.0
  %1115 = vmatpush.msra.mxu0 0.0
  %1116 = vmatpush.msra.mxu0 0.0
  %1117 = vmatpush.msra.mxu0 0.0
  %1118 = vmatpush.msra.mxu0 0.0
  %1119 = vmatpush.msra.mxu0 0.0
  %1120 = vmatpush.msra.mxu0 0.0
  %1121 = vmatpush.msra.mxu0 0.0
  %1122 = vmatpush.msra.mxu0 0.0
  %1123 = vmatpush.msra.mxu0 %v178
  %1124 = vmatpush.msra.mxu0 %v177
  %1125 = vmatpush.msra.mxu0 %v176
  %1126 = vmatpush.msra.mxu0 %v175
  %1127 = vmatmul.f32.gmra.mxu0 %v1109
  %v1128 = vpop.f32.mrf.mxu0
  %v1129 = vadd.f32 0.0, %v1128
  %1130 = vdwg.mxu0
  %v1131 = vadd.f32 %v1108, %v1129
  %v1132 = vld [vmem:[%s166] sm:$0xff]
  %v1133 = vsel %vm65, %v1105, 0
  %1135 = vmatpush.msra.mxu0 0.0
  %1136 = vmatpush.msra.mxu0 0.0
  %1137 = vmatpush.msra.mxu0 0.0
  %1138 = vmatpush.msra.mxu0 0.0
  %1139 = vmatpush.msra.mxu0 0.0
  %1140 = vmatpush.msra.mxu0 0.0
  %1141 = vmatpush.msra.mxu0 0.0
  %1142 = vmatpush.msra.mxu0 0.0
  %1143 = vmatpush.msra.mxu0 0.0
  %1144 = vmatpush.msra.mxu0 0.0
  %1145 = vmatpush.msra.mxu0 0.0
  %1146 = vmatpush.msra.mxu0 0.0
  %1147 = vmatpush.msra.mxu0 %v183
  %1148 = vmatpush.msra.mxu0 %v182
  %1149 = vmatpush.msra.mxu0 %v181
  %1150 = vmatpush.msra.mxu0 %v180
  %1151 = vmatmul.f32.gmra.mxu0 %v1133
  %v1152 = vpop.f32.mrf.mxu0
  %v1153 = vadd.f32 0.0, %v1152
  %1154 = vdwg.mxu0
  %v1155 = vadd.f32 %v1132, %v1153
  %v1156 = vxor.u32 %v1131, 2147483648
  %v1157 = vmul.f32 %v1156, 1.442695
  %v1158 = vpow.pop %v1157
  %v1159 = vadd.f32 %v1158, 1.0
  %v1160 = vrcp.pop %v1159
  %v1161 = vmul.f32 %v1159, %v1160
  %v1162 = vsub.f32 1.0, %v1161
  %v1163 = vmul.f32 %v1160, %v1162
  %v1164 = vadd.f32 %v1160, %v1163
  %vm1165 = vweird.f32 %v1159
  %vm1166 = vweird.f32 %v1160
  %vm1167 = vmor %vm1165, %vm1166
  %v1168 = vsel %vm1167, %v1160, %v1164
  %v1169 = vand.u32 2147483647, %v1159
  %vm1170 = vcmp.eq.f32.partialorder %v1169, 8.507059e+37
  %v1171 = vand.u32 %v1159, 2147483648
  %v1172 = vor.u32 1.1754944e-38, %v1171
  %v1173 = vsel %vm1170, %v1172, %v1168
  %v1174 = vmul.f32 1.0, %v1173
  %v1175 = vtanh.pop %v1131
  %v1176 = vmul.f32 %v1174, %v1054
  %1178 = vrot.lane.b32.xlu0 %v1175, 64
  %v1179 = vpop.permute.xlu0 %1178
  %v1181 = vmul.f32 %v1174, %v1179
  %1183 = vrot.lane.b32.xlu0 %v1181, 32
  %v1184 = vpop.permute.xlu0 %1183
  %v1186 = vadd.f32 %v1176, %v1184
  %v1187 = vtanh.pop %v1186
  %1189 = vrot.lane.b32.xlu0 %v1187, 64
  %v1190 = vpop.permute.xlu0 %1189
  %v1192 = vmul.f32 %v1174, %v1190
  %v1193 = vxor.u32 %v1155, 2147483648
  %v1194 = vmul.f32 %v1193, 1.442695
  %v1195 = vpow.pop %v1194
  %v1196 = vadd.f32 %v1195, 1.0
  %v1197 = vrcp.pop %v1196
  %v1198 = vmul.f32 %v1196, %v1197
  %v1199 = vsub.f32 1.0, %v1198
  %v1200 = vmul.f32 %v1197, %v1199
  %v1201 = vadd.f32 %v1197, %v1200
  %vm1202 = vweird.f32 %v1196
  %vm1203 = vweird.f32 %v1197
  %vm1204 = vmor %vm1202, %vm1203
  %v1205 = vsel %vm1204, %v1197, %v1201
  %v1206 = vand.u32 2147483647, %v1196
  %vm1207 = vcmp.eq.f32.partialorder %v1206, 8.507059e+37
  %v1208 = vand.u32 %v1196, 2147483648
  %v1209 = vor.u32 1.1754944e-38, %v1208
  %v1210 = vsel %vm1207, %v1209, %v1205
  %v1211 = vmul.f32 1.0, %v1210
  %v1212 = vtanh.pop %v1155
  %v1213 = vmul.f32 %v1211, %v1091
  %1215 = vrot.lane.b32.xlu0 %v1212, 64
  %v1216 = vpop.permute.xlu0 %1215
  %v1218 = vmul.f32 %v1211, %v1216
  %1220 = vrot.lane.b32.xlu0 %v1218, 32
  %v1221 = vpop.permute.xlu0 %1220
  %v1223 = vadd.f32 %v1213, %v1221
  %v1224 = vtanh.pop %v1223
  %1226 = vrot.lane.b32.xlu0 %v1224, 64
  %v1227 = vpop.permute.xlu0 %1226
  %v1229 = vmul.f32 %v1211, %v1227
  %1231 = vrot.lane.b32.xlu0 %v1192, 32
  %v1232 = vpop.permute.xlu0 %1231
  %1234 = vst.msk [vmem:[#allocation3 + $0x38] sm:$0xff] %vm65, %v1232
  %1236 = vrot.lane.b32.xlu0 %v1229, 32
  %v1237 = vpop.permute.xlu0 %1236
  %1239 = vst.msk [vmem:[%s314] sm:$0xff] %vm65, %v1237
  %v1240 = vld [vmem:[#allocation3] sm:$0xff]
  %v1241 = vld [vmem:[#allocation3 + $0x8] sm:$0xff]
  %v1242 = vld [vmem:[#allocation3 + $0x10] sm:$0xff]
  %v1243 = vld [vmem:[#allocation3 + $0x18] sm:$0xff]
  %v1244 = vld [vmem:[#allocation3 + $0x20] sm:$0xff]
  %v1245 = vld [vmem:[#allocation3 + $0x28] sm:$0xff]
  %v1246 = vld [vmem:[#allocation3 + $0x30] sm:$0xff]
  %v1247 = vld [vmem:[#allocation3 + $0x38] sm:$0xff]
  %v1248 = vpack.c.bf16 %v1241, %v1240
  %v1249 = vpack.c.bf16 %v1243, %v1242
  %v1250 = vpack.c.bf16 %v1245, %v1244
  %v1251 = vpack.c.bf16 %v1247, %v1246
  %v1252 = vld [vmem:[%s314] sm:$0xff]
  %v1253 = vld [vmem:[%s314 + $0x8] sm:$0xff]
  %v1254 = vld [vmem:[%s314 + $0x10] sm:$0xff]
  %v1255 = vld [vmem:[%s314 + $0x18] sm:$0xff]
  %v1256 = vld [vmem:[%s314 + $0x20] sm:$0xff]
  %v1257 = vld [vmem:[%s314 + $0x28] sm:$0xff]
  %v1258 = vld [vmem:[%s314 + $0x30] sm:$0xff]
  %v1259 = vld [vmem:[%s314 + $0x38] sm:$0xff]
  %v1260 = vpack.c.bf16 %v1253, %v1252
  %v1261 = vpack.c.bf16 %v1255, %v1254
  %v1262 = vpack.c.bf16 %v1257, %v1256
  %v1263 = vpack.c.bf16 %v1259, %v1258
  %v1264 = vld [vmem:[%s4] sm:$0xf]
  %v1265 = vld [vmem:[%s4 + $0x4] sm:$0xf]
  %v1266 = vld [vmem:[%s4 + $0x8] sm:$0xf]
  %v1267 = vld [vmem:[%s4 + $0xc] sm:$0xf]
  %s1268 = scalar_lea.vmem %s4, 16
  %v1269 = vld [vmem:[%s1268] sm:$0xf]
  %v1270 = vld [vmem:[%s1268 + $0x4] sm:$0xf]
  %v1271 = vld [vmem:[%s1268 + $0x8] sm:$0xf]
  %v1272 = vld [vmem:[%s1268 + $0xc] sm:$0xf]
  %v1277 = vunpack.c.l.b16 %v1269
  %v1278 = vunpack.c.l.b16 %v1270
  %v1279 = vunpack.c.l.b16 %v1271
  %v1280 = vunpack.c.l.b16 %v1272
  %v1281 = vpack.c.b16 %v1278, %v1277
  %v1282 = vpack.c.b16 %v1280, %v1279
  %v1286 = vsel %vm65, %v1260, 0
  %v1289 = vsel %vm65, %v1261, 0
  %v1292 = vsel %vm65, %v1262, 0
  %v1295 = vsel %vm65, %v1263, 0
  %1297 = vmatpush.bf16.msra.mxu0 0
  %1298 = vmatpush.bf16.msra.mxu0 0
  %1299 = vmatpush.bf16.msra.mxu0 0
  %1300 = vmatpush.bf16.msra.mxu0 0
  %1301 = vmatpush.bf16.msra.mxu0 0
  %1302 = vmatpush.bf16.msra.mxu0 0
  %1303 = vmatpush.bf16.msra.mxu0 %v1282
  %1304 = vmatpush.bf16.msra.mxu0 %v1281
  %1305 = vmatmul.bf16.gmra.mxu0 %v1286
  %v1306 = vpop.f32.mrf.mxu0
  %v1307 = vadd.f32 0.0, %v1306
  %v1308 = vpop.f32.mrf.mxu0
  %v1309 = vadd.f32 0.0, %v1308
  %1310 = vmatmul.bf16.gmra.mxu0 %v1289
  %v1311 = vpop.f32.mrf.mxu0
  %v1312 = vadd.f32 0.0, %v1311
  %v1313 = vpop.f32.mrf.mxu0
  %v1314 = vadd.f32 0.0, %v1313
  %1315 = vmatmul.bf16.gmra.mxu0 %v1292
  %v1316 = vpop.f32.mrf.mxu0
  %v1317 = vadd.f32 0.0, %v1316
  %v1318 = vpop.f32.mrf.mxu0
  %v1319 = vadd.f32 0.0, %v1318
  %1320 = vmatmul.bf16.gmra.mxu0 %v1295
  %v1321 = vpop.f32.mrf.mxu0
  %v1322 = vadd.f32 0.0, %v1321
  %v1323 = vpop.f32.mrf.mxu0
  %v1324 = vadd.f32 0.0, %v1323
  %1325 = vdwg.mxu0
  %v1330 = vunpack.c.l.b16 %v1264
  %v1331 = vunpack.c.l.b16 %v1265
  %v1332 = vunpack.c.l.b16 %v1266
  %v1333 = vunpack.c.l.b16 %v1267
  %v1334 = vpack.c.b16 %v1331, %v1330
  %v1335 = vpack.c.b16 %v1333, %v1332
  %v1339 = vsel %vm65, %v1248, 0
  %v1342 = vsel %vm65, %v1249, 0
  %v1345 = vsel %vm65, %v1250, 0
  %v1348 = vsel %vm65, %v1251, 0
  %1350 = vmatpush.bf16.msra.mxu0 0
  %1351 = vmatpush.bf16.msra.mxu0 0
  %1352 = vmatpush.bf16.msra.mxu0 0
  %1353 = vmatpush.bf16.msra.mxu0 0
  %1354 = vmatpush.bf16.msra.mxu0 0
  %1355 = vmatpush.bf16.msra.mxu0 0
  %1356 = vmatpush.bf16.msra.mxu0 %v1335
  %1357 = vmatpush.bf16.msra.mxu0 %v1334
  %1358 = vmatmul.bf16.gmra.mxu0 %v1339
  %v1359 = vpop.f32.mrf.mxu0
  %v1360 = vadd.f32 %v1307, %v1359
  %v1361 = vpop.f32.mrf.mxu0
  %v1362 = vadd.f32 %v1309, %v1361
  %1363 = vmatmul.bf16.gmra.mxu0 %v1342
  %v1364 = vpop.f32.mrf.mxu0
  %v1365 = vadd.f32 %v1312, %v1364
  %v1366 = vpop.f32.mrf.mxu0
  %v1367 = vadd.f32 %v1314, %v1366
  %1368 = vmatmul.bf16.gmra.mxu0 %v1345
  %v1369 = vpop.f32.mrf.mxu0
  %v1370 = vadd.f32 %v1317, %v1369
  %v1371 = vpop.f32.mrf.mxu0
  %v1372 = vadd.f32 %v1319, %v1371
  %1373 = vmatmul.bf16.gmra.mxu0 %v1348
  %v1374 = vpop.f32.mrf.mxu0
  %v1375 = vadd.f32 %v1322, %v1374
  %v1376 = vpop.f32.mrf.mxu0
  %v1377 = vadd.f32 %v1324, %v1376
  %1378 = vdwg.mxu0
  %v1379 = vld [vmem:[%s5] sm:$0x1]
  %v1381 = vperm.slane %v1379, 0
  %v1383 = vadd.f32 %v1360, %v1381
  %v1384 = vadd.f32 %v1362, %v1381
  %v1385 = vadd.f32 %v1365, %v1381
  %v1386 = vadd.f32 %v1367, %v1381
  %v1387 = vadd.f32 %v1370, %v1381
  %v1388 = vadd.f32 %v1372, %v1381
  %v1389 = vadd.f32 %v1375, %v1381
  %v1390 = vadd.f32 %v1377, %v1381
  %1391 = vst [vmem:[#allocation4] sm:$0xff] %v1383
  %1392 = vst [vmem:[#allocation4 + $0x8] sm:$0xff] %v1384
  %1393 = vst [vmem:[#allocation4 + $0x10] sm:$0xff] %v1385
  %1394 = vst [vmem:[#allocation4 + $0x18] sm:$0xff] %v1386
  %1395 = vst [vmem:[#allocation4 + $0x20] sm:$0xff] %v1387
  %1396 = vst [vmem:[#allocation4 + $0x28] sm:$0xff] %v1388
  %1397 = vst [vmem:[#allocation4 + $0x30] sm:$0xff] %v1389
  %1398 = vst [vmem:[#allocation4 + $0x38] sm:$0xff] %v1390
  %s1399 = scalar_lea.vmem %s4, 32
  %v1400 = vld [vmem:[%s1399] sm:$0xf]
  %v1401 = vld [vmem:[%s1399 + $0x4] sm:$0xf]
  %v1402 = vld [vmem:[%s1399 + $0x8] sm:$0xf]
  %v1403 = vld [vmem:[%s1399 + $0xc] sm:$0xf]
  %s1404 = scalar_lea.vmem %s4, 48
  %v1405 = vld [vmem:[%s1404] sm:$0xf]
  %v1406 = vld [vmem:[%s1404 + $0x4] sm:$0xf]
  %v1407 = vld [vmem:[%s1404 + $0x8] sm:$0xf]
  %v1408 = vld [vmem:[%s1404 + $0xc] sm:$0xf]
  %v1413 = vunpack.c.l.b16 %v1405
  %v1414 = vunpack.c.l.b16 %v1406
  %v1415 = vunpack.c.l.b16 %v1407
  %v1416 = vunpack.c.l.b16 %v1408
  %v1417 = vpack.c.b16 %v1414, %v1413
  %v1418 = vpack.c.b16 %v1416, %v1415
  %1421 = vmatpush.bf16.msra.mxu0 0
  %1422 = vmatpush.bf16.msra.mxu0 0
  %1423 = vmatpush.bf16.msra.mxu0 0
  %1424 = vmatpush.bf16.msra.mxu0 0
  %1425 = vmatpush.bf16.msra.mxu0 0
  %1426 = vmatpush.bf16.msra.mxu0 0
  %1427 = vmatpush.bf16.msra.mxu0 %v1418
  %1428 = vmatpush.bf16.msra.mxu0 %v1417
  %1429 = vmatmul.bf16.gmra.mxu0 %v1286
  %v1430 = vpop.f32.mrf.mxu0
  %v1431 = vadd.f32 0.0, %v1430
  %v1432 = vpop.f32.mrf.mxu0
  %v1433 = vadd.f32 0.0, %v1432
  %1434 = vmatmul.bf16.gmra.mxu0 %v1289
  %v1435 = vpop.f32.mrf.mxu0
  %v1436 = vadd.f32 0.0, %v1435
  %v1437 = vpop.f32.mrf.mxu0
  %v1438 = vadd.f32 0.0, %v1437
  %1439 = vmatmul.bf16.gmra.mxu0 %v1292
  %v1440 = vpop.f32.mrf.mxu0
  %v1441 = vadd.f32 0.0, %v1440
  %v1442 = vpop.f32.mrf.mxu0
  %v1443 = vadd.f32 0.0, %v1442
  %1444 = vmatmul.bf16.gmra.mxu0 %v1295
  %v1445 = vpop.f32.mrf.mxu0
  %v1446 = vadd.f32 0.0, %v1445
  %v1447 = vpop.f32.mrf.mxu0
  %v1448 = vadd.f32 0.0, %v1447
  %1449 = vdwg.mxu0
  %v1454 = vunpack.c.l.b16 %v1400
  %v1455 = vunpack.c.l.b16 %v1401
  %v1456 = vunpack.c.l.b16 %v1402
  %v1457 = vunpack.c.l.b16 %v1403
  %v1458 = vpack.c.b16 %v1455, %v1454
  %v1459 = vpack.c.b16 %v1457, %v1456
  %1462 = vmatpush.bf16.msra.mxu0 0
  %1463 = vmatpush.bf16.msra.mxu0 0
  %1464 = vmatpush.bf16.msra.mxu0 0
  %1465 = vmatpush.bf16.msra.mxu0 0
  %1466 = vmatpush.bf16.msra.mxu0 0
  %1467 = vmatpush.bf16.msra.mxu0 0
  %1468 = vmatpush.bf16.msra.mxu0 %v1459
  %1469 = vmatpush.bf16.msra.mxu0 %v1458
  %1470 = vmatmul.bf16.gmra.mxu0 %v1339
  %v1471 = vpop.f32.mrf.mxu0
  %v1472 = vadd.f32 %v1431, %v1471
  %v1473 = vpop.f32.mrf.mxu0
  %v1474 = vadd.f32 %v1433, %v1473
  %1475 = vmatmul.bf16.gmra.mxu0 %v1342
  %v1476 = vpop.f32.mrf.mxu0
  %v1477 = vadd.f32 %v1436, %v1476
  %v1478 = vpop.f32.mrf.mxu0
  %v1479 = vadd.f32 %v1438, %v1478
  %1480 = vmatmul.bf16.gmra.mxu0 %v1345
  %v1481 = vpop.f32.mrf.mxu0
  %v1482 = vadd.f32 %v1441, %v1481
  %v1483 = vpop.f32.mrf.mxu0
  %v1484 = vadd.f32 %v1443, %v1483
  %1485 = vmatmul.bf16.gmra.mxu0 %v1348
  %v1486 = vpop.f32.mrf.mxu0
  %v1487 = vadd.f32 %v1446, %v1486
  %v1488 = vpop.f32.mrf.mxu0
  %v1489 = vadd.f32 %v1448, %v1488
  %1490 = vdwg.mxu0
  %s1491 = scalar_lea.vmem %s5, 1
  %v1492 = vld [vmem:[%s1491] sm:$0x1]
  %v1494 = vperm.slane %v1492, 0
  %v1496 = vadd.f32 %v1472, %v1494
  %v1497 = vadd.f32 %v1474, %v1494
  %v1498 = vadd.f32 %v1477, %v1494
  %v1499 = vadd.f32 %v1479, %v1494
  %v1500 = vadd.f32 %v1482, %v1494
  %v1501 = vadd.f32 %v1484, %v1494
  %v1502 = vadd.f32 %v1487, %v1494
  %v1503 = vadd.f32 %v1489, %v1494
  %s1504 = scalar_lea.vmem [#allocation4], 64
  %1505 = vst [vmem:[%s1504] sm:$0xff] %v1496
  %1506 = vst [vmem:[%s1504 + $0x8] sm:$0xff] %v1497
  %1507 = vst [vmem:[%s1504 + $0x10] sm:$0xff] %v1498
  %1508 = vst [vmem:[%s1504 + $0x18] sm:$0xff] %v1499
  %1509 = vst [vmem:[%s1504 + $0x20] sm:$0xff] %v1500
  %1510 = vst [vmem:[%s1504 + $0x28] sm:$0xff] %v1501
  %1511 = vst [vmem:[%s1504 + $0x30] sm:$0xff] %v1502
  %1512 = vst [vmem:[%s1504 + $0x38] sm:$0xff] %v1503
  %v1513 = vld [vmem:[%s6] sm:$0xff]
  %v1514 = vld [vmem:[%s6 + $0x8] sm:$0xff]
  %v1515 = vld [vmem:[%s6 + $0x10] sm:$0xff]
  %v1516 = vld [vmem:[%s6 + $0x18] sm:$0xff]
  %s1517 = scalar_lea.vmem %s6, 32
  %v1518 = vld [vmem:[%s1517] sm:$0xff]
  %v1519 = vld [vmem:[%s1517 + $0x8] sm:$0xff]
  %v1520 = vld [vmem:[%s1517 + $0x10] sm:$0xff]
  %v1521 = vld [vmem:[%s1517 + $0x18] sm:$0xff]
  %v1522 = vld [vmem:[#allocation4] sm:$0xff]
  %1523 = vmatpush.msra.mxu0 0.0
  %1524 = vmatpush.msra.mxu0 0.0
  %1525 = vmatpush.msra.mxu0 0.0
  %1526 = vmatpush.msra.mxu0 0.0
  %1527 = vmatpush.msra.mxu0 0.0
  %1528 = vmatpush.msra.mxu0 0.0
  %1529 = vmatpush.msra.mxu0 0.0
  %1530 = vmatpush.msra.mxu0 0.0
  %1531 = vmatpush.msra.mxu0 0.0
  %1532 = vmatpush.msra.mxu0 0.0
  %1533 = vmatpush.msra.mxu0 0.0
  %1534 = vmatpush.msra.mxu0 0.0
  %1535 = vmatpush.msra.mxu0 %v1516
  %1536 = vmatpush.msra.mxu0 %v1515
  %1537 = vmatpush.msra.mxu0 %v1514
  %1538 = vmatpush.msra.mxu0 %v1513
  %1539 = vmatmul.f32.gmra.mxu0 %v186
  %v1540 = vpop.f32.mrf.mxu0
  %v1541 = vadd.f32 0.0, %v1540
  %1542 = vdwg.mxu0
  %v1543 = vadd.f32 %v1522, %v1541
  %v1544 = vld [vmem:[%s1504 + $0x38] sm:$0xff]
  %1545 = vmatpush.msra.mxu0 0.0
  %1546 = vmatpush.msra.mxu0 0.0
  %1547 = vmatpush.msra.mxu0 0.0
  %1548 = vmatpush.msra.mxu0 0.0
  %1549 = vmatpush.msra.mxu0 0.0
  %1550 = vmatpush.msra.mxu0 0.0
  %1551 = vmatpush.msra.mxu0 0.0
  %1552 = vmatpush.msra.mxu0 0.0
  %1553 = vmatpush.msra.mxu0 0.0
  %1554 = vmatpush.msra.mxu0 0.0
  %1555 = vmatpush.msra.mxu0 0.0
  %1556 = vmatpush.msra.mxu0 0.0
  %1557 = vmatpush.msra.mxu0 %v1521
  %1558 = vmatpush.msra.mxu0 %v1520
  %1559 = vmatpush.msra.mxu0 %v1519
  %1560 = vmatpush.msra.mxu0 %v1518
  %1561 = vmatmul.f32.gmra.mxu0 %v186
  %v1562 = vpop.f32.mrf.mxu0
  %v1563 = vadd.f32 0.0, %v1562
  %1564 = vdwg.mxu0
  %v1565 = vadd.f32 %v1544, %v1563
  %v1566 = vxor.u32 %v1543, 2147483648
  %v1567 = vmul.f32 %v1566, 1.442695
  %v1568 = vpow.pop %v1567
  %v1569 = vadd.f32 %v1568, 1.0
  %v1570 = vrcp.pop %v1569
  %v1571 = vmul.f32 %v1569, %v1570
  %v1572 = vsub.f32 1.0, %v1571
  %v1573 = vmul.f32 %v1570, %v1572
  %v1574 = vadd.f32 %v1570, %v1573
  %vm1575 = vweird.f32 %v1569
  %vm1576 = vweird.f32 %v1570
  %vm1577 = vmor %vm1575, %vm1576
  %v1578 = vsel %vm1577, %v1570, %v1574
  %v1579 = vand.u32 2147483647, %v1569
  %vm1580 = vcmp.eq.f32.partialorder %v1579, 8.507059e+37
  %v1581 = vand.u32 %v1569, 2147483648
  %v1582 = vor.u32 1.1754944e-38, %v1581
  %v1583 = vsel %vm1580, %v1582, %v1578
  %v1584 = vmul.f32 1.0, %v1583
  %v1585 = vtanh.pop %v1543
  %v1586 = vmul.f32 %v1584, 0.0
  %1588 = vrot.lane.b32.xlu0 %v1585, 64
  %v1589 = vpop.permute.xlu0 %1588
  %v1591 = vmul.f32 %v1584, %v1589
  %1593 = vrot.lane.b32.xlu0 %v1591, 32
  %v1594 = vpop.permute.xlu0 %1593
  %v1596 = vadd.f32 %v1586, %v1594
  %v1597 = vtanh.pop %v1596
  %1599 = vrot.lane.b32.xlu0 %v1597, 64
  %v1600 = vpop.permute.xlu0 %1599
  %v1602 = vmul.f32 %v1584, %v1600
  %v1603 = vxor.u32 %v1565, 2147483648
  %v1604 = vmul.f32 %v1603, 1.442695
  %v1605 = vpow.pop %v1604
  %v1606 = vadd.f32 %v1605, 1.0
  %v1607 = vrcp.pop %v1606
  %v1608 = vmul.f32 %v1606, %v1607
  %v1609 = vsub.f32 1.0, %v1608
  %v1610 = vmul.f32 %v1607, %v1609
  %v1611 = vadd.f32 %v1607, %v1610
  %vm1612 = vweird.f32 %v1606
  %vm1613 = vweird.f32 %v1607
  %vm1614 = vmor %vm1612, %vm1613
  %v1615 = vsel %vm1614, %v1607, %v1611
  %v1616 = vand.u32 2147483647, %v1606
  %vm1617 = vcmp.eq.f32.partialorder %v1616, 8.507059e+37
  %v1618 = vand.u32 %v1606, 2147483648
  %v1619 = vor.u32 1.1754944e-38, %v1618
  %v1620 = vsel %vm1617, %v1619, %v1615
  %v1621 = vmul.f32 1.0, %v1620
  %v1622 = vtanh.pop %v1565
  %v1623 = vmul.f32 %v1621, 0.0
  %1625 = vrot.lane.b32.xlu0 %v1622, 64
  %v1626 = vpop.permute.xlu0 %1625
  %v1628 = vmul.f32 %v1621, %v1626
  %1630 = vrot.lane.b32.xlu0 %v1628, 32
  %v1631 = vpop.permute.xlu0 %1630
  %v1633 = vadd.f32 %v1623, %v1631
  %v1634 = vtanh.pop %v1633
  %1636 = vrot.lane.b32.xlu0 %v1634, 64
  %v1637 = vpop.permute.xlu0 %1636
  %v1639 = vmul.f32 %v1621, %v1637
  %v1640 = vld [vmem:[#allocation4 + $0x8] sm:$0xff]
  %1642 = vrot.lane.b32.xlu0 %v1602, 32
  %v1643 = vpop.permute.xlu0 %1642
  %v1644 = vsel %vm65, %v1643, 0
  %1646 = vmatpush.msra.mxu0 0.0
  %1647 = vmatpush.msra.mxu0 0.0
  %1648 = vmatpush.msra.mxu0 0.0
  %1649 = vmatpush.msra.mxu0 0.0
  %1650 = vmatpush.msra.mxu0 0.0
  %1651 = vmatpush.msra.mxu0 0.0
  %1652 = vmatpush.msra.mxu0 0.0
  %1653 = vmatpush.msra.mxu0 0.0
  %1654 = vmatpush.msra.mxu0 0.0
  %1655 = vmatpush.msra.mxu0 0.0
  %1656 = vmatpush.msra.mxu0 0.0
  %1657 = vmatpush.msra.mxu0 0.0
  %1658 = vmatpush.msra.mxu0 %v1516
  %1659 = vmatpush.msra.mxu0 %v1515
  %1660 = vmatpush.msra.mxu0 %v1514
  %1661 = vmatpush.msra.mxu0 %v1513
  %1662 = vmatmul.f32.gmra.mxu0 %v1644
  %v1663 = vpop.f32.mrf.mxu0
  %v1664 = vadd.f32 0.0, %v1663
  %1665 = vdwg.mxu0
  %v1666 = vadd.f32 %v1640, %v1664
  %v1667 = vld [vmem:[%s1504 + $0x30] sm:$0xff]
  %1669 = vrot.lane.b32.xlu0 %v1639, 32
  %v1670 = vpop.permute.xlu0 %1669
  %v1671 = vsel %vm65, %v1670, 0
  %1673 = vmatpush.msra.mxu0 0.0
  %1674 = vmatpush.msra.mxu0 0.0
  %1675 = vmatpush.msra.mxu0 0.0
  %1676 = vmatpush.msra.mxu0 0.0
  %1677 = vmatpush.msra.mxu0 0.0
  %1678 = vmatpush.msra.mxu0 0.0
  %1679 = vmatpush.msra.mxu0 0.0
  %1680 = vmatpush.msra.mxu0 0.0
  %1681 = vmatpush.msra.mxu0 0.0
  %1682 = vmatpush.msra.mxu0 0.0
  %1683 = vmatpush.msra.mxu0 0.0
  %1684 = vmatpush.msra.mxu0 0.0
  %1685 = vmatpush.msra.mxu0 %v1521
  %1686 = vmatpush.msra.mxu0 %v1520
  %1687 = vmatpush.msra.mxu0 %v1519
  %1688 = vmatpush.msra.mxu0 %v1518
  %1689 = vmatmul.f32.gmra.mxu0 %v1671
  %v1690 = vpop.f32.mrf.mxu0
  %v1691 = vadd.f32 0.0, %v1690
  %1692 = vdwg.mxu0
  %v1693 = vadd.f32 %v1667, %v1691
  %v1694 = vxor.u32 %v1666, 2147483648
  %v1695 = vmul.f32 %v1694, 1.442695
  %v1696 = vpow.pop %v1695
  %v1697 = vadd.f32 %v1696, 1.0
  %v1698 = vrcp.pop %v1697
  %v1699 = vmul.f32 %v1697, %v1698
  %v1700 = vsub.f32 1.0, %v1699
  %v1701 = vmul.f32 %v1698, %v1700
  %v1702 = vadd.f32 %v1698, %v1701
  %vm1703 = vweird.f32 %v1697
  %vm1704 = vweird.f32 %v1698
  %vm1705 = vmor %vm1703, %vm1704
  %v1706 = vsel %vm1705, %v1698, %v1702
  %v1707 = vand.u32 2147483647, %v1697
  %vm1708 = vcmp.eq.f32.partialorder %v1707, 8.507059e+37
  %v1709 = vand.u32 %v1697, 2147483648
  %v1710 = vor.u32 1.1754944e-38, %v1709
  %v1711 = vsel %vm1708, %v1710, %v1706
  %v1712 = vmul.f32 1.0, %v1711
  %v1713 = vtanh.pop %v1666
  %v1714 = vmul.f32 %v1712, %v1596
  %1716 = vrot.lane.b32.xlu0 %v1713, 64
  %v1717 = vpop.permute.xlu0 %1716
  %v1719 = vmul.f32 %v1712, %v1717
  %1721 = vrot.lane.b32.xlu0 %v1719, 32
  %v1722 = vpop.permute.xlu0 %1721
  %v1724 = vadd.f32 %v1714, %v1722
  %v1725 = vtanh.pop %v1724
  %1727 = vrot.lane.b32.xlu0 %v1725, 64
  %v1728 = vpop.permute.xlu0 %1727
  %v1730 = vmul.f32 %v1712, %v1728
  %v1731 = vxor.u32 %v1693, 2147483648
  %v1732 = vmul.f32 %v1731, 1.442695
  %v1733 = vpow.pop %v1732
  %v1734 = vadd.f32 %v1733, 1.0
  %v1735 = vrcp.pop %v1734
  %v1736 = vmul.f32 %v1734, %v1735
  %v1737 = vsub.f32 1.0, %v1736
  %v1738 = vmul.f32 %v1735, %v1737
  %v1739 = vadd.f32 %v1735, %v1738
  %vm1740 = vweird.f32 %v1734
  %vm1741 = vweird.f32 %v1735
  %vm1742 = vmor %vm1740, %vm1741
  %v1743 = vsel %vm1742, %v1735, %v1739
  %v1744 = vand.u32 2147483647, %v1734
  %vm1745 = vcmp.eq.f32.partialorder %v1744, 8.507059e+37
  %v1746 = vand.u32 %v1734, 2147483648
  %v1747 = vor.u32 1.1754944e-38, %v1746
  %v1748 = vsel %vm1745, %v1747, %v1743
  %v1749 = vmul.f32 1.0, %v1748
  %v1750 = vtanh.pop %v1693
  %v1751 = vmul.f32 %v1749, %v1633
  %1753 = vrot.lane.b32.xlu0 %v1750, 64
  %v1754 = vpop.permute.xlu0 %1753
  %v1756 = vmul.f32 %v1749, %v1754
  %1758 = vrot.lane.b32.xlu0 %v1756, 32
  %v1759 = vpop.permute.xlu0 %1758
  %v1761 = vadd.f32 %v1751, %v1759
  %v1762 = vtanh.pop %v1761
  %1764 = vrot.lane.b32.xlu0 %v1762, 64
  %v1765 = vpop.permute.xlu0 %1764
  %v1767 = vmul.f32 %v1749, %v1765
  %v1768 = vmax.f32 %v1602, %v1730
  %v1769 = vmax.f32 %v1639, %v1767
  %v1770 = vld [vmem:[#allocation4 + $0x10] sm:$0xff]
  %1772 = vrot.lane.b32.xlu0 %v1730, 32
  %v1773 = vpop.permute.xlu0 %1772
  %v1774 = vsel %vm65, %v1773, 0
  %1776 = vmatpush.msra.mxu0 0.0
  %1777 = vmatpush.msra.mxu0 0.0
  %1778 = vmatpush.msra.mxu0 0.0
  %1779 = vmatpush.msra.mxu0 0.0
  %1780 = vmatpush.msra.mxu0 0.0
  %1781 = vmatpush.msra.mxu0 0.0
  %1782 = vmatpush.msra.mxu0 0.0
  %1783 = vmatpush.msra.mxu0 0.0
  %1784 = vmatpush.msra.mxu0 0.0
  %1785 = vmatpush.msra.mxu0 0.0
  %1786 = vmatpush.msra.mxu0 0.0
  %1787 = vmatpush.msra.mxu0 0.0
  %1788 = vmatpush.msra.mxu0 %v1516
  %1789 = vmatpush.msra.mxu0 %v1515
  %1790 = vmatpush.msra.mxu0 %v1514
  %1791 = vmatpush.msra.mxu0 %v1513
  %1792 = vmatmul.f32.gmra.mxu0 %v1774
  %v1793 = vpop.f32.mrf.mxu0
  %v1794 = vadd.f32 0.0, %v1793
  %1795 = vdwg.mxu0
  %v1796 = vadd.f32 %v1770, %v1794
  %v1797 = vld [vmem:[%s1504 + $0x28] sm:$0xff]
  %1799 = vrot.lane.b32.xlu0 %v1767, 32
  %v1800 = vpop.permute.xlu0 %1799
  %v1801 = vsel %vm65, %v1800, 0
  %1803 = vmatpush.msra.mxu0 0.0
  %1804 = vmatpush.msra.mxu0 0.0
  %1805 = vmatpush.msra.mxu0 0.0
  %1806 = vmatpush.msra.mxu0 0.0
  %1807 = vmatpush.msra.mxu0 0.0
  %1808 = vmatpush.msra.mxu0 0.0
  %1809 = vmatpush.msra.mxu0 0.0
  %1810 = vmatpush.msra.mxu0 0.0
  %1811 = vmatpush.msra.mxu0 0.0
  %1812 = vmatpush.msra.mxu0 0.0
  %1813 = vmatpush.msra.mxu0 0.0
  %1814 = vmatpush.msra.mxu0 0.0
  %1815 = vmatpush.msra.mxu0 %v1521
  %1816 = vmatpush.msra.mxu0 %v1520
  %1817 = vmatpush.msra.mxu0 %v1519
  %1818 = vmatpush.msra.mxu0 %v1518
  %1819 = vmatmul.f32.gmra.mxu0 %v1801
  %v1820 = vpop.f32.mrf.mxu0
  %v1821 = vadd.f32 0.0, %v1820
  %1822 = vdwg.mxu0
  %v1823 = vadd.f32 %v1797, %v1821
  %v1824 = vxor.u32 %v1796, 2147483648
  %v1825 = vmul.f32 %v1824, 1.442695
  %v1826 = vpow.pop %v1825
  %v1827 = vadd.f32 %v1826, 1.0
  %v1828 = vrcp.pop %v1827
  %v1829 = vmul.f32 %v1827, %v1828
  %v1830 = vsub.f32 1.0, %v1829
  %v1831 = vmul.f32 %v1828, %v1830
  %v1832 = vadd.f32 %v1828, %v1831
  %vm1833 = vweird.f32 %v1827
  %vm1834 = vweird.f32 %v1828
  %vm1835 = vmor %vm1833, %vm1834
  %v1836 = vsel %vm1835, %v1828, %v1832
  %v1837 = vand.u32 2147483647, %v1827
  %vm1838 = vcmp.eq.f32.partialorder %v1837, 8.507059e+37
  %v1839 = vand.u32 %v1827, 2147483648
  %v1840 = vor.u32 1.1754944e-38, %v1839
  %v1841 = vsel %vm1838, %v1840, %v1836
  %v1842 = vmul.f32 1.0, %v1841
  %v1843 = vtanh.pop %v1796
  %v1844 = vmul.f32 %v1842, %v1724
  %1846 = vrot.lane.b32.xlu0 %v1843, 64
  %v1847 = vpop.permute.xlu0 %1846
  %v1849 = vmul.f32 %v1842, %v1847
  %1851 = vrot.lane.b32.xlu0 %v1849, 32
  %v1852 = vpop.permute.xlu0 %1851
  %v1854 = vadd.f32 %v1844, %v1852
  %v1855 = vtanh.pop %v1854
  %1857 = vrot.lane.b32.xlu0 %v1855, 64
  %v1858 = vpop.permute.xlu0 %1857
  %v1860 = vmul.f32 %v1842, %v1858
  %v1861 = vxor.u32 %v1823, 2147483648
  %v1862 = vmul.f32 %v1861, 1.442695
  %v1863 = vpow.pop %v1862
  %v1864 = vadd.f32 %v1863, 1.0
  %v1865 = vrcp.pop %v1864
  %v1866 = vmul.f32 %v1864, %v1865
  %v1867 = vsub.f32 1.0, %v1866
  %v1868 = vmul.f32 %v1865, %v1867
  %v1869 = vadd.f32 %v1865, %v1868
  %vm1870 = vweird.f32 %v1864
  %vm1871 = vweird.f32 %v1865
  %vm1872 = vmor %vm1870, %vm1871
  %v1873 = vsel %vm1872, %v1865, %v1869
  %v1874 = vand.u32 2147483647, %v1864
  %vm1875 = vcmp.eq.f32.partialorder %v1874, 8.507059e+37
  %v1876 = vand.u32 %v1864, 2147483648
  %v1877 = vor.u32 1.1754944e-38, %v1876
  %v1878 = vsel %vm1875, %v1877, %v1873
  %v1879 = vmul.f32 1.0, %v1878
  %v1880 = vtanh.pop %v1823
  %v1881 = vmul.f32 %v1879, %v1761
  %1883 = vrot.lane.b32.xlu0 %v1880, 64
  %v1884 = vpop.permute.xlu0 %1883
  %v1886 = vmul.f32 %v1879, %v1884
  %1888 = vrot.lane.b32.xlu0 %v1886, 32
  %v1889 = vpop.permute.xlu0 %1888
  %v1891 = vadd.f32 %v1881, %v1889
  %v1892 = vtanh.pop %v1891
  %1894 = vrot.lane.b32.xlu0 %v1892, 64
  %v1895 = vpop.permute.xlu0 %1894
  %v1897 = vmul.f32 %v1879, %v1895
  %v1898 = vmax.f32 %v1768, %v1860
  %v1899 = vmax.f32 %v1769, %v1897
  %v1900 = vld [vmem:[#allocation4 + $0x18] sm:$0xff]
  %1902 = vrot.lane.b32.xlu0 %v1860, 32
  %v1903 = vpop.permute.xlu0 %1902
  %v1904 = vsel %vm65, %v1903, 0
  %1906 = vmatpush.msra.mxu0 0.0
  %1907 = vmatpush.msra.mxu0 0.0
  %1908 = vmatpush.msra.mxu0 0.0
  %1909 = vmatpush.msra.mxu0 0.0
  %1910 = vmatpush.msra.mxu0 0.0
  %1911 = vmatpush.msra.mxu0 0.0
  %1912 = vmatpush.msra.mxu0 0.0
  %1913 = vmatpush.msra.mxu0 0.0
  %1914 = vmatpush.msra.mxu0 0.0
  %1915 = vmatpush.msra.mxu0 0.0
  %1916 = vmatpush.msra.mxu0 0.0
  %1917 = vmatpush.msra.mxu0 0.0
  %1918 = vmatpush.msra.mxu0 %v1516
  %1919 = vmatpush.msra.mxu0 %v1515
  %1920 = vmatpush.msra.mxu0 %v1514
  %1921 = vmatpush.msra.mxu0 %v1513
  %1922 = vmatmul.f32.gmra.mxu0 %v1904
  %v1923 = vpop.f32.mrf.mxu0
  %v1924 = vadd.f32 0.0, %v1923
  %1925 = vdwg.mxu0
  %v1926 = vadd.f32 %v1900, %v1924
  %v1927 = vld [vmem:[%s1504 + $0x20] sm:$0xff]
  %1929 = vrot.lane.b32.xlu0 %v1897, 32
  %v1930 = vpop.permute.xlu0 %1929
  %v1931 = vsel %vm65, %v1930, 0
  %1933 = vmatpush.msra.mxu0 0.0
  %1934 = vmatpush.msra.mxu0 0.0
  %1935 = vmatpush.msra.mxu0 0.0
  %1936 = vmatpush.msra.mxu0 0.0
  %1937 = vmatpush.msra.mxu0 0.0
  %1938 = vmatpush.msra.mxu0 0.0
  %1939 = vmatpush.msra.mxu0 0.0
  %1940 = vmatpush.msra.mxu0 0.0
  %1941 = vmatpush.msra.mxu0 0.0
  %1942 = vmatpush.msra.mxu0 0.0
  %1943 = vmatpush.msra.mxu0 0.0
  %1944 = vmatpush.msra.mxu0 0.0
  %1945 = vmatpush.msra.mxu0 %v1521
  %1946 = vmatpush.msra.mxu0 %v1520
  %1947 = vmatpush.msra.mxu0 %v1519
  %1948 = vmatpush.msra.mxu0 %v1518
  %1949 = vmatmul.f32.gmra.mxu0 %v1931
  %v1950 = vpop.f32.mrf.mxu0
  %v1951 = vadd.f32 0.0, %v1950
  %1952 = vdwg.mxu0
  %v1953 = vadd.f32 %v1927, %v1951
  %v1954 = vxor.u32 %v1926, 2147483648
  %v1955 = vmul.f32 %v1954, 1.442695
  %v1956 = vpow.pop %v1955
  %v1957 = vadd.f32 %v1956, 1.0
  %v1958 = vrcp.pop %v1957
  %v1959 = vmul.f32 %v1957, %v1958
  %v1960 = vsub.f32 1.0, %v1959
  %v1961 = vmul.f32 %v1958, %v1960
  %v1962 = vadd.f32 %v1958, %v1961
  %vm1963 = vweird.f32 %v1957
  %vm1964 = vweird.f32 %v1958
  %vm1965 = vmor %vm1963, %vm1964
  %v1966 = vsel %vm1965, %v1958, %v1962
  %v1967 = vand.u32 2147483647, %v1957
  %vm1968 = vcmp.eq.f32.partialorder %v1967, 8.507059e+37
  %v1969 = vand.u32 %v1957, 2147483648
  %v1970 = vor.u32 1.1754944e-38, %v1969
  %v1971 = vsel %vm1968, %v1970, %v1966
  %v1972 = vmul.f32 1.0, %v1971
  %v1973 = vtanh.pop %v1926
  %v1974 = vmul.f32 %v1972, %v1854
  %1976 = vrot.lane.b32.xlu0 %v1973, 64
  %v1977 = vpop.permute.xlu0 %1976
  %v1979 = vmul.f32 %v1972, %v1977
  %1981 = vrot.lane.b32.xlu0 %v1979, 32
  %v1982 = vpop.permute.xlu0 %1981
  %v1984 = vadd.f32 %v1974, %v1982
  %v1985 = vtanh.pop %v1984
  %1987 = vrot.lane.b32.xlu0 %v1985, 64
  %v1988 = vpop.permute.xlu0 %1987
  %v1990 = vmul.f32 %v1972, %v1988
  %v1991 = vxor.u32 %v1953, 2147483648
  %v1992 = vmul.f32 %v1991, 1.442695
  %v1993 = vpow.pop %v1992
  %v1994 = vadd.f32 %v1993, 1.0
  %v1995 = vrcp.pop %v1994
  %v1996 = vmul.f32 %v1994, %v1995
  %v1997 = vsub.f32 1.0, %v1996
  %v1998 = vmul.f32 %v1995, %v1997
  %v1999 = vadd.f32 %v1995, %v1998
  %vm2000 = vweird.f32 %v1994
  %vm2001 = vweird.f32 %v1995
  %vm2002 = vmor %vm2000, %vm2001
  %v2003 = vsel %vm2002, %v1995, %v1999
  %v2004 = vand.u32 2147483647, %v1994
  %vm2005 = vcmp.eq.f32.partialorder %v2004, 8.507059e+37
  %v2006 = vand.u32 %v1994, 2147483648
  %v2007 = vor.u32 1.1754944e-38, %v2006
  %v2008 = vsel %vm2005, %v2007, %v2003
  %v2009 = vmul.f32 1.0, %v2008
  %v2010 = vtanh.pop %v1953
  %v2011 = vmul.f32 %v2009, %v1891
  %2013 = vrot.lane.b32.xlu0 %v2010, 64
  %v2014 = vpop.permute.xlu0 %2013
  %v2016 = vmul.f32 %v2009, %v2014
  %2018 = vrot.lane.b32.xlu0 %v2016, 32
  %v2019 = vpop.permute.xlu0 %2018
  %v2021 = vadd.f32 %v2011, %v2019
  %v2022 = vtanh.pop %v2021
  %2024 = vrot.lane.b32.xlu0 %v2022, 64
  %v2025 = vpop.permute.xlu0 %2024
  %v2027 = vmul.f32 %v2009, %v2025
  %v2028 = vmax.f32 %v1898, %v1990
  %v2029 = vmax.f32 %v1899, %v2027
  %v2030 = vld [vmem:[#allocation4 + $0x20] sm:$0xff]
  %2032 = vrot.lane.b32.xlu0 %v1990, 32
  %v2033 = vpop.permute.xlu0 %2032
  %v2034 = vsel %vm65, %v2033, 0
  %2036 = vmatpush.msra.mxu0 0.0
  %2037 = vmatpush.msra.mxu0 0.0
  %2038 = vmatpush.msra.mxu0 0.0
  %2039 = vmatpush.msra.mxu0 0.0
  %2040 = vmatpush.msra.mxu0 0.0
  %2041 = vmatpush.msra.mxu0 0.0
  %2042 = vmatpush.msra.mxu0 0.0
  %2043 = vmatpush.msra.mxu0 0.0
  %2044 = vmatpush.msra.mxu0 0.0
  %2045 = vmatpush.msra.mxu0 0.0
  %2046 = vmatpush.msra.mxu0 0.0
  %2047 = vmatpush.msra.mxu0 0.0
  %2048 = vmatpush.msra.mxu0 %v1516
  %2049 = vmatpush.msra.mxu0 %v1515
  %2050 = vmatpush.msra.mxu0 %v1514
  %2051 = vmatpush.msra.mxu0 %v1513
  %2052 = vmatmul.f32.gmra.mxu0 %v2034
  %v2053 = vpop.f32.mrf.mxu0
  %v2054 = vadd.f32 0.0, %v2053
  %2055 = vdwg.mxu0
  %v2056 = vadd.f32 %v2030, %v2054
  %v2057 = vld [vmem:[%s1504 + $0x18] sm:$0xff]
  %2059 = vrot.lane.b32.xlu0 %v2027, 32
  %v2060 = vpop.permute.xlu0 %2059
  %v2061 = vsel %vm65, %v2060, 0
  %2063 = vmatpush.msra.mxu0 0.0
  %2064 = vmatpush.msra.mxu0 0.0
  %2065 = vmatpush.msra.mxu0 0.0
  %2066 = vmatpush.msra.mxu0 0.0
  %2067 = vmatpush.msra.mxu0 0.0
  %2068 = vmatpush.msra.mxu0 0.0
  %2069 = vmatpush.msra.mxu0 0.0
  %2070 = vmatpush.msra.mxu0 0.0
  %2071 = vmatpush.msra.mxu0 0.0
  %2072 = vmatpush.msra.mxu0 0.0
  %2073 = vmatpush.msra.mxu0 0.0
  %2074 = vmatpush.msra.mxu0 0.0
  %2075 = vmatpush.msra.mxu0 %v1521
  %2076 = vmatpush.msra.mxu0 %v1520
  %2077 = vmatpush.msra.mxu0 %v1519
  %2078 = vmatpush.msra.mxu0 %v1518
  %2079 = vmatmul.f32.gmra.mxu0 %v2061
  %v2080 = vpop.f32.mrf.mxu0
  %v2081 = vadd.f32 0.0, %v2080
  %2082 = vdwg.mxu0
  %v2083 = vadd.f32 %v2057, %v2081
  %v2084 = vxor.u32 %v2056, 2147483648
  %v2085 = vmul.f32 %v2084, 1.442695
  %v2086 = vpow.pop %v2085
  %v2087 = vadd.f32 %v2086, 1.0
  %v2088 = vrcp.pop %v2087
  %v2089 = vmul.f32 %v2087, %v2088
  %v2090 = vsub.f32 1.0, %v2089
  %v2091 = vmul.f32 %v2088, %v2090
  %v2092 = vadd.f32 %v2088, %v2091
  %vm2093 = vweird.f32 %v2087
  %vm2094 = vweird.f32 %v2088
  %vm2095 = vmor %vm2093, %vm2094
  %v2096 = vsel %vm2095, %v2088, %v2092
  %v2097 = vand.u32 2147483647, %v2087
  %vm2098 = vcmp.eq.f32.partialorder %v2097, 8.507059e+37
  %v2099 = vand.u32 %v2087, 2147483648
  %v2100 = vor.u32 1.1754944e-38, %v2099
  %v2101 = vsel %vm2098, %v2100, %v2096
  %v2102 = vmul.f32 1.0, %v2101
  %v2103 = vtanh.pop %v2056
  %v2104 = vmul.f32 %v2102, %v1984
  %2106 = vrot.lane.b32.xlu0 %v2103, 64
  %v2107 = vpop.permute.xlu0 %2106
  %v2109 = vmul.f32 %v2102, %v2107
  %2111 = vrot.lane.b32.xlu0 %v2109, 32
  %v2112 = vpop.permute.xlu0 %2111
  %v2114 = vadd.f32 %v2104, %v2112
  %v2115 = vtanh.pop %v2114
  %2117 = vrot.lane.b32.xlu0 %v2115, 64
  %v2118 = vpop.permute.xlu0 %2117
  %v2120 = vmul.f32 %v2102, %v2118
  %v2121 = vxor.u32 %v2083, 2147483648
  %v2122 = vmul.f32 %v2121, 1.442695
  %v2123 = vpow.pop %v2122
  %v2124 = vadd.f32 %v2123, 1.0
  %v2125 = vrcp.pop %v2124
  %v2126 = vmul.f32 %v2124, %v2125
  %v2127 = vsub.f32 1.0, %v2126
  %v2128 = vmul.f32 %v2125, %v2127
  %v2129 = vadd.f32 %v2125, %v2128
  %vm2130 = vweird.f32 %v2124
  %vm2131 = vweird.f32 %v2125
  %vm2132 = vmor %vm2130, %vm2131
  %v2133 = vsel %vm2132, %v2125, %v2129
  %v2134 = vand.u32 2147483647, %v2124
  %vm2135 = vcmp.eq.f32.partialorder %v2134, 8.507059e+37
  %v2136 = vand.u32 %v2124, 2147483648
  %v2137 = vor.u32 1.1754944e-38, %v2136
  %v2138 = vsel %vm2135, %v2137, %v2133
  %v2139 = vmul.f32 1.0, %v2138
  %v2140 = vtanh.pop %v2083
  %v2141 = vmul.f32 %v2139, %v2021
  %2143 = vrot.lane.b32.xlu0 %v2140, 64
  %v2144 = vpop.permute.xlu0 %2143
  %v2146 = vmul.f32 %v2139, %v2144
  %2148 = vrot.lane.b32.xlu0 %v2146, 32
  %v2149 = vpop.permute.xlu0 %2148
  %v2151 = vadd.f32 %v2141, %v2149
  %v2152 = vtanh.pop %v2151
  %2154 = vrot.lane.b32.xlu0 %v2152, 64
  %v2155 = vpop.permute.xlu0 %2154
  %v2157 = vmul.f32 %v2139, %v2155
  %v2158 = vmax.f32 %v2028, %v2120
  %v2159 = vmax.f32 %v2029, %v2157
  %v2160 = vld [vmem:[#allocation4 + $0x28] sm:$0xff]
  %2162 = vrot.lane.b32.xlu0 %v2120, 32
  %v2163 = vpop.permute.xlu0 %2162
  %v2164 = vsel %vm65, %v2163, 0
  %2166 = vmatpush.msra.mxu0 0.0
  %2167 = vmatpush.msra.mxu0 0.0
  %2168 = vmatpush.msra.mxu0 0.0
  %2169 = vmatpush.msra.mxu0 0.0
  %2170 = vmatpush.msra.mxu0 0.0
  %2171 = vmatpush.msra.mxu0 0.0
  %2172 = vmatpush.msra.mxu0 0.0
  %2173 = vmatpush.msra.mxu0 0.0
  %2174 = vmatpush.msra.mxu0 0.0
  %2175 = vmatpush.msra.mxu0 0.0
  %2176 = vmatpush.msra.mxu0 0.0
  %2177 = vmatpush.msra.mxu0 0.0
  %2178 = vmatpush.msra.mxu0 %v1516
  %2179 = vmatpush.msra.mxu0 %v1515
  %2180 = vmatpush.msra.mxu0 %v1514
  %2181 = vmatpush.msra.mxu0 %v1513
  %2182 = vmatmul.f32.gmra.mxu0 %v2164
  %v2183 = vpop.f32.mrf.mxu0
  %v2184 = vadd.f32 0.0, %v2183
  %2185 = vdwg.mxu0
  %v2186 = vadd.f32 %v2160, %v2184
  %v2187 = vld [vmem:[%s1504 + $0x10] sm:$0xff]
  %2189 = vrot.lane.b32.xlu0 %v2157, 32
  %v2190 = vpop.permute.xlu0 %2189
  %v2191 = vsel %vm65, %v2190, 0
  %2193 = vmatpush.msra.mxu0 0.0
  %2194 = vmatpush.msra.mxu0 0.0
  %2195 = vmatpush.msra.mxu0 0.0
  %2196 = vmatpush.msra.mxu0 0.0
  %2197 = vmatpush.msra.mxu0 0.0
  %2198 = vmatpush.msra.mxu0 0.0
  %2199 = vmatpush.msra.mxu0 0.0
  %2200 = vmatpush.msra.mxu0 0.0
  %2201 = vmatpush.msra.mxu0 0.0
  %2202 = vmatpush.msra.mxu0 0.0
  %2203 = vmatpush.msra.mxu0 0.0
  %2204 = vmatpush.msra.mxu0 0.0
  %2205 = vmatpush.msra.mxu0 %v1521
  %2206 = vmatpush.msra.mxu0 %v1520
  %2207 = vmatpush.msra.mxu0 %v1519
  %2208 = vmatpush.msra.mxu0 %v1518
  %2209 = vmatmul.f32.gmra.mxu0 %v2191
  %v2210 = vpop.f32.mrf.mxu0
  %v2211 = vadd.f32 0.0, %v2210
  %2212 = vdwg.mxu0
  %v2213 = vadd.f32 %v2187, %v2211
  %v2214 = vxor.u32 %v2186, 2147483648
  %v2215 = vmul.f32 %v2214, 1.442695
  %v2216 = vpow.pop %v2215
  %v2217 = vadd.f32 %v2216, 1.0
  %v2218 = vrcp.pop %v2217
  %v2219 = vmul.f32 %v2217, %v2218
  %v2220 = vsub.f32 1.0, %v2219
  %v2221 = vmul.f32 %v2218, %v2220
  %v2222 = vadd.f32 %v2218, %v2221
  %vm2223 = vweird.f32 %v2217
  %vm2224 = vweird.f32 %v2218
  %vm2225 = vmor %vm2223, %vm2224
  %v2226 = vsel %vm2225, %v2218, %v2222
  %v2227 = vand.u32 2147483647, %v2217
  %vm2228 = vcmp.eq.f32.partialorder %v2227, 8.507059e+37
  %v2229 = vand.u32 %v2217, 2147483648
  %v2230 = vor.u32 1.1754944e-38, %v2229
  %v2231 = vsel %vm2228, %v2230, %v2226
  %v2232 = vmul.f32 1.0, %v2231
  %v2233 = vtanh.pop %v2186
  %v2234 = vmul.f32 %v2232, %v2114
  %2236 = vrot.lane.b32.xlu0 %v2233, 64
  %v2237 = vpop.permute.xlu0 %2236
  %v2239 = vmul.f32 %v2232, %v2237
  %2241 = vrot.lane.b32.xlu0 %v2239, 32
  %v2242 = vpop.permute.xlu0 %2241
  %v2244 = vadd.f32 %v2234, %v2242
  %v2245 = vtanh.pop %v2244
  %2247 = vrot.lane.b32.xlu0 %v2245, 64
  %v2248 = vpop.permute.xlu0 %2247
  %v2250 = vmul.f32 %v2232, %v2248
  %v2251 = vxor.u32 %v2213, 2147483648
  %v2252 = vmul.f32 %v2251, 1.442695
  %v2253 = vpow.pop %v2252
  %v2254 = vadd.f32 %v2253, 1.0
  %v2255 = vrcp.pop %v2254
  %v2256 = vmul.f32 %v2254, %v2255
  %v2257 = vsub.f32 1.0, %v2256
  %v2258 = vmul.f32 %v2255, %v2257
  %v2259 = vadd.f32 %v2255, %v2258
  %vm2260 = vweird.f32 %v2254
  %vm2261 = vweird.f32 %v2255
  %vm2262 = vmor %vm2260, %vm2261
  %v2263 = vsel %vm2262, %v2255, %v2259
  %v2264 = vand.u32 2147483647, %v2254
  %vm2265 = vcmp.eq.f32.partialorder %v2264, 8.507059e+37
  %v2266 = vand.u32 %v2254, 2147483648
  %v2267 = vor.u32 1.1754944e-38, %v2266
  %v2268 = vsel %vm2265, %v2267, %v2263
  %v2269 = vmul.f32 1.0, %v2268
  %v2270 = vtanh.pop %v2213
  %v2271 = vmul.f32 %v2269, %v2151
  %2273 = vrot.lane.b32.xlu0 %v2270, 64
  %v2274 = vpop.permute.xlu0 %2273
  %v2276 = vmul.f32 %v2269, %v2274
  %2278 = vrot.lane.b32.xlu0 %v2276, 32
  %v2279 = vpop.permute.xlu0 %2278
  %v2281 = vadd.f32 %v2271, %v2279
  %v2282 = vtanh.pop %v2281
  %2284 = vrot.lane.b32.xlu0 %v2282, 64
  %v2285 = vpop.permute.xlu0 %2284
  %v2287 = vmul.f32 %v2269, %v2285
  %v2288 = vmax.f32 %v2158, %v2250
  %v2289 = vmax.f32 %v2159, %v2287
  %v2290 = vld [vmem:[#allocation4 + $0x30] sm:$0xff]
  %2292 = vrot.lane.b32.xlu0 %v2250, 32
  %v2293 = vpop.permute.xlu0 %2292
  %v2294 = vsel %vm65, %v2293, 0
  %2296 = vmatpush.msra.mxu0 0.0
  %2297 = vmatpush.msra.mxu0 0.0
  %2298 = vmatpush.msra.mxu0 0.0
  %2299 = vmatpush.msra.mxu0 0.0
  %2300 = vmatpush.msra.mxu0 0.0
  %2301 = vmatpush.msra.mxu0 0.0
  %2302 = vmatpush.msra.mxu0 0.0
  %2303 = vmatpush.msra.mxu0 0.0
  %2304 = vmatpush.msra.mxu0 0.0
  %2305 = vmatpush.msra.mxu0 0.0
  %2306 = vmatpush.msra.mxu0 0.0
  %2307 = vmatpush.msra.mxu0 0.0
  %2308 = vmatpush.msra.mxu0 %v1516
  %2309 = vmatpush.msra.mxu0 %v1515
  %2310 = vmatpush.msra.mxu0 %v1514
  %2311 = vmatpush.msra.mxu0 %v1513
  %2312 = vmatmul.f32.gmra.mxu0 %v2294
  %v2313 = vpop.f32.mrf.mxu0
  %v2314 = vadd.f32 0.0, %v2313
  %2315 = vdwg.mxu0
  %v2316 = vadd.f32 %v2290, %v2314
  %v2317 = vld [vmem:[%s1504 + $0x8] sm:$0xff]
  %2319 = vrot.lane.b32.xlu0 %v2287, 32
  %v2320 = vpop.permute.xlu0 %2319
  %v2321 = vsel %vm65, %v2320, 0
  %2323 = vmatpush.msra.mxu0 0.0
  %2324 = vmatpush.msra.mxu0 0.0
  %2325 = vmatpush.msra.mxu0 0.0
  %2326 = vmatpush.msra.mxu0 0.0
  %2327 = vmatpush.msra.mxu0 0.0
  %2328 = vmatpush.msra.mxu0 0.0
  %2329 = vmatpush.msra.mxu0 0.0
  %2330 = vmatpush.msra.mxu0 0.0
  %2331 = vmatpush.msra.mxu0 0.0
  %2332 = vmatpush.msra.mxu0 0.0
  %2333 = vmatpush.msra.mxu0 0.0
  %2334 = vmatpush.msra.mxu0 0.0
  %2335 = vmatpush.msra.mxu0 %v1521
  %2336 = vmatpush.msra.mxu0 %v1520
  %2337 = vmatpush.msra.mxu0 %v1519
  %2338 = vmatpush.msra.mxu0 %v1518
  %2339 = vmatmul.f32.gmra.mxu0 %v2321
  %v2340 = vpop.f32.mrf.mxu0
  %v2341 = vadd.f32 0.0, %v2340
  %2342 = vdwg.mxu0
  %v2343 = vadd.f32 %v2317, %v2341
  %v2344 = vxor.u32 %v2316, 2147483648
  %v2345 = vmul.f32 %v2344, 1.442695
  %v2346 = vpow.pop %v2345
  %v2347 = vadd.f32 %v2346, 1.0
  %v2348 = vrcp.pop %v2347
  %v2349 = vmul.f32 %v2347, %v2348
  %v2350 = vsub.f32 1.0, %v2349
  %v2351 = vmul.f32 %v2348, %v2350
  %v2352 = vadd.f32 %v2348, %v2351
  %vm2353 = vweird.f32 %v2347
  %vm2354 = vweird.f32 %v2348
  %vm2355 = vmor %vm2353, %vm2354
  %v2356 = vsel %vm2355, %v2348, %v2352
  %v2357 = vand.u32 2147483647, %v2347
  %vm2358 = vcmp.eq.f32.partialorder %v2357, 8.507059e+37
  %v2359 = vand.u32 %v2347, 2147483648
  %v2360 = vor.u32 1.1754944e-38, %v2359
  %v2361 = vsel %vm2358, %v2360, %v2356
  %v2362 = vmul.f32 1.0, %v2361
  %v2363 = vtanh.pop %v2316
  %v2364 = vmul.f32 %v2362, %v2244
  %2366 = vrot.lane.b32.xlu0 %v2363, 64
  %v2367 = vpop.permute.xlu0 %2366
  %v2369 = vmul.f32 %v2362, %v2367
  %2371 = vrot.lane.b32.xlu0 %v2369, 32
  %v2372 = vpop.permute.xlu0 %2371
  %v2374 = vadd.f32 %v2364, %v2372
  %v2375 = vtanh.pop %v2374
  %2377 = vrot.lane.b32.xlu0 %v2375, 64
  %v2378 = vpop.permute.xlu0 %2377
  %v2380 = vmul.f32 %v2362, %v2378
  %v2381 = vxor.u32 %v2343, 2147483648
  %v2382 = vmul.f32 %v2381, 1.442695
  %v2383 = vpow.pop %v2382
  %v2384 = vadd.f32 %v2383, 1.0
  %v2385 = vrcp.pop %v2384
  %v2386 = vmul.f32 %v2384, %v2385
  %v2387 = vsub.f32 1.0, %v2386
  %v2388 = vmul.f32 %v2385, %v2387
  %v2389 = vadd.f32 %v2385, %v2388
  %vm2390 = vweird.f32 %v2384
  %vm2391 = vweird.f32 %v2385
  %vm2392 = vmor %vm2390, %vm2391
  %v2393 = vsel %vm2392, %v2385, %v2389
  %v2394 = vand.u32 2147483647, %v2384
  %vm2395 = vcmp.eq.f32.partialorder %v2394, 8.507059e+37
  %v2396 = vand.u32 %v2384, 2147483648
  %v2397 = vor.u32 1.1754944e-38, %v2396
  %v2398 = vsel %vm2395, %v2397, %v2393
  %v2399 = vmul.f32 1.0, %v2398
  %v2400 = vtanh.pop %v2343
  %v2401 = vmul.f32 %v2399, %v2281
  %2403 = vrot.lane.b32.xlu0 %v2400, 64
  %v2404 = vpop.permute.xlu0 %2403
  %v2406 = vmul.f32 %v2399, %v2404
  %2408 = vrot.lane.b32.xlu0 %v2406, 32
  %v2409 = vpop.permute.xlu0 %2408
  %v2411 = vadd.f32 %v2401, %v2409
  %v2412 = vtanh.pop %v2411
  %2414 = vrot.lane.b32.xlu0 %v2412, 64
  %v2415 = vpop.permute.xlu0 %2414
  %v2417 = vmul.f32 %v2399, %v2415
  %v2418 = vmax.f32 %v2288, %v2380
  %v2419 = vmax.f32 %v2289, %v2417
  %v2420 = vld [vmem:[#allocation4 + $0x38] sm:$0xff]
  %2422 = vrot.lane.b32.xlu0 %v2380, 32
  %v2423 = vpop.permute.xlu0 %2422
  %v2424 = vsel %vm65, %v2423, 0
  %2426 = vmatpush.msra.mxu0 0.0
  %2427 = vmatpush.msra.mxu0 0.0
  %2428 = vmatpush.msra.mxu0 0.0
  %2429 = vmatpush.msra.mxu0 0.0
  %2430 = vmatpush.msra.mxu0 0.0
  %2431 = vmatpush.msra.mxu0 0.0
  %2432 = vmatpush.msra.mxu0 0.0
  %2433 = vmatpush.msra.mxu0 0.0
  %2434 = vmatpush.msra.mxu0 0.0
  %2435 = vmatpush.msra.mxu0 0.0
  %2436 = vmatpush.msra.mxu0 0.0
  %2437 = vmatpush.msra.mxu0 0.0
  %2438 = vmatpush.msra.mxu0 %v1516
  %2439 = vmatpush.msra.mxu0 %v1515
  %2440 = vmatpush.msra.mxu0 %v1514
  %2441 = vmatpush.msra.mxu0 %v1513
  %2442 = vmatmul.f32.gmra.mxu0 %v2424
  %v2443 = vpop.f32.mrf.mxu0
  %v2444 = vadd.f32 0.0, %v2443
  %2445 = vdwg.mxu0
  %v2446 = vadd.f32 %v2420, %v2444
  %v2447 = vld [vmem:[%s1504] sm:$0xff]
  %2449 = vrot.lane.b32.xlu0 %v2417, 32
  %v2450 = vpop.permute.xlu0 %2449
  %v2451 = vsel %vm65, %v2450, 0
  %2453 = vmatpush.msra.mxu0 0.0
  %2454 = vmatpush.msra.mxu0 0.0
  %2455 = vmatpush.msra.mxu0 0.0
  %2456 = vmatpush.msra.mxu0 0.0
  %2457 = vmatpush.msra.mxu0 0.0
  %2458 = vmatpush.msra.mxu0 0.0
  %2459 = vmatpush.msra.mxu0 0.0
  %2460 = vmatpush.msra.mxu0 0.0
  %2461 = vmatpush.msra.mxu0 0.0
  %2462 = vmatpush.msra.mxu0 0.0
  %2463 = vmatpush.msra.mxu0 0.0
  %2464 = vmatpush.msra.mxu0 0.0
  %2465 = vmatpush.msra.mxu0 %v1521
  %2466 = vmatpush.msra.mxu0 %v1520
  %2467 = vmatpush.msra.mxu0 %v1519
  %2468 = vmatpush.msra.mxu0 %v1518
  %2469 = vmatmul.f32.gmra.mxu0 %v2451
  %v2470 = vpop.f32.mrf.mxu0
  %v2471 = vadd.f32 0.0, %v2470
  %2472 = vdwg.mxu0
  %v2473 = vadd.f32 %v2447, %v2471
  %v2474 = vxor.u32 %v2446, 2147483648
  %v2475 = vmul.f32 %v2474, 1.442695
  %v2476 = vpow.pop %v2475
  %v2477 = vadd.f32 %v2476, 1.0
  %v2478 = vrcp.pop %v2477
  %v2479 = vmul.f32 %v2477, %v2478
  %v2480 = vsub.f32 1.0, %v2479
  %v2481 = vmul.f32 %v2478, %v2480
  %v2482 = vadd.f32 %v2478, %v2481
  %vm2483 = vweird.f32 %v2477
  %vm2484 = vweird.f32 %v2478
  %vm2485 = vmor %vm2483, %vm2484
  %v2486 = vsel %vm2485, %v2478, %v2482
  %v2487 = vand.u32 2147483647, %v2477
  %vm2488 = vcmp.eq.f32.partialorder %v2487, 8.507059e+37
  %v2489 = vand.u32 %v2477, 2147483648
  %v2490 = vor.u32 1.1754944e-38, %v2489
  %v2491 = vsel %vm2488, %v2490, %v2486
  %v2492 = vmul.f32 1.0, %v2491
  %v2493 = vtanh.pop %v2446
  %v2494 = vmul.f32 %v2492, %v2374
  %2496 = vrot.lane.b32.xlu0 %v2493, 64
  %v2497 = vpop.permute.xlu0 %2496
  %v2499 = vmul.f32 %v2492, %v2497
  %2501 = vrot.lane.b32.xlu0 %v2499, 32
  %v2502 = vpop.permute.xlu0 %2501
  %v2504 = vadd.f32 %v2494, %v2502
  %v2505 = vtanh.pop %v2504
  %2507 = vrot.lane.b32.xlu0 %v2505, 64
  %v2508 = vpop.permute.xlu0 %2507
  %v2510 = vmul.f32 %v2492, %v2508
  %v2511 = vxor.u32 %v2473, 2147483648
  %v2512 = vmul.f32 %v2511, 1.442695
  %v2513 = vpow.pop %v2512
  %v2514 = vadd.f32 %v2513, 1.0
  %v2515 = vrcp.pop %v2514
  %v2516 = vmul.f32 %v2514, %v2515
  %v2517 = vsub.f32 1.0, %v2516
  %v2518 = vmul.f32 %v2515, %v2517
  %v2519 = vadd.f32 %v2515, %v2518
  %vm2520 = vweird.f32 %v2514
  %vm2521 = vweird.f32 %v2515
  %vm2522 = vmor %vm2520, %vm2521
  %v2523 = vsel %vm2522, %v2515, %v2519
  %v2524 = vand.u32 2147483647, %v2514
  %vm2525 = vcmp.eq.f32.partialorder %v2524, 8.507059e+37
  %v2526 = vand.u32 %v2514, 2147483648
  %v2527 = vor.u32 1.1754944e-38, %v2526
  %v2528 = vsel %vm2525, %v2527, %v2523
  %v2529 = vmul.f32 1.0, %v2528
  %v2530 = vtanh.pop %v2473
  %v2531 = vmul.f32 %v2529, %v2411
  %2533 = vrot.lane.b32.xlu0 %v2530, 64
  %v2534 = vpop.permute.xlu0 %2533
  %v2536 = vmul.f32 %v2529, %v2534
  %2538 = vrot.lane.b32.xlu0 %v2536, 32
  %v2539 = vpop.permute.xlu0 %2538
  %v2541 = vadd.f32 %v2531, %v2539
  %v2542 = vtanh.pop %v2541
  %2544 = vrot.lane.b32.xlu0 %v2542, 64
  %v2545 = vpop.permute.xlu0 %2544
  %v2547 = vmul.f32 %v2529, %v2545
  %v2548 = vmax.f32 %v2418, %v2510
  %v2549 = vmax.f32 %v2419, %v2547
  %v2550 = vld [vmem:[%s7] sm:$0xff]
  %v2551 = vld [vmem:[%s7 + $0x8] sm:$0xff]
  %v2552 = vld [vmem:[%s7 + $0x10] sm:$0xff]
  %v2553 = vld [vmem:[%s7 + $0x18] sm:$0xff]
  %s2554 = scalar_lea.vmem %s7, 32
  %v2555 = vld [vmem:[%s2554] sm:$0xff]
  %v2556 = vld [vmem:[%s2554 + $0x8] sm:$0xff]
  %v2557 = vld [vmem:[%s2554 + $0x10] sm:$0xff]
  %v2558 = vld [vmem:[%s2554 + $0x18] sm:$0xff]
  %2560 = vrot.lane.b32.xlu0 %v2549, 32
  %v2561 = vpop.permute.xlu0 %2560
  %v2562 = vsel %vm65, %v2561, 0
  %2564 = vmatpush.msra.mxu0 0.0
  %2565 = vmatpush.msra.mxu0 0.0
  %2566 = vmatpush.msra.mxu0 0.0
  %2567 = vmatpush.msra.mxu0 0.0
  %2568 = vmatpush.msra.mxu0 0.0
  %2569 = vmatpush.msra.mxu0 0.0
  %2570 = vmatpush.msra.mxu0 0.0
  %2571 = vmatpush.msra.mxu0 0.0
  %2572 = vmatpush.msra.mxu0 0.0
  %2573 = vmatpush.msra.mxu0 0.0
  %2574 = vmatpush.msra.mxu0 0.0
  %2575 = vmatpush.msra.mxu0 0.0
  %2576 = vmatpush.msra.mxu0 %v2558
  %2577 = vmatpush.msra.mxu0 %v2557
  %2578 = vmatpush.msra.mxu0 %v2556
  %2579 = vmatpush.msra.mxu0 %v2555
  %2580 = vmatmul.f32.gmra.mxu0 %v2562
  %v2581 = vpop.f32.mrf.mxu0
  %v2582 = vadd.f32 0.0, %v2581
  %2583 = vdwg.mxu0
  %2585 = vrot.lane.b32.xlu0 %v2548, 32
  %v2586 = vpop.permute.xlu0 %2585
  %v2587 = vsel %vm65, %v2586, 0
  %2589 = vmatpush.msra.mxu0 0.0
  %2590 = vmatpush.msra.mxu0 0.0
  %2591 = vmatpush.msra.mxu0 0.0
  %2592 = vmatpush.msra.mxu0 0.0
  %2593 = vmatpush.msra.mxu0 0.0
  %2594 = vmatpush.msra.mxu0 0.0
  %2595 = vmatpush.msra.mxu0 0.0
  %2596 = vmatpush.msra.mxu0 0.0
  %2597 = vmatpush.msra.mxu0 0.0
  %2598 = vmatpush.msra.mxu0 0.0
  %2599 = vmatpush.msra.mxu0 0.0
  %2600 = vmatpush.msra.mxu0 0.0
  %2601 = vmatpush.msra.mxu0 %v2553
  %2602 = vmatpush.msra.mxu0 %v2552
  %2603 = vmatpush.msra.mxu0 %v2551
  %2604 = vmatpush.msra.mxu0 %v2550
  %2605 = vmatmul.f32.gmra.mxu0 %v2587
  %v2606 = vpop.f32.mrf.mxu0
  %v2607 = vadd.f32 %v2582, %v2606
  %2608 = vdwg.mxu0
  %v2609 = vld [vmem:[%s8] sm:$0x1]
  %v2611 = vperm.slane %v2609, 0
  %v2613 = vadd.f32 %v2607, %v2611
  %2614 = vst [vmem:[%s9] sm:$0xff] %v2613
  // Predicated region
  $region38: #{_lambda_.1} parent=0 // pred_check
    _
  $region39: #{_lambda_.1} parent=0 // pred_check_branch
    %2616 = sbr.rel (0) target = $region41
  $region40: #{_lambda_.1} parent=0 // pred_region
    _
  $region41: #{_lambda_.1} parent=0 // pred_fallthru
    _
  // Predicated region
  $region42: #{_lambda_.1} parent=0 // pred_check
    _
  $region43: #{_lambda_.1} parent=0 // pred_check_branch
    %2618 = sbr.rel (0) target = $region45
  $region44: #{_lambda_.1} parent=0 // pred_region
    _
  $region45: #{_lambda_.1} parent=0 // pred_fallthru
    _

</llo_original>
